<compile_context>
chip_gen: v7x
topology: tpu7x:2x2x1
jax: 0.10.0
libtpu: 0.0.40
codegen_flags: <defaults>
</compile_context>

<pallas_src>
import jax
import jax.numpy as jnp
from jax.experimental import pallas as pl
from jax.experimental.pallas import tpu as pltpu


def mlp_bigru_kernel(x_ref, lens_ref,
                     w1_ref, b1_ref, w2_ref, b2_ref, w3_ref, b3_ref,
                     wi_ref, bi_ref, whf_ref, bhf_ref, whb_ref, bhb_ref,
                     out_ref, hid_ref,
                     gx_ref, bwd_ref):
    T, Bp, Hp = out_ref.shape
    G = 3 * Hp
    f32 = jnp.float32
    bf16 = jnp.bfloat16

    # ---- 3-layer MLP (+ReLU) over the whole (T*Bp, Hp) slab.  Runs ONCE
    #      (no per-direction duplication).  bf16 MXU matmuls, f32 accumulate,
    #      bias/ReLU in f32. ----
    x = x_ref[...].reshape(T * Bp, Hp)                                  # bf16
    h1 = jnp.maximum(jnp.dot(x, w1_ref[...], preferred_element_type=f32)
                     + b1_ref[...], 0.0)
    h2 = jnp.maximum(jnp.dot(h1.astype(bf16), w2_ref[...],
                             preferred_element_type=f32) + b2_ref[...], 0.0)
    y = (jnp.dot(h2.astype(bf16), w3_ref[...], preferred_element_type=f32)
         + b3_ref[...])

    # ---- x-side GRU gate projections for BOTH directions and ALL timesteps
    #      in one fused matmul.  Columns: [f:r | f:z | f:n | b:r | b:z | b:n].
    #      Staged in VMEM scratch (not vregs). ----
    gx_ref[...] = (jnp.dot(y.astype(bf16), wi_ref[...],
                           preferred_element_type=f32)
                   + bi_ref[...]).reshape(T, Bp, 2 * G)

    lens = lens_ref[...]                       # (Bp, 1) f32 valid lengths
    whf = whf_ref[...]                         # hoisted once, reused every step
    whb = whb_ref[...]
    bhf = bhf_ref[...]
    bhb = bhb_ref[...]

    def gru_cell(gxt, h, wh, bh):
        gh = jnp.dot(h.astype(bf16), wh, preferred_element_type=f32) + bh
        r = jax.nn.sigmoid(gxt[:, :Hp] + gh[:, :Hp])
        z = jax.nn.sigmoid(gxt[:, Hp:2 * Hp] + gh[:, Hp:2 * Hp])
        n = jnp.tanh(gxt[:, 2 * Hp:] + r * gh[:, 2 * Hp:])
        return n + z * (h - n)                 # == (1 - z) * n + z * h

    h_f = jnp.zeros((Bp, Hp), f32)
    h_b = jnp.zeros((Bp, Hp), f32)

    # ---- Forward and backward recurrences interleaved in one unrolled loop
    #      (two independent dependency chains per step).  T static -> unroll.
    for s in range(T):
        tf = s
        tb = T - 1 - s
        hf_new = gru_cell(gx_ref[tf, :, :G], h_f, whf, bhf)
        hb_new = gru_cell(gx_ref[tb, :, G:], h_b, whb, bhb)
        m_f = (lens > float(tf)).astype(f32)   # (Bp,1) packed-seq validity
        m_b = (lens > float(tb)).astype(f32)
        out_ref[tf] = m_f * hf_new             # lane-dense per-step store
        bwd_ref[tb] = m_b * hb_new
        h_f = h_f + m_f * (hf_new - h_f)       # padded steps freeze h
        h_b = h_b + m_b * (hb_new - h_b)

    # The module sums the two directions: do it in-kernel in one bulk pass.
    out_ref[...] = out_ref[...] + bwd_ref[...]
    hid_ref[0] = h_f
    hid_ref[1] = h_b


def _pad2(a, rows, cols):
    return jnp.pad(a, ((0, rows - a.shape[0]), (0, cols - a.shape[1])))


def _fuse_gates_w(w, Hp):   # (3, H, H) -> (Hp, 3*Hp), gate columns [r | z | n]
    return jnp.concatenate([_pad2(w[g], Hp, Hp) for g in range(3)], axis=1)


def _fuse_gates_b(b, Hp):   # (3, 1, H) -> (1, 3*Hp)
    return jnp.concatenate([_pad2(b[g], 1, Hp) for g in range(3)], axis=1)


def prepare_params(params):
    """Pad / fuse / cast weights ONCE, outside the jitted per-call path."""
    H = params["w1"].shape[0]
    Hp = ((H + 127) // 128) * 128
    bf16 = jnp.bfloat16
    prep = {
        "embedding": params["embedding"],                        # (vocab, H)
        "w1": _pad2(params["w1"], Hp, Hp).astype(bf16),
        "w2": _pad2(params["w2"], Hp, Hp).astype(bf16),
        "w3": _pad2(params["w3"], Hp, Hp).astype(bf16),
        "b1": _pad2(params["b1"], 1, Hp),
        "b2": _pad2(params["b2"], 1, Hp),
        "b3": _pad2(params["b3"], 1, Hp),
        # x-side gate weights of BOTH directions fused for a single matmul.
        "wi": jnp.concatenate([_fuse_gates_w(params["wi_f"], Hp),
                               _fuse_gates_w(params["wi_b"], Hp)],
                              axis=1).astype(bf16),              # (Hp, 6*Hp)
        "bi": jnp.concatenate([_fuse_gates_b(params["bi_f"], Hp),
                               _fuse_gates_b(params["bi_b"], Hp)], axis=1),
        "whf": _fuse_gates_w(params["wh_f"], Hp).astype(bf16),   # (Hp, 3*Hp)
        "whb": _fuse_gates_w(params["wh_b"], Hp).astype(bf16),
        "bhf": _fuse_gates_b(params["bh_f"], Hp),
        "bhb": _fuse_gates_b(params["bh_b"], Hp),
    }
    return jax.tree_util.tree_map(jnp.asarray, prep)


def mlp_forward(input_seq, input_lengths, prep):
    """input_seq: (T, B) int32; input_lengths: (B,) int32 (sorted descending,
    as nn.utils.rnn.pack_padded_sequence requires).  hidden=None (zeros)."""
    H = prep["embedding"].shape[1]
    Hp = prep["w1"].shape[0]
    emb = prep["embedding"][input_seq]                 # (T, B, H) gather = glue
    T, B, _ = emb.shape
    Bp = ((B + 7) // 8) * 8                            # sublane-aligned batch

    x = jnp.pad(emb, ((0, 0), (0, Bp - B), (0, Hp - H))).astype(jnp.bfloat16)
    # Tiny (Bp, 1) f32 length column; per-step mask is built in-kernel
    # (no (T, Bp, Hp) mask slab in HBM/VMEM).
    lens = jnp.pad(input_lengths.astype(jnp.float32),
                   (0, Bp - B)).reshape(Bp, 1)

    out, hid = pl.pallas_call(
        mlp_bigru_kernel,
        out_shape=(jax.ShapeDtypeStruct((T, Bp, Hp), jnp.float32),
                   jax.ShapeDtypeStruct((2, Bp, Hp), jnp.float32)),
        scratch_shapes=[pltpu.VMEM((T, Bp, 6 * Hp), jnp.float32),  # gx stage
                        pltpu.VMEM((T, Bp, Hp), jnp.float32)],     # bwd dir
    )(x, lens,
      prep["w1"], prep["b1"], prep["w2"], prep["b2"], prep["w3"], prep["b3"],
      prep["wi"], prep["bi"], prep["whf"], prep["bhf"],
      prep["whb"], prep["bhb"])

    outputs = out[:, :B, :H]        # padded rows/lanes sliced off
    hidden = hid[:, :B, :H]
    return outputs, hidden


def make_params(key, vocab, H):
    ks = jax.random.split(key, 16)
    s = 0.1
    n = lambda k, shape: jax.random.normal(k, shape, jnp.float32) * s
    p = {
        "embedding": n(ks[0], (vocab, H)),
        "w1": n(ks[1], (H, H)), "b1": n(ks[2], (1, H)),
        "w2": n(ks[3], (H, H)), "b2": n(ks[4], (1, H)),
        "w3": n(ks[5], (H, H)), "b3": n(ks[6], (1, H)),
        # GRU weights per direction, per gate (r, z, n): (3, H, H) / (3, 1, H)
        "wi_f": n(ks[7], (3, H, H)), "wh_f": n(ks[8], (3, H, H)),
        "bi_f": n(ks[9], (3, 1, H)), "bh_f": n(ks[10], (3, 1, H)),
        "wi_b": n(ks[11], (3, H, H)), "wh_b": n(ks[12], (3, H, H)),
        "bi_b": n(ks[13], (3, 1, H)), "bh_b": n(ks[14], (3, 1, H)),
    }
    return p, ks[15]


if __name__ == "__main__":
    H = 32          # hidden_size
    T = 8           # sequence length
    B = 2           # batch
    VOCAB = 20      # embedding rows

    key = jax.random.PRNGKey(0)
    params, key = make_params(key, VOCAB, H)
    prep = prepare_params(params)     # once, outside the jitted per-call path

    k_seq, _ = jax.random.split(key)
    input_seq = jax.random.randint(k_seq, (T, B), 0, VOCAB, dtype=jnp.int32)
    # sorted descending, as pack_padded_sequence(enforce_sorted=True) requires
    input_lengths = jnp.array([T, 5], dtype=jnp.int32)

    # TODO(synk): dropout is unused (n_layers == 1 -> dropout forced to 0), not implemented.
    fwd = jax.jit(mlp_forward)
    outputs, hidden = fwd(input_seq, input_lengths, prep)
    jax.block_until_ready((outputs, hidden))

    assert outputs.shape == (T, B, H)
    assert hidden.shape == (2, B, H)
    assert bool(jnp.all(jnp.isfinite(outputs))) and bool(jnp.all(jnp.isfinite(hidden)))
    print("KERNEL_OK")
</pallas_src>

<mosaic_0001>
module attributes {stable_mosaic.version = 11 : i64} {
  func.func @mlp_bigru_kernel(%arg0: memref<8x8x128xbf16, #tpu.memory_space<vmem>>, %arg1: memref<8x1xf32, #tpu.memory_space<vmem>>, %arg2: memref<128x128xbf16, #tpu.memory_space<vmem>>, %arg3: memref<1x128xf32, #tpu.memory_space<vmem>>, %arg4: memref<128x128xbf16, #tpu.memory_space<vmem>>, %arg5: memref<1x128xf32, #tpu.memory_space<vmem>>, %arg6: memref<128x128xbf16, #tpu.memory_space<vmem>>, %arg7: memref<1x128xf32, #tpu.memory_space<vmem>>, %arg8: memref<128x768xbf16, #tpu.memory_space<vmem>>, %arg9: memref<1x768xf32, #tpu.memory_space<vmem>>, %arg10: memref<128x384xbf16, #tpu.memory_space<vmem>>, %arg11: memref<1x384xf32, #tpu.memory_space<vmem>>, %arg12: memref<128x384xbf16, #tpu.memory_space<vmem>>, %arg13: memref<1x384xf32, #tpu.memory_space<vmem>>, %arg14: memref<8x8x128xf32, #tpu.memory_space<vmem>>, %arg15: memref<2x8x128xf32, #tpu.memory_space<vmem>>, %arg16: memref<8x8x768xf32, #tpu.memory_space<vmem>>, %arg17: memref<8x8x128xf32, #tpu.memory_space<vmem>>) attributes {dimension_semantics = [], scalar_prefetch = 0 : i64, scratch_operands = 2 : i64, tpu.core_type = #tpu.core_type<tc>} {
    %c0 = arith.constant 0 : index
    %c0_0 = arith.constant 0 : index
    %c0_1 = arith.constant 0 : index
    %0 = vector.load %arg0[%c0, %c0_0, %c0_1] : memref<8x8x128xbf16, #tpu.memory_space<vmem>>, vector<8x8x128xbf16>
    %1 = vector.shape_cast %0 : vector<8x8x128xbf16> to vector<64x128xbf16>
    %c0_2 = arith.constant 0 : index
    %c0_3 = arith.constant 0 : index
    %2 = vector.load %arg2[%c0_2, %c0_3] : memref<128x128xbf16, #tpu.memory_space<vmem>>, vector<128x128xbf16>
    %cst = arith.constant dense<0.000000e+00> : vector<64x128xf32>
    %3 = tpu.matmul %1, %2, %cst {dimension_numbers = #tpu.dot_dimension_numbers<[1], [0], [0], [1], [0, 0, 1, 1], [], []>} : vector<64x128xbf16>, vector<128x128xbf16>, vector<64x128xf32> -> vector<64x128xf32>
    %c0_4 = arith.constant 0 : index
    %c0_5 = arith.constant 0 : index
    %4 = vector.load %arg3[%c0_4, %c0_5] : memref<1x128xf32, #tpu.memory_space<vmem>>, vector<1x128xf32>
    %5 = vector.broadcast %4 : vector<1x128xf32> to vector<64x128xf32>
    %6 = arith.addf %3, %5 : vector<64x128xf32>
    %cst_6 = arith.constant 0.000000e+00 : f32
    %7 = vector.broadcast %cst_6 : f32 to vector<64x128xf32>
    %8 = arith.maximumf %6, %7 : vector<64x128xf32>
    %9 = arith.truncf %8 : vector<64x128xf32> to vector<64x128xbf16>
    %c0_7 = arith.constant 0 : index
    %c0_8 = arith.constant 0 : index
    %10 = vector.load %arg4[%c0_7, %c0_8] : memref<128x128xbf16, #tpu.memory_space<vmem>>, vector<128x128xbf16>
    %cst_9 = arith.constant dense<0.000000e+00> : vector<64x128xf32>
    %11 = tpu.matmul %9, %10, %cst_9 {dimension_numbers = #tpu.dot_dimension_numbers<[1], [0], [0], [1], [0, 0, 1, 1], [], []>} : vector<64x128xbf16>, vector<128x128xbf16>, vector<64x128xf32> -> vector<64x128xf32>
    %c0_10 = arith.constant 0 : index
    %c0_11 = arith.constant 0 : index
    %12 = vector.load %arg5[%c0_10, %c0_11] : memref<1x128xf32, #tpu.memory_space<vmem>>, vector<1x128xf32>
    %13 = vector.broadcast %12 : vector<1x128xf32> to vector<64x128xf32>
    %14 = arith.addf %11, %13 : vector<64x128xf32>
    %cst_12 = arith.constant 0.000000e+00 : f32
    %15 = vector.broadcast %cst_12 : f32 to vector<64x128xf32>
    %16 = arith.maximumf %14, %15 : vector<64x128xf32>
    %17 = arith.truncf %16 : vector<64x128xf32> to vector<64x128xbf16>
    %c0_13 = arith.constant 0 : index
    %c0_14 = arith.constant 0 : index
    %18 = vector.load %arg6[%c0_13, %c0_14] : memref<128x128xbf16, #tpu.memory_space<vmem>>, vector<128x128xbf16>
    %cst_15 = arith.constant dense<0.000000e+00> : vector<64x128xf32>
    %19 = tpu.matmul %17, %18, %cst_15 {dimension_numbers = #tpu.dot_dimension_numbers<[1], [0], [0], [1], [0, 0, 1, 1], [], []>} : vector<64x128xbf16>, vector<128x128xbf16>, vector<64x128xf32> -> vector<64x128xf32>
    %c0_16 = arith.constant 0 : index
    %c0_17 = arith.constant 0 : index
    %20 = vector.load %arg7[%c0_16, %c0_17] : memref<1x128xf32, #tpu.memory_space<vmem>>, vector<1x128xf32>
    %21 = vector.broadcast %20 : vector<1x128xf32> to vector<64x128xf32>
    %22 = arith.addf %19, %21 : vector<64x128xf32>
    %23 = arith.truncf %22 : vector<64x128xf32> to vector<64x128xbf16>
    %c0_18 = arith.constant 0 : index
    %c0_19 = arith.constant 0 : index
    %24 = vector.load %arg8[%c0_18, %c0_19] : memref<128x768xbf16, #tpu.memory_space<vmem>>, vector<128x768xbf16>
    %cst_20 = arith.constant dense<0.000000e+00> : vector<64x768xf32>
    %25 = tpu.matmul %23, %24, %cst_20 {dimension_numbers = #tpu.dot_dimension_numbers<[1], [0], [0], [1], [0, 0, 1, 1], [], []>} : vector<64x128xbf16>, vector<128x768xbf16>, vector<64x768xf32> -> vector<64x768xf32>
    %c0_21 = arith.constant 0 : index
    %c0_22 = arith.constant 0 : index
    %26 = vector.load %arg9[%c0_21, %c0_22] : memref<1x768xf32, #tpu.memory_space<vmem>>, vector<1x768xf32>
    %27 = vector.broadcast %26 : vector<1x768xf32> to vector<64x768xf32>
    %28 = arith.addf %25, %27 : vector<64x768xf32>
    %29 = vector.shape_cast %28 : vector<64x768xf32> to vector<8x8x768xf32>
    %c0_23 = arith.constant 0 : index
    %c0_24 = arith.constant 0 : index
    %c0_25 = arith.constant 0 : index
    %30 = vector.load %arg16[%c0_23, %c0_24, %c0_25] : memref<8x8x768xf32, #tpu.memory_space<vmem>>, vector<8x8x768xf32>
    tpu.vector_store %arg16[%c0_23, %c0_24, %c0_25], %29 {strides = array<i32>} : memref<8x8x768xf32, #tpu.memory_space<vmem>>, vector<8x8x768xf32>,
    %c0_26 = arith.constant 0 : index
    %c0_27 = arith.constant 0 : index
    %31 = vector.load %arg1[%c0_26, %c0_27] : memref<8x1xf32, #tpu.memory_space<vmem>>, vector<8x1xf32>
    %c0_28 = arith.constant 0 : index
    %c0_29 = arith.constant 0 : index
    %32 = vector.load %arg10[%c0_28, %c0_29] : memref<128x384xbf16, #tpu.memory_space<vmem>>, vector<128x384xbf16>
    %c0_30 = arith.constant 0 : index
    %c0_31 = arith.constant 0 : index
    %33 = vector.load %arg12[%c0_30, %c0_31] : memref<128x384xbf16, #tpu.memory_space<vmem>>, vector<128x384xbf16>
    %c0_32 = arith.constant 0 : index
    %c0_33 = arith.constant 0 : index
    %34 = vector.load %arg11[%c0_32, %c0_33] : memref<1x384xf32, #tpu.memory_space<vmem>>, vector<1x384xf32>
    %c0_34 = arith.constant 0 : index
    %c0_35 = arith.constant 0 : index
    %35 = vector.load %arg13[%c0_34, %c0_35] : memref<1x384xf32, #tpu.memory_space<vmem>>, vector<1x384xf32>
    %cst_36 = arith.constant 0.000000e+00 : f32
    %36 = vector.broadcast %cst_36 : f32 to vector<8x128xf32>
    %cst_37 = arith.constant 0.000000e+00 : f32
    %37 = vector.broadcast %cst_37 : f32 to vector<8x128xf32>
    %c0_38 = arith.constant 0 : index
    %c0_39 = arith.constant 0 : index
    %c0_40 = arith.constant 0 : index
    %38 = vector.load %arg16[%c0_38, %c0_39, %c0_40] : memref<8x8x768xf32, #tpu.memory_space<vmem>>, vector<1x8x384xf32>
    %39 = vector.shape_cast %38 : vector<1x8x384xf32> to vector<8x384xf32>
    %40 = arith.truncf %36 : vector<8x128xf32> to vector<8x128xbf16>
    %cst_41 = arith.constant dense<0.000000e+00> : vector<8x384xf32>
    %41 = tpu.matmul %40, %32, %cst_41 {dimension_numbers = #tpu.dot_dimension_numbers<[1], [0], [0], [1], [0, 0, 1, 1], [], []>} : vector<8x128xbf16>, vector<128x384xbf16>, vector<8x384xf32> -> vector<8x384xf32>
    %42 = vector.broadcast %34 : vector<1x384xf32> to vector<8x384xf32>
    %43 = arith.addf %41, %42 : vector<8x384xf32>
    %44 = vector.extract_strided_slice %39 {offsets = [0, 0], sizes = [8, 128], strides = [1, 1]} : vector<8x384xf32> to vector<8x128xf32>
    %45 = vector.extract_strided_slice %43 {offsets = [0, 0], sizes = [8, 128], strides = [1, 1]} : vector<8x384xf32> to vector<8x128xf32>
    %46 = arith.addf %44, %45 : vector<8x128xf32>
    %47 = arith.negf %46 : vector<8x128xf32>
    %48 = math.exp %47 : vector<8x128xf32>
    %cst_42 = arith.constant 1.000000e+00 : f32
    %49 = vector.broadcast %cst_42 : f32 to vector<8x128xf32>
    %50 = arith.addf %49, %48 : vector<8x128xf32>
    %51 = arith.divf %49, %50 : vector<8x128xf32>
    %52 = vector.extract_strided_slice %39 {offsets = [0, 128], sizes = [8, 128], strides = [1, 1]} : vector<8x384xf32> to vector<8x128xf32>
    %53 = vector.extract_strided_slice %43 {offsets = [0, 128], sizes = [8, 128], strides = [1, 1]} : vector<8x384xf32> to vector<8x128xf32>
    %54 = arith.addf %52, %53 : vector<8x128xf32>
    %55 = arith.negf %54 : vector<8x128xf32>
    %56 = math.exp %55 : vector<8x128xf32>
    %cst_43 = arith.constant 1.000000e+00 : f32
    %57 = vector.broadcast %cst_43 : f32 to vector<8x128xf32>
    %58 = arith.addf %57, %56 : vector<8x128xf32>
    %59 = arith.divf %57, %58 : vector<8x128xf32>
    %60 = vector.extract_strided_slice %39 {offsets = [0, 256], sizes = [8, 128], strides = [1, 1]} : vector<8x384xf32> to vector<8x128xf32>
    %61 = vector.extract_strided_slice %43 {offsets = [0, 256], sizes = [8, 128], strides = [1, 1]} : vector<8x384xf32> to vector<8x128xf32>
    %62 = arith.mulf %51, %61 : vector<8x128xf32>
    %63 = arith.addf %60, %62 : vector<8x128xf32>
    %64 = math.tanh %63 : vector<8x128xf32>
    %65 = arith.subf %36, %64 : vector<8x128xf32>
    %66 = arith.mulf %59, %65 : vector<8x128xf32>
    %67 = arith.addf %64, %66 : vector<8x128xf32>
    %c7 = arith.constant 7 : index
    %c0_44 = arith.constant 0 : index
    %c384 = arith.constant 384 : index
    %68 = vector.load %arg16[%c7, %c0_44, %c384] : memref<8x8x768xf32, #tpu.memory_space<vmem>>, vector<1x8x384xf32>
    %69 = vector.shape_cast %68 : vector<1x8x384xf32> to vector<8x384xf32>
    %70 = arith.truncf %37 : vector<8x128xf32> to vector<8x128xbf16>
    %cst_45 = arith.constant dense<0.000000e+00> : vector<8x384xf32>
    %71 = tpu.matmul %70, %33, %cst_45 {dimension_numbers = #tpu.dot_dimension_numbers<[1], [0], [0], [1], [0, 0, 1, 1], [], []>} : vector<8x128xbf16>, vector<128x384xbf16>, vector<8x384xf32> -> vector<8x384xf32>
    %72 = vector.broadcast %35 : vector<1x384xf32> to vector<8x384xf32>
    %73 = arith.addf %71, %72 : vector<8x384xf32>
    %74 = vector.extract_strided_slice %69 {offsets = [0, 0], sizes = [8, 128], strides = [1, 1]} : vector<8x384xf32> to vector<8x128xf32>
    %75 = vector.extract_strided_slice %73 {offsets = [0, 0], sizes = [8, 128], strides = [1, 1]} : vector<8x384xf32> to vector<8x128xf32>
    %76 = arith.addf %74, %75 : vector<8x128xf32>
    %77 = arith.negf %76 : vector<8x128xf32>
    %78 = math.exp %77 : vector<8x128xf32>
    %cst_46 = arith.constant 1.000000e+00 : f32
    %79 = vector.broadcast %cst_46 : f32 to vector<8x128xf32>
    %80 = arith.addf %79, %78 : vector<8x128xf32>
    %81 = arith.divf %79, %80 : vector<8x128xf32>
    %82 = vector.extract_strided_slice %69 {offsets = [0, 128], sizes = [8, 128], strides = [1, 1]} : vector<8x384xf32> to vector<8x128xf32>
    %83 = vector.extract_strided_slice %73 {offsets = [0, 128], sizes = [8, 128], strides = [1, 1]} : vector<8x384xf32> to vector<8x128xf32>
    %84 = arith.addf %82, %83 : vector<8x128xf32>
    %85 = arith.negf %84 : vector<8x128xf32>
    %86 = math.exp %85 : vector<8x128xf32>
    %cst_47 = arith.constant 1.000000e+00 : f32
    %87 = vector.broadcast %cst_47 : f32 to vector<8x128xf32>
    %88 = arith.addf %87, %86 : vector<8x128xf32>
    %89 = arith.divf %87, %88 : vector<8x128xf32>
    %90 = vector.extract_strided_slice %69 {offsets = [0, 256], sizes = [8, 128], strides = [1, 1]} : vector<8x384xf32> to vector<8x128xf32>
    %91 = vector.extract_strided_slice %73 {offsets = [0, 256], sizes = [8, 128], strides = [1, 1]} : vector<8x384xf32> to vector<8x128xf32>
    %92 = arith.mulf %81, %91 : vector<8x128xf32>
    %93 = arith.addf %90, %92 : vector<8x128xf32>
    %94 = math.tanh %93 : vector<8x128xf32>
    %95 = arith.subf %37, %94 : vector<8x128xf32>
    %96 = arith.mulf %89, %95 : vector<8x128xf32>
    %97 = arith.addf %94, %96 : vector<8x128xf32>
    %cst_48 = arith.constant 0.000000e+00 : f32
    %98 = vector.broadcast %cst_48 : f32 to vector<8x1xf32>
    %99 = arith.cmpf ogt, %31, %98 : vector<8x1xf32>
    %100 = arith.extui %99 : vector<8x1xi1> to vector<8x1xi32>
    %101 = arith.sitofp %100 : vector<8x1xi32> to vector<8x1xf32>
    %cst_49 = arith.constant 7.000000e+00 : f32
    %102 = vector.broadcast %cst_49 : f32 to vector<8x1xf32>
    %103 = arith.cmpf ogt, %31, %102 : vector<8x1xf32>
    %104 = arith.extui %103 : vector<8x1xi1> to vector<8x1xi32>
    %105 = arith.sitofp %104 : vector<8x1xi32> to vector<8x1xf32>
    %106 = vector.broadcast %101 : vector<8x1xf32> to vector<8x128xf32>
    %107 = arith.mulf %106, %67 : vector<8x128xf32>
    %c0_50 = arith.constant 0 : index
    %c0_51 = arith.constant 0 : index
    %c0_52 = arith.constant 0 : index
    %108 = vector.load %arg14[%c0_50, %c0_51, %c0_52] : memref<8x8x128xf32, #tpu.memory_space<vmem>>, vector<1x8x128xf32>
    %109 = vector.shape_cast %108 : vector<1x8x128xf32> to vector<8x128xf32>
    %110 = vector.shape_cast %107 : vector<8x128xf32> to vector<1x8x128xf32>
    tpu.vector_store %arg14[%c0_50, %c0_51, %c0_52], %110 {strides = array<i32>} : memref<8x8x128xf32, #tpu.memory_space<vmem>>, vector<1x8x128xf32>,
    %111 = vector.broadcast %105 : vector<8x1xf32> to vector<8x128xf32>
    %112 = arith.mulf %111, %97 : vector<8x128xf32>
    %c7_53 = arith.constant 7 : index
    %c0_54 = arith.constant 0 : index
    %c0_55 = arith.constant 0 : index
    %113 = vector.load %arg17[%c7_53, %c0_54, %c0_55] : memref<8x8x128xf32, #tpu.memory_space<vmem>>, vector<1x8x128xf32>
    %114 = vector.shape_cast %113 : vector<1x8x128xf32> to vector<8x128xf32>
    %115 = vector.shape_cast %112 : vector<8x128xf32> to vector<1x8x128xf32>
    tpu.vector_store %arg17[%c7_53, %c0_54, %c0_55], %115 {strides = array<i32>} : memref<8x8x128xf32, #tpu.memory_space<vmem>>, vector<1x8x128xf32>,
    %116 = arith.subf %67, %36 : vector<8x128xf32>
    %117 = vector.broadcast %101 : vector<8x1xf32> to vector<8x128xf32>
    %118 = arith.mulf %117, %116 : vector<8x128xf32>
    %119 = arith.addf %36, %118 : vector<8x128xf32>
    %120 = arith.subf %97, %37 : vector<8x128xf32>
    %121 = vector.broadcast %105 : vector<8x1xf32> to vector<8x128xf32>
    %122 = arith.mulf %121, %120 : vector<8x128xf32>
    %123 = arith.addf %37, %122 : vector<8x128xf32>
    %c1 = arith.constant 1 : index
    %c0_56 = arith.constant 0 : index
    %c0_57 = arith.constant 0 : index
    %124 = vector.load %arg16[%c1, %c0_56, %c0_57] : memref<8x8x768xf32, #tpu.memory_space<vmem>>, vector<1x8x384xf32>
    %125 = vector.shape_cast %124 : vector<1x8x384xf32> to vector<8x384xf32>
    %126 = arith.truncf %119 : vector<8x128xf32> to vector<8x128xbf16>
    %cst_58 = arith.constant dense<0.000000e+00> : vector<8x384xf32>
    %127 = tpu.matmul %126, %32, %cst_58 {dimension_numbers = #tpu.dot_dimension_numbers<[1], [0], [0], [1], [0, 0, 1, 1], [], []>} : vector<8x128xbf16>, vector<128x384xbf16>, vector<8x384xf32> -> vector<8x384xf32>
    %128 = vector.broadcast %34 : vector<1x384xf32> to vector<8x384xf32>
    %129 = arith.addf %127, %128 : vector<8x384xf32>
    %130 = vector.extract_strided_slice %125 {offsets = [0, 0], sizes = [8, 128], strides = [1, 1]} : vector<8x384xf32> to vector<8x128xf32>
    %131 = vector.extract_strided_slice %129 {offsets = [0, 0], sizes = [8, 128], strides = [1, 1]} : vector<8x384xf32> to vector<8x128xf32>
    %132 = arith.addf %130, %131 : vector<8x128xf32>
    %133 = arith.negf %132 : vector<8x128xf32>
    %134 = math.exp %133 : vector<8x128xf32>
    %cst_59 = arith.constant 1.000000e+00 : f32
    %135 = vector.broadcast %cst_59 : f32 to vector<8x128xf32>
    %136 = arith.addf %135, %134 : vector<8x128xf32>
    %137 = arith.divf %135, %136 : vector<8x128xf32>
    %138 = vector.extract_strided_slice %125 {offsets = [0, 128], sizes = [8, 128], strides = [1, 1]} : vector<8x384xf32> to vector<8x128xf32>
    %139 = vector.extract_strided_slice %129 {offsets = [0, 128], sizes = [8, 128], strides = [1, 1]} : vector<8x384xf32> to vector<8x128xf32>
    %140 = arith.addf %138, %139 : vector<8x128xf32>
    %141 = arith.negf %140 : vector<8x128xf32>
    %142 = math.exp %141 : vector<8x128xf32>
    %cst_60 = arith.constant 1.000000e+00 : f32
    %143 = vector.broadcast %cst_60 : f32 to vector<8x128xf32>
    %144 = arith.addf %143, %142 : vector<8x128xf32>
    %145 = arith.divf %143, %144 : vector<8x128xf32>
    %146 = vector.extract_strided_slice %125 {offsets = [0, 256], sizes = [8, 128], strides = [1, 1]} : vector<8x384xf32> to vector<8x128xf32>
    %147 = vector.extract_strided_slice %129 {offsets = [0, 256], sizes = [8, 128], strides = [1, 1]} : vector<8x384xf32> to vector<8x128xf32>
    %148 = arith.mulf %137, %147 : vector<8x128xf32>
    %149 = arith.addf %146, %148 : vector<8x128xf32>
    %150 = math.tanh %149 : vector<8x128xf32>
    %151 = arith.subf %119, %150 : vector<8x128xf32>
    %152 = arith.mulf %145, %151 : vector<8x128xf32>
    %153 = arith.addf %150, %152 : vector<8x128xf32>
    %c6 = arith.constant 6 : index
    %c0_61 = arith.constant 0 : index
    %c384_62 = arith.constant 384 : index
    %154 = vector.load %arg16[%c6, %c0_61, %c384_62] : memref<8x8x768xf32, #tpu.memory_space<vmem>>, vector<1x8x384xf32>
    %155 = vector.shape_cast %154 : vector<1x8x384xf32> to vector<8x384xf32>
    %156 = arith.truncf %123 : vector<8x128xf32> to vector<8x128xbf16>
    %cst_63 = arith.constant dense<0.000000e+00> : vector<8x384xf32>
    %157 = tpu.matmul %156, %33, %cst_63 {dimension_numbers = #tpu.dot_dimension_numbers<[1], [0], [0], [1], [0, 0, 1, 1], [], []>} : vector<8x128xbf16>, vector<128x384xbf16>, vector<8x384xf32> -> vector<8x384xf32>
    %158 = vector.broadcast %35 : vector<1x384xf32> to vector<8x384xf32>
    %159 = arith.addf %157, %158 : vector<8x384xf32>
    %160 = vector.extract_strided_slice %155 {offsets = [0, 0], sizes = [8, 128], strides = [1, 1]} : vector<8x384xf32> to vector<8x128xf32>
    %161 = vector.extract_strided_slice %159 {offsets = [0, 0], sizes = [8, 128], strides = [1, 1]} : vector<8x384xf32> to vector<8x128xf32>
    %162 = arith.addf %160, %161 : vector<8x128xf32>
    %163 = arith.negf %162 : vector<8x128xf32>
    %164 = math.exp %163 : vector<8x128xf32>
    %cst_64 = arith.constant 1.000000e+00 : f32
    %165 = vector.broadcast %cst_64 : f32 to vector<8x128xf32>
    %166 = arith.addf %165, %164 : vector<8x128xf32>
    %167 = arith.divf %165, %166 : vector<8x128xf32>
    %168 = vector.extract_strided_slice %155 {offsets = [0, 128], sizes = [8, 128], strides = [1, 1]} : vector<8x384xf32> to vector<8x128xf32>
    %169 = vector.extract_strided_slice %159 {offsets = [0, 128], sizes = [8, 128], strides = [1, 1]} : vector<8x384xf32> to vector<8x128xf32>
    %170 = arith.addf %168, %169 : vector<8x128xf32>
    %171 = arith.negf %170 : vector<8x128xf32>
    %172 = math.exp %171 : vector<8x128xf32>
    %cst_65 = arith.constant 1.000000e+00 : f32
    %173 = vector.broadcast %cst_65 : f32 to vector<8x128xf32>
    %174 = arith.addf %173, %172 : vector<8x128xf32>
    %175 = arith.divf %173, %174 : vector<8x128xf32>
    %176 = vector.extract_strided_slice %155 {offsets = [0, 256], sizes = [8, 128], strides = [1, 1]} : vector<8x384xf32> to vector<8x128xf32>
    %177 = vector.extract_strided_slice %159 {offsets = [0, 256], sizes = [8, 128], strides = [1, 1]} : vector<8x384xf32> to vector<8x128xf32>
    %178 = arith.mulf %167, %177 : vector<8x128xf32>
    %179 = arith.addf %176, %178 : vector<8x128xf32>
    %180 = math.tanh %179 : vector<8x128xf32>
    %181 = arith.subf %123, %180 : vector<8x128xf32>
    %182 = arith.mulf %175, %181 : vector<8x128xf32>
    %183 = arith.addf %180, %182 : vector<8x128xf32>
    %cst_66 = arith.constant 1.000000e+00 : f32
    %184 = vector.broadcast %cst_66 : f32 to vector<8x1xf32>
    %185 = arith.cmpf ogt, %31, %184 : vector<8x1xf32>
    %186 = arith.extui %185 : vector<8x1xi1> to vector<8x1xi32>
    %187 = arith.sitofp %186 : vector<8x1xi32> to vector<8x1xf32>
    %cst_67 = arith.constant 6.000000e+00 : f32
    %188 = vector.broadcast %cst_67 : f32 to vector<8x1xf32>
    %189 = arith.cmpf ogt, %31, %188 : vector<8x1xf32>
    %190 = arith.extui %189 : vector<8x1xi1> to vector<8x1xi32>
    %191 = arith.sitofp %190 : vector<8x1xi32> to vector<8x1xf32>
    %192 = vector.broadcast %187 : vector<8x1xf32> to vector<8x128xf32>
    %193 = arith.mulf %192, %153 : vector<8x128xf32>
    %c1_68 = arith.constant 1 : index
    %c0_69 = arith.constant 0 : index
    %c0_70 = arith.constant 0 : index
    %194 = vector.load %arg14[%c1_68, %c0_69, %c0_70] : memref<8x8x128xf32, #tpu.memory_space<vmem>>, vector<1x8x128xf32>
    %195 = vector.shape_cast %194 : vector<1x8x128xf32> to vector<8x128xf32>
    %196 = vector.shape_cast %193 : vector<8x128xf32> to vector<1x8x128xf32>
    tpu.vector_store %arg14[%c1_68, %c0_69, %c0_70], %196 {strides = array<i32>} : memref<8x8x128xf32, #tpu.memory_space<vmem>>, vector<1x8x128xf32>,
    %197 = vector.broadcast %191 : vector<8x1xf32> to vector<8x128xf32>
    %198 = arith.mulf %197, %183 : vector<8x128xf32>
    %c6_71 = arith.constant 6 : index
    %c0_72 = arith.constant 0 : index
    %c0_73 = arith.constant 0 : index
    %199 = vector.load %arg17[%c6_71, %c0_72, %c0_73] : memref<8x8x128xf32, #tpu.memory_space<vmem>>, vector<1x8x128xf32>
    %200 = vector.shape_cast %199 : vector<1x8x128xf32> to vector<8x128xf32>
    %201 = vector.shape_cast %198 : vector<8x128xf32> to vector<1x8x128xf32>
    tpu.vector_store %arg17[%c6_71, %c0_72, %c0_73], %201 {strides = array<i32>} : memref<8x8x128xf32, #tpu.memory_space<vmem>>, vector<1x8x128xf32>,
    %202 = arith.subf %153, %119 : vector<8x128xf32>
    %203 = vector.broadcast %187 : vector<8x1xf32> to vector<8x128xf32>
    %204 = arith.mulf %203, %202 : vector<8x128xf32>
    %205 = arith.addf %119, %204 : vector<8x128xf32>
    %206 = arith.subf %183, %123 : vector<8x128xf32>
    %207 = vector.broadcast %191 : vector<8x1xf32> to vector<8x128xf32>
    %208 = arith.mulf %207, %206 : vector<8x128xf32>
    %209 = arith.addf %123, %208 : vector<8x128xf32>
    %c2 = arith.constant 2 : index
    %c0_74 = arith.constant 0 : index
    %c0_75 = arith.constant 0 : index
    %210 = vector.load %arg16[%c2, %c0_74, %c0_75] : memref<8x8x768xf32, #tpu.memory_space<vmem>>, vector<1x8x384xf32>
    %211 = vector.shape_cast %210 : vector<1x8x384xf32> to vector<8x384xf32>
    %212 = arith.truncf %205 : vector<8x128xf32> to vector<8x128xbf16>
    %cst_76 = arith.constant dense<0.000000e+00> : vector<8x384xf32>
    %213 = tpu.matmul %212, %32, %cst_76 {dimension_numbers = #tpu.dot_dimension_numbers<[1], [0], [0], [1], [0, 0, 1, 1], [], []>} : vector<8x128xbf16>, vector<128x384xbf16>, vector<8x384xf32> -> vector<8x384xf32>
    %214 = vector.broadcast %34 : vector<1x384xf32> to vector<8x384xf32>
    %215 = arith.addf %213, %214 : vector<8x384xf32>
    %216 = vector.extract_strided_slice %211 {offsets = [0, 0], sizes = [8, 128], strides = [1, 1]} : vector<8x384xf32> to vector<8x128xf32>
    %217 = vector.extract_strided_slice %215 {offsets = [0, 0], sizes = [8, 128], strides = [1, 1]} : vector<8x384xf32> to vector<8x128xf32>
    %218 = arith.addf %216, %217 : vector<8x128xf32>
    %219 = arith.negf %218 : vector<8x128xf32>
    %220 = math.exp %219 : vector<8x128xf32>
    %cst_77 = arith.constant 1.000000e+00 : f32
    %221 = vector.broadcast %cst_77 : f32 to vector<8x128xf32>
    %222 = arith.addf %221, %220 : vector<8x128xf32>
    %223 = arith.divf %221, %222 : vector<8x128xf32>
    %224 = vector.extract_strided_slice %211 {offsets = [0, 128], sizes = [8, 128], strides = [1, 1]} : vector<8x384xf32> to vector<8x128xf32>
    %225 = vector.extract_strided_slice %215 {offsets = [0, 128], sizes = [8, 128], strides = [1, 1]} : vector<8x384xf32> to vector<8x128xf32>
    %226 = arith.addf %224, %225 : vector<8x128xf32>
    %227 = arith.negf %226 : vector<8x128xf32>
    %228 = math.exp %227 : vector<8x128xf32>
    %cst_78 = arith.constant 1.000000e+00 : f32
    %229 = vector.broadcast %cst_78 : f32 to vector<8x128xf32>
    %230 = arith.addf %229, %228 : vector<8x128xf32>
    %231 = arith.divf %229, %230 : vector<8x128xf32>
    %232 = vector.extract_strided_slice %211 {offsets = [0, 256], sizes = [8, 128], strides = [1, 1]} : vector<8x384xf32> to vector<8x128xf32>
    %233 = vector.extract_strided_slice %215 {offsets = [0, 256], sizes = [8, 128], strides = [1, 1]} : vector<8x384xf32> to vector<8x128xf32>
    %234 = arith.mulf %223, %233 : vector<8x128xf32>
    %235 = arith.addf %232, %234 : vector<8x128xf32>
    %236 = math.tanh %235 : vector<8x128xf32>
    %237 = arith.subf %205, %236 : vector<8x128xf32>
    %238 = arith.mulf %231, %237 : vector<8x128xf32>
    %239 = arith.addf %236, %238 : vector<8x128xf32>
    %c5 = arith.constant 5 : index
    %c0_79 = arith.constant 0 : index
    %c384_80 = arith.constant 384 : index
    %240 = vector.load %arg16[%c5, %c0_79, %c384_80] : memref<8x8x768xf32, #tpu.memory_space<vmem>>, vector<1x8x384xf32>
    %241 = vector.shape_cast %240 : vector<1x8x384xf32> to vector<8x384xf32>
    %242 = arith.truncf %209 : vector<8x128xf32> to vector<8x128xbf16>
    %cst_81 = arith.constant dense<0.000000e+00> : vector<8x384xf32>
    %243 = tpu.matmul %242, %33, %cst_81 {dimension_numbers = #tpu.dot_dimension_numbers<[1], [0], [0], [1], [0, 0, 1, 1], [], []>} : vector<8x128xbf16>, vector<128x384xbf16>, vector<8x384xf32> -> vector<8x384xf32>
    %244 = vector.broadcast %35 : vector<1x384xf32> to vector<8x384xf32>
    %245 = arith.addf %243, %244 : vector<8x384xf32>
    %246 = vector.extract_strided_slice %241 {offsets = [0, 0], sizes = [8, 128], strides = [1, 1]} : vector<8x384xf32> to vector<8x128xf32>
    %247 = vector.extract_strided_slice %245 {offsets = [0, 0], sizes = [8, 128], strides = [1, 1]} : vector<8x384xf32> to vector<8x128xf32>
    %248 = arith.addf %246, %247 : vector<8x128xf32>
    %249 = arith.negf %248 : vector<8x128xf32>
    %250 = math.exp %249 : vector<8x128xf32>
    %cst_82 = arith.constant 1.000000e+00 : f32
    %251 = vector.broadcast %cst_82 : f32 to vector<8x128xf32>
    %252 = arith.addf %251, %250 : vector<8x128xf32>
    %253 = arith.divf %251, %252 : vector<8x128xf32>
    %254 = vector.extract_strided_slice %241 {offsets = [0, 128], sizes = [8, 128], strides = [1, 1]} : vector<8x384xf32> to vector<8x128xf32>
    %255 = vector.extract_strided_slice %245 {offsets = [0, 128], sizes = [8, 128], strides = [1, 1]} : vector<8x384xf32> to vector<8x128xf32>
    %256 = arith.addf %254, %255 : vector<8x128xf32>
    %257 = arith.negf %256 : vector<8x128xf32>
    %258 = math.exp %257 : vector<8x128xf32>
    %cst_83 = arith.constant 1.000000e+00 : f32
    %259 = vector.broadcast %cst_83 : f32 to vector<8x128xf32>
    %260 = arith.addf %259, %258 : vector<8x128xf32>
    %261 = arith.divf %259, %260 : vector<8x128xf32>
    %262 = vector.extract_strided_slice %241 {offsets = [0, 256], sizes = [8, 128], strides = [1, 1]} : vector<8x384xf32> to vector<8x128xf32>
    %263 = vector.extract_strided_slice %245 {offsets = [0, 256], sizes = [8, 128], strides = [1, 1]} : vector<8x384xf32> to vector<8x128xf32>
    %264 = arith.mulf %253, %263 : vector<8x128xf32>
    %265 = arith.addf %262, %264 : vector<8x128xf32>
    %266 = math.tanh %265 : vector<8x128xf32>
    %267 = arith.subf %209, %266 : vector<8x128xf32>
    %268 = arith.mulf %261, %267 : vector<8x128xf32>
    %269 = arith.addf %266, %268 : vector<8x128xf32>
    %cst_84 = arith.constant 2.000000e+00 : f32
    %270 = vector.broadcast %cst_84 : f32 to vector<8x1xf32>
    %271 = arith.cmpf ogt, %31, %270 : vector<8x1xf32>
    %272 = arith.extui %271 : vector<8x1xi1> to vector<8x1xi32>
    %273 = arith.sitofp %272 : vector<8x1xi32> to vector<8x1xf32>
    %cst_85 = arith.constant 5.000000e+00 : f32
    %274 = vector.broadcast %cst_85 : f32 to vector<8x1xf32>
    %275 = arith.cmpf ogt, %31, %274 : vector<8x1xf32>
    %276 = arith.extui %275 : vector<8x1xi1> to vector<8x1xi32>
    %277 = arith.sitofp %276 : vector<8x1xi32> to vector<8x1xf32>
    %278 = vector.broadcast %273 : vector<8x1xf32> to vector<8x128xf32>
    %279 = arith.mulf %278, %239 : vector<8x128xf32>
    %c2_86 = arith.constant 2 : index
    %c0_87 = arith.constant 0 : index
    %c0_88 = arith.constant 0 : index
    %280 = vector.load %arg14[%c2_86, %c0_87, %c0_88] : memref<8x8x128xf32, #tpu.memory_space<vmem>>, vector<1x8x128xf32>
    %281 = vector.shape_cast %280 : vector<1x8x128xf32> to vector<8x128xf32>
    %282 = vector.shape_cast %279 : vector<8x128xf32> to vector<1x8x128xf32>
    tpu.vector_store %arg14[%c2_86, %c0_87, %c0_88], %282 {strides = array<i32>} : memref<8x8x128xf32, #tpu.memory_space<vmem>>, vector<1x8x128xf32>,
    %283 = vector.broadcast %277 : vector<8x1xf32> to vector<8x128xf32>
    %284 = arith.mulf %283, %269 : vector<8x128xf32>
    %c5_89 = arith.constant 5 : index
    %c0_90 = arith.constant 0 : index
    %c0_91 = arith.constant 0 : index
    %285 = vector.load %arg17[%c5_89, %c0_90, %c0_91] : memref<8x8x128xf32, #tpu.memory_space<vmem>>, vector<1x8x128xf32>
    %286 = vector.shape_cast %285 : vector<1x8x128xf32> to vector<8x128xf32>
    %287 = vector.shape_cast %284 : vector<8x128xf32> to vector<1x8x128xf32>
    tpu.vector_store %arg17[%c5_89, %c0_90, %c0_91], %287 {strides = array<i32>} : memref<8x8x128xf32, #tpu.memory_space<vmem>>, vector<1x8x128xf32>,
    %288 = arith.subf %239, %205 : vector<8x128xf32>
    %289 = vector.broadcast %273 : vector<8x1xf32> to vector<8x128xf32>
    %290 = arith.mulf %289, %288 : vector<8x128xf32>
    %291 = arith.addf %205, %290 : vector<8x128xf32>
    %292 = arith.subf %269, %209 : vector<8x128xf32>
    %293 = vector.broadcast %277 : vector<8x1xf32> to vector<8x128xf32>
    %294 = arith.mulf %293, %292 : vector<8x128xf32>
    %295 = arith.addf %209, %294 : vector<8x128xf32>
    %c3 = arith.constant 3 : index
    %c0_92 = arith.constant 0 : index
    %c0_93 = arith.constant 0 : index
    %296 = vector.load %arg16[%c3, %c0_92, %c0_93] : memref<8x8x768xf32, #tpu.memory_space<vmem>>, vector<1x8x384xf32>
    %297 = vector.shape_cast %296 : vector<1x8x384xf32> to vector<8x384xf32>
    %298 = arith.truncf %291 : vector<8x128xf32> to vector<8x128xbf16>
    %cst_94 = arith.constant dense<0.000000e+00> : vector<8x384xf32>
    %299 = tpu.matmul %298, %32, %cst_94 {dimension_numbers = #tpu.dot_dimension_numbers<[1], [0], [0], [1], [0, 0, 1, 1], [], []>} : vector<8x128xbf16>, vector<128x384xbf16>, vector<8x384xf32> -> vector<8x384xf32>
    %300 = vector.broadcast %34 : vector<1x384xf32> to vector<8x384xf32>
    %301 = arith.addf %299, %300 : vector<8x384xf32>
    %302 = vector.extract_strided_slice %297 {offsets = [0, 0], sizes = [8, 128], strides = [1, 1]} : vector<8x384xf32> to vector<8x128xf32>
    %303 = vector.extract_strided_slice %301 {offsets = [0, 0], sizes = [8, 128], strides = [1, 1]} : vector<8x384xf32> to vector<8x128xf32>
    %304 = arith.addf %302, %303 : vector<8x128xf32>
    %305 = arith.negf %304 : vector<8x128xf32>
    %306 = math.exp %305 : vector<8x128xf32>
    %cst_95 = arith.constant 1.000000e+00 : f32
    %307 = vector.broadcast %cst_95 : f32 to vector<8x128xf32>
    %308 = arith.addf %307, %306 : vector<8x128xf32>
    %309 = arith.divf %307, %308 : vector<8x128xf32>
    %310 = vector.extract_strided_slice %297 {offsets = [0, 128], sizes = [8, 128], strides = [1, 1]} : vector<8x384xf32> to vector<8x128xf32>
    %311 = vector.extract_strided_slice %301 {offsets = [0, 128], sizes = [8, 128], strides = [1, 1]} : vector<8x384xf32> to vector<8x128xf32>
    %312 = arith.addf %310, %311 : vector<8x128xf32>
    %313 = arith.negf %312 : vector<8x128xf32>
    %314 = math.exp %313 : vector<8x128xf32>
    %cst_96 = arith.constant 1.000000e+00 : f32
    %315 = vector.broadcast %cst_96 : f32 to vector<8x128xf32>
    %316 = arith.addf %315, %314 : vector<8x128xf32>
    %317 = arith.divf %315, %316 : vector<8x128xf32>
    %318 = vector.extract_strided_slice %297 {offsets = [0, 256], sizes = [8, 128], strides = [1, 1]} : vector<8x384xf32> to vector<8x128xf32>
    %319 = vector.extract_strided_slice %301 {offsets = [0, 256], sizes = [8, 128], strides = [1, 1]} : vector<8x384xf32> to vector<8x128xf32>
    %320 = arith.mulf %309, %319 : vector<8x128xf32>
    %321 = arith.addf %318, %320 : vector<8x128xf32>
    %322 = math.tanh %321 : vector<8x128xf32>
    %323 = arith.subf %291, %322 : vector<8x128xf32>
    %324 = arith.mulf %317, %323 : vector<8x128xf32>
    %325 = arith.addf %322, %324 : vector<8x128xf32>
    %c4 = arith.constant 4 : index
    %c0_97 = arith.constant 0 : index
    %c384_98 = arith.constant 384 : index
    %326 = vector.load %arg16[%c4, %c0_97, %c384_98] : memref<8x8x768xf32, #tpu.memory_space<vmem>>, vector<1x8x384xf32>
    %327 = vector.shape_cast %326 : vector<1x8x384xf32> to vector<8x384xf32>
    %328 = arith.truncf %295 : vector<8x128xf32> to vector<8x128xbf16>
    %cst_99 = arith.constant dense<0.000000e+00> : vector<8x384xf32>
    %329 = tpu.matmul %328, %33, %cst_99 {dimension_numbers = #tpu.dot_dimension_numbers<[1], [0], [0], [1], [0, 0, 1, 1], [], []>} : vector<8x128xbf16>, vector<128x384xbf16>, vector<8x384xf32> -> vector<8x384xf32>
    %330 = vector.broadcast %35 : vector<1x384xf32> to vector<8x384xf32>
    %331 = arith.addf %329, %330 : vector<8x384xf32>
    %332 = vector.extract_strided_slice %327 {offsets = [0, 0], sizes = [8, 128], strides = [1, 1]} : vector<8x384xf32> to vector<8x128xf32>
    %333 = vector.extract_strided_slice %331 {offsets = [0, 0], sizes = [8, 128], strides = [1, 1]} : vector<8x384xf32> to vector<8x128xf32>
    %334 = arith.addf %332, %333 : vector<8x128xf32>
    %335 = arith.negf %334 : vector<8x128xf32>
    %336 = math.exp %335 : vector<8x128xf32>
    %cst_100 = arith.constant 1.000000e+00 : f32
    %337 = vector.broadcast %cst_100 : f32 to vector<8x128xf32>
    %338 = arith.addf %337, %336 : vector<8x128xf32>
    %339 = arith.divf %337, %338 : vector<8x128xf32>
    %340 = vector.extract_strided_slice %327 {offsets = [0, 128], sizes = [8, 128], strides = [1, 1]} : vector<8x384xf32> to vector<8x128xf32>
    %341 = vector.extract_strided_slice %331 {offsets = [0, 128], sizes = [8, 128], strides = [1, 1]} : vector<8x384xf32> to vector<8x128xf32>
    %342 = arith.addf %340, %341 : vector<8x128xf32>
    %343 = arith.negf %342 : vector<8x128xf32>
    %344 = math.exp %343 : vector<8x128xf32>
    %cst_101 = arith.constant 1.000000e+00 : f32
    %345 = vector.broadcast %cst_101 : f32 to vector<8x128xf32>
    %346 = arith.addf %345, %344 : vector<8x128xf32>
    %347 = arith.divf %345, %346 : vector<8x128xf32>
    %348 = vector.extract_strided_slice %327 {offsets = [0, 256], sizes = [8, 128], strides = [1, 1]} : vector<8x384xf32> to vector<8x128xf32>
    %349 = vector.extract_strided_slice %331 {offsets = [0, 256], sizes = [8, 128], strides = [1, 1]} : vector<8x384xf32> to vector<8x128xf32>
    %350 = arith.mulf %339, %349 : vector<8x128xf32>
    %351 = arith.addf %348, %350 : vector<8x128xf32>
    %352 = math.tanh %351 : vector<8x128xf32>
    %353 = arith.subf %295, %352 : vector<8x128xf32>
    %354 = arith.mulf %347, %353 : vector<8x128xf32>
    %355 = arith.addf %352, %354 : vector<8x128xf32>
    %cst_102 = arith.constant 3.000000e+00 : f32
    %356 = vector.broadcast %cst_102 : f32 to vector<8x1xf32>
    %357 = arith.cmpf ogt, %31, %356 : vector<8x1xf32>
    %358 = arith.extui %357 : vector<8x1xi1> to vector<8x1xi32>
    %359 = arith.sitofp %358 : vector<8x1xi32> to vector<8x1xf32>
    %cst_103 = arith.constant 4.000000e+00 : f32
    %360 = vector.broadcast %cst_103 : f32 to vector<8x1xf32>
    %361 = arith.cmpf ogt, %31, %360 : vector<8x1xf32>
    %362 = arith.extui %361 : vector<8x1xi1> to vector<8x1xi32>
    %363 = arith.sitofp %362 : vector<8x1xi32> to vector<8x1xf32>
    %364 = vector.broadcast %359 : vector<8x1xf32> to vector<8x128xf32>
    %365 = arith.mulf %364, %325 : vector<8x128xf32>
    %c3_104 = arith.constant 3 : index
    %c0_105 = arith.constant 0 : index
    %c0_106 = arith.constant 0 : index
    %366 = vector.load %arg14[%c3_104, %c0_105, %c0_106] : memref<8x8x128xf32, #tpu.memory_space<vmem>>, vector<1x8x128xf32>
    %367 = vector.shape_cast %366 : vector<1x8x128xf32> to vector<8x128xf32>
    %368 = vector.shape_cast %365 : vector<8x128xf32> to vector<1x8x128xf32>
    tpu.vector_store %arg14[%c3_104, %c0_105, %c0_106], %368 {strides = array<i32>} : memref<8x8x128xf32, #tpu.memory_space<vmem>>, vector<1x8x128xf32>,
    %369 = vector.broadcast %363 : vector<8x1xf32> to vector<8x128xf32>
    %370 = arith.mulf %369, %355 : vector<8x128xf32>
    %c4_107 = arith.constant 4 : index
    %c0_108 = arith.constant 0 : index
    %c0_109 = arith.constant 0 : index
    %371 = vector.load %arg17[%c4_107, %c0_108, %c0_109] : memref<8x8x128xf32, #tpu.memory_space<vmem>>, vector<1x8x128xf32>
    %372 = vector.shape_cast %371 : vector<1x8x128xf32> to vector<8x128xf32>
    %373 = vector.shape_cast %370 : vector<8x128xf32> to vector<1x8x128xf32>
    tpu.vector_store %arg17[%c4_107, %c0_108, %c0_109], %373 {strides = array<i32>} : memref<8x8x128xf32, #tpu.memory_space<vmem>>, vector<1x8x128xf32>,
    %374 = arith.subf %325, %291 : vector<8x128xf32>
    %375 = vector.broadcast %359 : vector<8x1xf32> to vector<8x128xf32>
    %376 = arith.mulf %375, %374 : vector<8x128xf32>
    %377 = arith.addf %291, %376 : vector<8x128xf32>
    %378 = arith.subf %355, %295 : vector<8x128xf32>
    %379 = vector.broadcast %363 : vector<8x1xf32> to vector<8x128xf32>
    %380 = arith.mulf %379, %378 : vector<8x128xf32>
    %381 = arith.addf %295, %380 : vector<8x128xf32>
    %c4_110 = arith.constant 4 : index
    %c0_111 = arith.constant 0 : index
    %c0_112 = arith.constant 0 : index
    %382 = vector.load %arg16[%c4_110, %c0_111, %c0_112] : memref<8x8x768xf32, #tpu.memory_space<vmem>>, vector<1x8x384xf32>
    %383 = vector.shape_cast %382 : vector<1x8x384xf32> to vector<8x384xf32>
    %384 = arith.truncf %377 : vector<8x128xf32> to vector<8x128xbf16>
    %cst_113 = arith.constant dense<0.000000e+00> : vector<8x384xf32>
    %385 = tpu.matmul %384, %32, %cst_113 {dimension_numbers = #tpu.dot_dimension_numbers<[1], [0], [0], [1], [0, 0, 1, 1], [], []>} : vector<8x128xbf16>, vector<128x384xbf16>, vector<8x384xf32> -> vector<8x384xf32>
    %386 = vector.broadcast %34 : vector<1x384xf32> to vector<8x384xf32>
    %387 = arith.addf %385, %386 : vector<8x384xf32>
    %388 = vector.extract_strided_slice %383 {offsets = [0, 0], sizes = [8, 128], strides = [1, 1]} : vector<8x384xf32> to vector<8x128xf32>
    %389 = vector.extract_strided_slice %387 {offsets = [0, 0], sizes = [8, 128], strides = [1, 1]} : vector<8x384xf32> to vector<8x128xf32>
    %390 = arith.addf %388, %389 : vector<8x128xf32>
    %391 = arith.negf %390 : vector<8x128xf32>
    %392 = math.exp %391 : vector<8x128xf32>
    %cst_114 = arith.constant 1.000000e+00 : f32
    %393 = vector.broadcast %cst_114 : f32 to vector<8x128xf32>
    %394 = arith.addf %393, %392 : vector<8x128xf32>
    %395 = arith.divf %393, %394 : vector<8x128xf32>
    %396 = vector.extract_strided_slice %383 {offsets = [0, 128], sizes = [8, 128], strides = [1, 1]} : vector<8x384xf32> to vector<8x128xf32>
    %397 = vector.extract_strided_slice %387 {offsets = [0, 128], sizes = [8, 128], strides = [1, 1]} : vector<8x384xf32> to vector<8x128xf32>
    %398 = arith.addf %396, %397 : vector<8x128xf32>
    %399 = arith.negf %398 : vector<8x128xf32>
    %400 = math.exp %399 : vector<8x128xf32>
    %cst_115 = arith.constant 1.000000e+00 : f32
    %401 = vector.broadcast %cst_115 : f32 to vector<8x128xf32>
    %402 = arith.addf %401, %400 : vector<8x128xf32>
    %403 = arith.divf %401, %402 : vector<8x128xf32>
    %404 = vector.extract_strided_slice %383 {offsets = [0, 256], sizes = [8, 128], strides = [1, 1]} : vector<8x384xf32> to vector<8x128xf32>
    %405 = vector.extract_strided_slice %387 {offsets = [0, 256], sizes = [8, 128], strides = [1, 1]} : vector<8x384xf32> to vector<8x128xf32>
    %406 = arith.mulf %395, %405 : vector<8x128xf32>
    %407 = arith.addf %404, %406 : vector<8x128xf32>
    %408 = math.tanh %407 : vector<8x128xf32>
    %409 = arith.subf %377, %408 : vector<8x128xf32>
    %410 = arith.mulf %403, %409 : vector<8x128xf32>
    %411 = arith.addf %408, %410 : vector<8x128xf32>
    %c3_116 = arith.constant 3 : index
    %c0_117 = arith.constant 0 : index
    %c384_118 = arith.constant 384 : index
    %412 = vector.load %arg16[%c3_116, %c0_117, %c384_118] : memref<8x8x768xf32, #tpu.memory_space<vmem>>, vector<1x8x384xf32>
    %413 = vector.shape_cast %412 : vector<1x8x384xf32> to vector<8x384xf32>
    %414 = arith.truncf %381 : vector<8x128xf32> to vector<8x128xbf16>
    %cst_119 = arith.constant dense<0.000000e+00> : vector<8x384xf32>
    %415 = tpu.matmul %414, %33, %cst_119 {dimension_numbers = #tpu.dot_dimension_numbers<[1], [0], [0], [1], [0, 0, 1, 1], [], []>} : vector<8x128xbf16>, vector<128x384xbf16>, vector<8x384xf32> -> vector<8x384xf32>
    %416 = vector.broadcast %35 : vector<1x384xf32> to vector<8x384xf32>
    %417 = arith.addf %415, %416 : vector<8x384xf32>
    %418 = vector.extract_strided_slice %413 {offsets = [0, 0], sizes = [8, 128], strides = [1, 1]} : vector<8x384xf32> to vector<8x128xf32>
    %419 = vector.extract_strided_slice %417 {offsets = [0, 0], sizes = [8, 128], strides = [1, 1]} : vector<8x384xf32> to vector<8x128xf32>
    %420 = arith.addf %418, %419 : vector<8x128xf32>
    %421 = arith.negf %420 : vector<8x128xf32>
    %422 = math.exp %421 : vector<8x128xf32>
    %cst_120 = arith.constant 1.000000e+00 : f32
    %423 = vector.broadcast %cst_120 : f32 to vector<8x128xf32>
    %424 = arith.addf %423, %422 : vector<8x128xf32>
    %425 = arith.divf %423, %424 : vector<8x128xf32>
    %426 = vector.extract_strided_slice %413 {offsets = [0, 128], sizes = [8, 128], strides = [1, 1]} : vector<8x384xf32> to vector<8x128xf32>
    %427 = vector.extract_strided_slice %417 {offsets = [0, 128], sizes = [8, 128], strides = [1, 1]} : vector<8x384xf32> to vector<8x128xf32>
    %428 = arith.addf %426, %427 : vector<8x128xf32>
    %429 = arith.negf %428 : vector<8x128xf32>
    %430 = math.exp %429 : vector<8x128xf32>
    %cst_121 = arith.constant 1.000000e+00 : f32
    %431 = vector.broadcast %cst_121 : f32 to vector<8x128xf32>
    %432 = arith.addf %431, %430 : vector<8x128xf32>
    %433 = arith.divf %431, %432 : vector<8x128xf32>
    %434 = vector.extract_strided_slice %413 {offsets = [0, 256], sizes = [8, 128], strides = [1, 1]} : vector<8x384xf32> to vector<8x128xf32>
    %435 = vector.extract_strided_slice %417 {offsets = [0, 256], sizes = [8, 128], strides = [1, 1]} : vector<8x384xf32> to vector<8x128xf32>
    %436 = arith.mulf %425, %435 : vector<8x128xf32>
    %437 = arith.addf %434, %436 : vector<8x128xf32>
    %438 = math.tanh %437 : vector<8x128xf32>
    %439 = arith.subf %381, %438 : vector<8x128xf32>
    %440 = arith.mulf %433, %439 : vector<8x128xf32>
    %441 = arith.addf %438, %440 : vector<8x128xf32>
    %cst_122 = arith.constant 4.000000e+00 : f32
    %442 = vector.broadcast %cst_122 : f32 to vector<8x1xf32>
    %443 = arith.cmpf ogt, %31, %442 : vector<8x1xf32>
    %444 = arith.extui %443 : vector<8x1xi1> to vector<8x1xi32>
    %445 = arith.sitofp %444 : vector<8x1xi32> to vector<8x1xf32>
    %cst_123 = arith.constant 3.000000e+00 : f32
    %446 = vector.broadcast %cst_123 : f32 to vector<8x1xf32>
    %447 = arith.cmpf ogt, %31, %446 : vector<8x1xf32>
    %448 = arith.extui %447 : vector<8x1xi1> to vector<8x1xi32>
    %449 = arith.sitofp %448 : vector<8x1xi32> to vector<8x1xf32>
    %450 = vector.broadcast %445 : vector<8x1xf32> to vector<8x128xf32>
    %451 = arith.mulf %450, %411 : vector<8x128xf32>
    %c4_124 = arith.constant 4 : index
    %c0_125 = arith.constant 0 : index
    %c0_126 = arith.constant 0 : index
    %452 = vector.load %arg14[%c4_124, %c0_125, %c0_126] : memref<8x8x128xf32, #tpu.memory_space<vmem>>, vector<1x8x128xf32>
    %453 = vector.shape_cast %452 : vector<1x8x128xf32> to vector<8x128xf32>
    %454 = vector.shape_cast %451 : vector<8x128xf32> to vector<1x8x128xf32>
    tpu.vector_store %arg14[%c4_124, %c0_125, %c0_126], %454 {strides = array<i32>} : memref<8x8x128xf32, #tpu.memory_space<vmem>>, vector<1x8x128xf32>,
    %455 = vector.broadcast %449 : vector<8x1xf32> to vector<8x128xf32>
    %456 = arith.mulf %455, %441 : vector<8x128xf32>
    %c3_127 = arith.constant 3 : index
    %c0_128 = arith.constant 0 : index
    %c0_129 = arith.constant 0 : index
    %457 = vector.load %arg17[%c3_127, %c0_128, %c0_129] : memref<8x8x128xf32, #tpu.memory_space<vmem>>, vector<1x8x128xf32>
    %458 = vector.shape_cast %457 : vector<1x8x128xf32> to vector<8x128xf32>
    %459 = vector.shape_cast %456 : vector<8x128xf32> to vector<1x8x128xf32>
    tpu.vector_store %arg17[%c3_127, %c0_128, %c0_129], %459 {strides = array<i32>} : memref<8x8x128xf32, #tpu.memory_space<vmem>>, vector<1x8x128xf32>,
    %460 = arith.subf %411, %377 : vector<8x128xf32>
    %461 = vector.broadcast %445 : vector<8x1xf32> to vector<8x128xf32>
    %462 = arith.mulf %461, %460 : vector<8x128xf32>
    %463 = arith.addf %377, %462 : vector<8x128xf32>
    %464 = arith.subf %441, %381 : vector<8x128xf32>
    %465 = vector.broadcast %449 : vector<8x1xf32> to vector<8x128xf32>
    %466 = arith.mulf %465, %464 : vector<8x128xf32>
    %467 = arith.addf %381, %466 : vector<8x128xf32>
    %c5_130 = arith.constant 5 : index
    %c0_131 = arith.constant 0 : index
    %c0_132 = arith.constant 0 : index
    %468 = vector.load %arg16[%c5_130, %c0_131, %c0_132] : memref<8x8x768xf32, #tpu.memory_space<vmem>>, vector<1x8x384xf32>
    %469 = vector.shape_cast %468 : vector<1x8x384xf32> to vector<8x384xf32>
    %470 = arith.truncf %463 : vector<8x128xf32> to vector<8x128xbf16>
    %cst_133 = arith.constant dense<0.000000e+00> : vector<8x384xf32>
    %471 = tpu.matmul %470, %32, %cst_133 {dimension_numbers = #tpu.dot_dimension_numbers<[1], [0], [0], [1], [0, 0, 1, 1], [], []>} : vector<8x128xbf16>, vector<128x384xbf16>, vector<8x384xf32> -> vector<8x384xf32>
    %472 = vector.broadcast %34 : vector<1x384xf32> to vector<8x384xf32>
    %473 = arith.addf %471, %472 : vector<8x384xf32>
    %474 = vector.extract_strided_slice %469 {offsets = [0, 0], sizes = [8, 128], strides = [1, 1]} : vector<8x384xf32> to vector<8x128xf32>
    %475 = vector.extract_strided_slice %473 {offsets = [0, 0], sizes = [8, 128], strides = [1, 1]} : vector<8x384xf32> to vector<8x128xf32>
    %476 = arith.addf %474, %475 : vector<8x128xf32>
    %477 = arith.negf %476 : vector<8x128xf32>
    %478 = math.exp %477 : vector<8x128xf32>
    %cst_134 = arith.constant 1.000000e+00 : f32
    %479 = vector.broadcast %cst_134 : f32 to vector<8x128xf32>
    %480 = arith.addf %479, %478 : vector<8x128xf32>
    %481 = arith.divf %479, %480 : vector<8x128xf32>
    %482 = vector.extract_strided_slice %469 {offsets = [0, 128], sizes = [8, 128], strides = [1, 1]} : vector<8x384xf32> to vector<8x128xf32>
    %483 = vector.extract_strided_slice %473 {offsets = [0, 128], sizes = [8, 128], strides = [1, 1]} : vector<8x384xf32> to vector<8x128xf32>
    %484 = arith.addf %482, %483 : vector<8x128xf32>
    %485 = arith.negf %484 : vector<8x128xf32>
    %486 = math.exp %485 : vector<8x128xf32>
    %cst_135 = arith.constant 1.000000e+00 : f32
    %487 = vector.broadcast %cst_135 : f32 to vector<8x128xf32>
    %488 = arith.addf %487, %486 : vector<8x128xf32>
    %489 = arith.divf %487, %488 : vector<8x128xf32>
    %490 = vector.extract_strided_slice %469 {offsets = [0, 256], sizes = [8, 128], strides = [1, 1]} : vector<8x384xf32> to vector<8x128xf32>
    %491 = vector.extract_strided_slice %473 {offsets = [0, 256], sizes = [8, 128], strides = [1, 1]} : vector<8x384xf32> to vector<8x128xf32>
    %492 = arith.mulf %481, %491 : vector<8x128xf32>
    %493 = arith.addf %490, %492 : vector<8x128xf32>
    %494 = math.tanh %493 : vector<8x128xf32>
    %495 = arith.subf %463, %494 : vector<8x128xf32>
    %496 = arith.mulf %489, %495 : vector<8x128xf32>
    %497 = arith.addf %494, %496 : vector<8x128xf32>
    %c2_136 = arith.constant 2 : index
    %c0_137 = arith.constant 0 : index
    %c384_138 = arith.constant 384 : index
    %498 = vector.load %arg16[%c2_136, %c0_137, %c384_138] : memref<8x8x768xf32, #tpu.memory_space<vmem>>, vector<1x8x384xf32>
    %499 = vector.shape_cast %498 : vector<1x8x384xf32> to vector<8x384xf32>
    %500 = arith.truncf %467 : vector<8x128xf32> to vector<8x128xbf16>
    %cst_139 = arith.constant dense<0.000000e+00> : vector<8x384xf32>
    %501 = tpu.matmul %500, %33, %cst_139 {dimension_numbers = #tpu.dot_dimension_numbers<[1], [0], [0], [1], [0, 0, 1, 1], [], []>} : vector<8x128xbf16>, vector<128x384xbf16>, vector<8x384xf32> -> vector<8x384xf32>
    %502 = vector.broadcast %35 : vector<1x384xf32> to vector<8x384xf32>
    %503 = arith.addf %501, %502 : vector<8x384xf32>
    %504 = vector.extract_strided_slice %499 {offsets = [0, 0], sizes = [8, 128], strides = [1, 1]} : vector<8x384xf32> to vector<8x128xf32>
    %505 = vector.extract_strided_slice %503 {offsets = [0, 0], sizes = [8, 128], strides = [1, 1]} : vector<8x384xf32> to vector<8x128xf32>
    %506 = arith.addf %504, %505 : vector<8x128xf32>
    %507 = arith.negf %506 : vector<8x128xf32>
    %508 = math.exp %507 : vector<8x128xf32>
    %cst_140 = arith.constant 1.000000e+00 : f32
    %509 = vector.broadcast %cst_140 : f32 to vector<8x128xf32>
    %510 = arith.addf %509, %508 : vector<8x128xf32>
    %511 = arith.divf %509, %510 : vector<8x128xf32>
    %512 = vector.extract_strided_slice %499 {offsets = [0, 128], sizes = [8, 128], strides = [1, 1]} : vector<8x384xf32> to vector<8x128xf32>
    %513 = vector.extract_strided_slice %503 {offsets = [0, 128], sizes = [8, 128], strides = [1, 1]} : vector<8x384xf32> to vector<8x128xf32>
    %514 = arith.addf %512, %513 : vector<8x128xf32>
    %515 = arith.negf %514 : vector<8x128xf32>
    %516 = math.exp %515 : vector<8x128xf32>
    %cst_141 = arith.constant 1.000000e+00 : f32
    %517 = vector.broadcast %cst_141 : f32 to vector<8x128xf32>
    %518 = arith.addf %517, %516 : vector<8x128xf32>
    %519 = arith.divf %517, %518 : vector<8x128xf32>
    %520 = vector.extract_strided_slice %499 {offsets = [0, 256], sizes = [8, 128], strides = [1, 1]} : vector<8x384xf32> to vector<8x128xf32>
    %521 = vector.extract_strided_slice %503 {offsets = [0, 256], sizes = [8, 128], strides = [1, 1]} : vector<8x384xf32> to vector<8x128xf32>
    %522 = arith.mulf %511, %521 : vector<8x128xf32>
    %523 = arith.addf %520, %522 : vector<8x128xf32>
    %524 = math.tanh %523 : vector<8x128xf32>
    %525 = arith.subf %467, %524 : vector<8x128xf32>
    %526 = arith.mulf %519, %525 : vector<8x128xf32>
    %527 = arith.addf %524, %526 : vector<8x128xf32>
    %cst_142 = arith.constant 5.000000e+00 : f32
    %528 = vector.broadcast %cst_142 : f32 to vector<8x1xf32>
    %529 = arith.cmpf ogt, %31, %528 : vector<8x1xf32>
    %530 = arith.extui %529 : vector<8x1xi1> to vector<8x1xi32>
    %531 = arith.sitofp %530 : vector<8x1xi32> to vector<8x1xf32>
    %cst_143 = arith.constant 2.000000e+00 : f32
    %532 = vector.broadcast %cst_143 : f32 to vector<8x1xf32>
    %533 = arith.cmpf ogt, %31, %532 : vector<8x1xf32>
    %534 = arith.extui %533 : vector<8x1xi1> to vector<8x1xi32>
    %535 = arith.sitofp %534 : vector<8x1xi32> to vector<8x1xf32>
    %536 = vector.broadcast %531 : vector<8x1xf32> to vector<8x128xf32>
    %537 = arith.mulf %536, %497 : vector<8x128xf32>
    %c5_144 = arith.constant 5 : index
    %c0_145 = arith.constant 0 : index
    %c0_146 = arith.constant 0 : index
    %538 = vector.load %arg14[%c5_144, %c0_145, %c0_146] : memref<8x8x128xf32, #tpu.memory_space<vmem>>, vector<1x8x128xf32>
    %539 = vector.shape_cast %538 : vector<1x8x128xf32> to vector<8x128xf32>
    %540 = vector.shape_cast %537 : vector<8x128xf32> to vector<1x8x128xf32>
    tpu.vector_store %arg14[%c5_144, %c0_145, %c0_146], %540 {strides = array<i32>} : memref<8x8x128xf32, #tpu.memory_space<vmem>>, vector<1x8x128xf32>,
    %541 = vector.broadcast %535 : vector<8x1xf32> to vector<8x128xf32>
    %542 = arith.mulf %541, %527 : vector<8x128xf32>
    %c2_147 = arith.constant 2 : index
    %c0_148 = arith.constant 0 : index
    %c0_149 = arith.constant 0 : index
    %543 = vector.load %arg17[%c2_147, %c0_148, %c0_149] : memref<8x8x128xf32, #tpu.memory_space<vmem>>, vector<1x8x128xf32>
    %544 = vector.shape_cast %543 : vector<1x8x128xf32> to vector<8x128xf32>
    %545 = vector.shape_cast %542 : vector<8x128xf32> to vector<1x8x128xf32>
    tpu.vector_store %arg17[%c2_147, %c0_148, %c0_149], %545 {strides = array<i32>} : memref<8x8x128xf32, #tpu.memory_space<vmem>>, vector<1x8x128xf32>,
    %546 = arith.subf %497, %463 : vector<8x128xf32>
    %547 = vector.broadcast %531 : vector<8x1xf32> to vector<8x128xf32>
    %548 = arith.mulf %547, %546 : vector<8x128xf32>
    %549 = arith.addf %463, %548 : vector<8x128xf32>
    %550 = arith.subf %527, %467 : vector<8x128xf32>
    %551 = vector.broadcast %535 : vector<8x1xf32> to vector<8x128xf32>
    %552 = arith.mulf %551, %550 : vector<8x128xf32>
    %553 = arith.addf %467, %552 : vector<8x128xf32>
    %c6_150 = arith.constant 6 : index
    %c0_151 = arith.constant 0 : index
    %c0_152 = arith.constant 0 : index
    %554 = vector.load %arg16[%c6_150, %c0_151, %c0_152] : memref<8x8x768xf32, #tpu.memory_space<vmem>>, vector<1x8x384xf32>
    %555 = vector.shape_cast %554 : vector<1x8x384xf32> to vector<8x384xf32>
    %556 = arith.truncf %549 : vector<8x128xf32> to vector<8x128xbf16>
    %cst_153 = arith.constant dense<0.000000e+00> : vector<8x384xf32>
    %557 = tpu.matmul %556, %32, %cst_153 {dimension_numbers = #tpu.dot_dimension_numbers<[1], [0], [0], [1], [0, 0, 1, 1], [], []>} : vector<8x128xbf16>, vector<128x384xbf16>, vector<8x384xf32> -> vector<8x384xf32>
    %558 = vector.broadcast %34 : vector<1x384xf32> to vector<8x384xf32>
    %559 = arith.addf %557, %558 : vector<8x384xf32>
    %560 = vector.extract_strided_slice %555 {offsets = [0, 0], sizes = [8, 128], strides = [1, 1]} : vector<8x384xf32> to vector<8x128xf32>
    %561 = vector.extract_strided_slice %559 {offsets = [0, 0], sizes = [8, 128], strides = [1, 1]} : vector<8x384xf32> to vector<8x128xf32>
    %562 = arith.addf %560, %561 : vector<8x128xf32>
    %563 = arith.negf %562 : vector<8x128xf32>
    %564 = math.exp %563 : vector<8x128xf32>
    %cst_154 = arith.constant 1.000000e+00 : f32
    %565 = vector.broadcast %cst_154 : f32 to vector<8x128xf32>
    %566 = arith.addf %565, %564 : vector<8x128xf32>
    %567 = arith.divf %565, %566 : vector<8x128xf32>
    %568 = vector.extract_strided_slice %555 {offsets = [0, 128], sizes = [8, 128], strides = [1, 1]} : vector<8x384xf32> to vector<8x128xf32>
    %569 = vector.extract_strided_slice %559 {offsets = [0, 128], sizes = [8, 128], strides = [1, 1]} : vector<8x384xf32> to vector<8x128xf32>
    %570 = arith.addf %568, %569 : vector<8x128xf32>
    %571 = arith.negf %570 : vector<8x128xf32>
    %572 = math.exp %571 : vector<8x128xf32>
    %cst_155 = arith.constant 1.000000e+00 : f32
    %573 = vector.broadcast %cst_155 : f32 to vector<8x128xf32>
    %574 = arith.addf %573, %572 : vector<8x128xf32>
    %575 = arith.divf %573, %574 : vector<8x128xf32>
    %576 = vector.extract_strided_slice %555 {offsets = [0, 256], sizes = [8, 128], strides = [1, 1]} : vector<8x384xf32> to vector<8x128xf32>
    %577 = vector.extract_strided_slice %559 {offsets = [0, 256], sizes = [8, 128], strides = [1, 1]} : vector<8x384xf32> to vector<8x128xf32>
    %578 = arith.mulf %567, %577 : vector<8x128xf32>
    %579 = arith.addf %576, %578 : vector<8x128xf32>
    %580 = math.tanh %579 : vector<8x128xf32>
    %581 = arith.subf %549, %580 : vector<8x128xf32>
    %582 = arith.mulf %575, %581 : vector<8x128xf32>
    %583 = arith.addf %580, %582 : vector<8x128xf32>
    %c1_156 = arith.constant 1 : index
    %c0_157 = arith.constant 0 : index
    %c384_158 = arith.constant 384 : index
    %584 = vector.load %arg16[%c1_156, %c0_157, %c384_158] : memref<8x8x768xf32, #tpu.memory_space<vmem>>, vector<1x8x384xf32>
    %585 = vector.shape_cast %584 : vector<1x8x384xf32> to vector<8x384xf32>
    %586 = arith.truncf %553 : vector<8x128xf32> to vector<8x128xbf16>
    %cst_159 = arith.constant dense<0.000000e+00> : vector<8x384xf32>
    %587 = tpu.matmul %586, %33, %cst_159 {dimension_numbers = #tpu.dot_dimension_numbers<[1], [0], [0], [1], [0, 0, 1, 1], [], []>} : vector<8x128xbf16>, vector<128x384xbf16>, vector<8x384xf32> -> vector<8x384xf32>
    %588 = vector.broadcast %35 : vector<1x384xf32> to vector<8x384xf32>
    %589 = arith.addf %587, %588 : vector<8x384xf32>
    %590 = vector.extract_strided_slice %585 {offsets = [0, 0], sizes = [8, 128], strides = [1, 1]} : vector<8x384xf32> to vector<8x128xf32>
    %591 = vector.extract_strided_slice %589 {offsets = [0, 0], sizes = [8, 128], strides = [1, 1]} : vector<8x384xf32> to vector<8x128xf32>
    %592 = arith.addf %590, %591 : vector<8x128xf32>
    %593 = arith.negf %592 : vector<8x128xf32>
    %594 = math.exp %593 : vector<8x128xf32>
    %cst_160 = arith.constant 1.000000e+00 : f32
    %595 = vector.broadcast %cst_160 : f32 to vector<8x128xf32>
    %596 = arith.addf %595, %594 : vector<8x128xf32>
    %597 = arith.divf %595, %596 : vector<8x128xf32>
    %598 = vector.extract_strided_slice %585 {offsets = [0, 128], sizes = [8, 128], strides = [1, 1]} : vector<8x384xf32> to vector<8x128xf32>
    %599 = vector.extract_strided_slice %589 {offsets = [0, 128], sizes = [8, 128], strides = [1, 1]} : vector<8x384xf32> to vector<8x128xf32>
    %600 = arith.addf %598, %599 : vector<8x128xf32>
    %601 = arith.negf %600 : vector<8x128xf32>
    %602 = math.exp %601 : vector<8x128xf32>
    %cst_161 = arith.constant 1.000000e+00 : f32
    %603 = vector.broadcast %cst_161 : f32 to vector<8x128xf32>
    %604 = arith.addf %603, %602 : vector<8x128xf32>
    %605 = arith.divf %603, %604 : vector<8x128xf32>
    %606 = vector.extract_strided_slice %585 {offsets = [0, 256], sizes = [8, 128], strides = [1, 1]} : vector<8x384xf32> to vector<8x128xf32>
    %607 = vector.extract_strided_slice %589 {offsets = [0, 256], sizes = [8, 128], strides = [1, 1]} : vector<8x384xf32> to vector<8x128xf32>
    %608 = arith.mulf %597, %607 : vector<8x128xf32>
    %609 = arith.addf %606, %608 : vector<8x128xf32>
    %610 = math.tanh %609 : vector<8x128xf32>
    %611 = arith.subf %553, %610 : vector<8x128xf32>
    %612 = arith.mulf %605, %611 : vector<8x128xf32>
    %613 = arith.addf %610, %612 : vector<8x128xf32>
    %cst_162 = arith.constant 6.000000e+00 : f32
    %614 = vector.broadcast %cst_162 : f32 to vector<8x1xf32>
    %615 = arith.cmpf ogt, %31, %614 : vector<8x1xf32>
    %616 = arith.extui %615 : vector<8x1xi1> to vector<8x1xi32>
    %617 = arith.sitofp %616 : vector<8x1xi32> to vector<8x1xf32>
    %cst_163 = arith.constant 1.000000e+00 : f32
    %618 = vector.broadcast %cst_163 : f32 to vector<8x1xf32>
    %619 = arith.cmpf ogt, %31, %618 : vector<8x1xf32>
    %620 = arith.extui %619 : vector<8x1xi1> to vector<8x1xi32>
    %621 = arith.sitofp %620 : vector<8x1xi32> to vector<8x1xf32>
    %622 = vector.broadcast %617 : vector<8x1xf32> to vector<8x128xf32>
    %623 = arith.mulf %622, %583 : vector<8x128xf32>
    %c6_164 = arith.constant 6 : index
    %c0_165 = arith.constant 0 : index
    %c0_166 = arith.constant 0 : index
    %624 = vector.load %arg14[%c6_164, %c0_165, %c0_166] : memref<8x8x128xf32, #tpu.memory_space<vmem>>, vector<1x8x128xf32>
    %625 = vector.shape_cast %624 : vector<1x8x128xf32> to vector<8x128xf32>
    %626 = vector.shape_cast %623 : vector<8x128xf32> to vector<1x8x128xf32>
    tpu.vector_store %arg14[%c6_164, %c0_165, %c0_166], %626 {strides = array<i32>} : memref<8x8x128xf32, #tpu.memory_space<vmem>>, vector<1x8x128xf32>,
    %627 = vector.broadcast %621 : vector<8x1xf32> to vector<8x128xf32>
    %628 = arith.mulf %627, %613 : vector<8x128xf32>
    %c1_167 = arith.constant 1 : index
    %c0_168 = arith.constant 0 : index
    %c0_169 = arith.constant 0 : index
    %629 = vector.load %arg17[%c1_167, %c0_168, %c0_169] : memref<8x8x128xf32, #tpu.memory_space<vmem>>, vector<1x8x128xf32>
    %630 = vector.shape_cast %629 : vector<1x8x128xf32> to vector<8x128xf32>
    %631 = vector.shape_cast %628 : vector<8x128xf32> to vector<1x8x128xf32>
    tpu.vector_store %arg17[%c1_167, %c0_168, %c0_169], %631 {strides = array<i32>} : memref<8x8x128xf32, #tpu.memory_space<vmem>>, vector<1x8x128xf32>,
    %632 = arith.subf %583, %549 : vector<8x128xf32>
    %633 = vector.broadcast %617 : vector<8x1xf32> to vector<8x128xf32>
    %634 = arith.mulf %633, %632 : vector<8x128xf32>
    %635 = arith.addf %549, %634 : vector<8x128xf32>
    %636 = arith.subf %613, %553 : vector<8x128xf32>
    %637 = vector.broadcast %621 : vector<8x1xf32> to vector<8x128xf32>
    %638 = arith.mulf %637, %636 : vector<8x128xf32>
    %639 = arith.addf %553, %638 : vector<8x128xf32>
    %c7_170 = arith.constant 7 : index
    %c0_171 = arith.constant 0 : index
    %c0_172 = arith.constant 0 : index
    %640 = vector.load %arg16[%c7_170, %c0_171, %c0_172] : memref<8x8x768xf32, #tpu.memory_space<vmem>>, vector<1x8x384xf32>
    %641 = vector.shape_cast %640 : vector<1x8x384xf32> to vector<8x384xf32>
    %642 = arith.truncf %635 : vector<8x128xf32> to vector<8x128xbf16>
    %cst_173 = arith.constant dense<0.000000e+00> : vector<8x384xf32>
    %643 = tpu.matmul %642, %32, %cst_173 {dimension_numbers = #tpu.dot_dimension_numbers<[1], [0], [0], [1], [0, 0, 1, 1], [], []>} : vector<8x128xbf16>, vector<128x384xbf16>, vector<8x384xf32> -> vector<8x384xf32>
    %644 = vector.broadcast %34 : vector<1x384xf32> to vector<8x384xf32>
    %645 = arith.addf %643, %644 : vector<8x384xf32>
    %646 = vector.extract_strided_slice %641 {offsets = [0, 0], sizes = [8, 128], strides = [1, 1]} : vector<8x384xf32> to vector<8x128xf32>
    %647 = vector.extract_strided_slice %645 {offsets = [0, 0], sizes = [8, 128], strides = [1, 1]} : vector<8x384xf32> to vector<8x128xf32>
    %648 = arith.addf %646, %647 : vector<8x128xf32>
    %649 = arith.negf %648 : vector<8x128xf32>
    %650 = math.exp %649 : vector<8x128xf32>
    %cst_174 = arith.constant 1.000000e+00 : f32
    %651 = vector.broadcast %cst_174 : f32 to vector<8x128xf32>
    %652 = arith.addf %651, %650 : vector<8x128xf32>
    %653 = arith.divf %651, %652 : vector<8x128xf32>
    %654 = vector.extract_strided_slice %641 {offsets = [0, 128], sizes = [8, 128], strides = [1, 1]} : vector<8x384xf32> to vector<8x128xf32>
    %655 = vector.extract_strided_slice %645 {offsets = [0, 128], sizes = [8, 128], strides = [1, 1]} : vector<8x384xf32> to vector<8x128xf32>
    %656 = arith.addf %654, %655 : vector<8x128xf32>
    %657 = arith.negf %656 : vector<8x128xf32>
    %658 = math.exp %657 : vector<8x128xf32>
    %cst_175 = arith.constant 1.000000e+00 : f32
    %659 = vector.broadcast %cst_175 : f32 to vector<8x128xf32>
    %660 = arith.addf %659, %658 : vector<8x128xf32>
    %661 = arith.divf %659, %660 : vector<8x128xf32>
    %662 = vector.extract_strided_slice %641 {offsets = [0, 256], sizes = [8, 128], strides = [1, 1]} : vector<8x384xf32> to vector<8x128xf32>
    %663 = vector.extract_strided_slice %645 {offsets = [0, 256], sizes = [8, 128], strides = [1, 1]} : vector<8x384xf32> to vector<8x128xf32>
    %664 = arith.mulf %653, %663 : vector<8x128xf32>
    %665 = arith.addf %662, %664 : vector<8x128xf32>
    %666 = math.tanh %665 : vector<8x128xf32>
    %667 = arith.subf %635, %666 : vector<8x128xf32>
    %668 = arith.mulf %661, %667 : vector<8x128xf32>
    %669 = arith.addf %666, %668 : vector<8x128xf32>
    %c0_176 = arith.constant 0 : index
    %c0_177 = arith.constant 0 : index
    %c384_178 = arith.constant 384 : index
    %670 = vector.load %arg16[%c0_176, %c0_177, %c384_178] : memref<8x8x768xf32, #tpu.memory_space<vmem>>, vector<1x8x384xf32>
    %671 = vector.shape_cast %670 : vector<1x8x384xf32> to vector<8x384xf32>
    %672 = arith.truncf %639 : vector<8x128xf32> to vector<8x128xbf16>
    %cst_179 = arith.constant dense<0.000000e+00> : vector<8x384xf32>
    %673 = tpu.matmul %672, %33, %cst_179 {dimension_numbers = #tpu.dot_dimension_numbers<[1], [0], [0], [1], [0, 0, 1, 1], [], []>} : vector<8x128xbf16>, vector<128x384xbf16>, vector<8x384xf32> -> vector<8x384xf32>
    %674 = vector.broadcast %35 : vector<1x384xf32> to vector<8x384xf32>
    %675 = arith.addf %673, %674 : vector<8x384xf32>
    %676 = vector.extract_strided_slice %671 {offsets = [0, 0], sizes = [8, 128], strides = [1, 1]} : vector<8x384xf32> to vector<8x128xf32>
    %677 = vector.extract_strided_slice %675 {offsets = [0, 0], sizes = [8, 128], strides = [1, 1]} : vector<8x384xf32> to vector<8x128xf32>
    %678 = arith.addf %676, %677 : vector<8x128xf32>
    %679 = arith.negf %678 : vector<8x128xf32>
    %680 = math.exp %679 : vector<8x128xf32>
    %cst_180 = arith.constant 1.000000e+00 : f32
    %681 = vector.broadcast %cst_180 : f32 to vector<8x128xf32>
    %682 = arith.addf %681, %680 : vector<8x128xf32>
    %683 = arith.divf %681, %682 : vector<8x128xf32>
    %684 = vector.extract_strided_slice %671 {offsets = [0, 128], sizes = [8, 128], strides = [1, 1]} : vector<8x384xf32> to vector<8x128xf32>
    %685 = vector.extract_strided_slice %675 {offsets = [0, 128], sizes = [8, 128], strides = [1, 1]} : vector<8x384xf32> to vector<8x128xf32>
    %686 = arith.addf %684, %685 : vector<8x128xf32>
    %687 = arith.negf %686 : vector<8x128xf32>
    %688 = math.exp %687 : vector<8x128xf32>
    %cst_181 = arith.constant 1.000000e+00 : f32
    %689 = vector.broadcast %cst_181 : f32 to vector<8x128xf32>
    %690 = arith.addf %689, %688 : vector<8x128xf32>
    %691 = arith.divf %689, %690 : vector<8x128xf32>
    %692 = vector.extract_strided_slice %671 {offsets = [0, 256], sizes = [8, 128], strides = [1, 1]} : vector<8x384xf32> to vector<8x128xf32>
    %693 = vector.extract_strided_slice %675 {offsets = [0, 256], sizes = [8, 128], strides = [1, 1]} : vector<8x384xf32> to vector<8x128xf32>
    %694 = arith.mulf %683, %693 : vector<8x128xf32>
    %695 = arith.addf %692, %694 : vector<8x128xf32>
    %696 = math.tanh %695 : vector<8x128xf32>
    %697 = arith.subf %639, %696 : vector<8x128xf32>
    %698 = arith.mulf %691, %697 : vector<8x128xf32>
    %699 = arith.addf %696, %698 : vector<8x128xf32>
    %cst_182 = arith.constant 7.000000e+00 : f32
    %700 = vector.broadcast %cst_182 : f32 to vector<8x1xf32>
    %701 = arith.cmpf ogt, %31, %700 : vector<8x1xf32>
    %702 = arith.extui %701 : vector<8x1xi1> to vector<8x1xi32>
    %703 = arith.sitofp %702 : vector<8x1xi32> to vector<8x1xf32>
    %cst_183 = arith.constant 0.000000e+00 : f32
    %704 = vector.broadcast %cst_183 : f32 to vector<8x1xf32>
    %705 = arith.cmpf ogt, %31, %704 : vector<8x1xf32>
    %706 = arith.extui %705 : vector<8x1xi1> to vector<8x1xi32>
    %707 = arith.sitofp %706 : vector<8x1xi32> to vector<8x1xf32>
    %708 = vector.broadcast %703 : vector<8x1xf32> to vector<8x128xf32>
    %709 = arith.mulf %708, %669 : vector<8x128xf32>
    %c7_184 = arith.constant 7 : index
    %c0_185 = arith.constant 0 : index
    %c0_186 = arith.constant 0 : index
    %710 = vector.load %arg14[%c7_184, %c0_185, %c0_186] : memref<8x8x128xf32, #tpu.memory_space<vmem>>, vector<1x8x128xf32>
    %711 = vector.shape_cast %710 : vector<1x8x128xf32> to vector<8x128xf32>
    %712 = vector.shape_cast %709 : vector<8x128xf32> to vector<1x8x128xf32>
    tpu.vector_store %arg14[%c7_184, %c0_185, %c0_186], %712 {strides = array<i32>} : memref<8x8x128xf32, #tpu.memory_space<vmem>>, vector<1x8x128xf32>,
    %713 = vector.broadcast %707 : vector<8x1xf32> to vector<8x128xf32>
    %714 = arith.mulf %713, %699 : vector<8x128xf32>
    %c0_187 = arith.constant 0 : index
    %c0_188 = arith.constant 0 : index
    %c0_189 = arith.constant 0 : index
    %715 = vector.load %arg17[%c0_187, %c0_188, %c0_189] : memref<8x8x128xf32, #tpu.memory_space<vmem>>, vector<1x8x128xf32>
    %716 = vector.shape_cast %715 : vector<1x8x128xf32> to vector<8x128xf32>
    %717 = vector.shape_cast %714 : vector<8x128xf32> to vector<1x8x128xf32>
    tpu.vector_store %arg17[%c0_187, %c0_188, %c0_189], %717 {strides = array<i32>} : memref<8x8x128xf32, #tpu.memory_space<vmem>>, vector<1x8x128xf32>,
    %718 = arith.subf %669, %635 : vector<8x128xf32>
    %719 = vector.broadcast %703 : vector<8x1xf32> to vector<8x128xf32>
    %720 = arith.mulf %719, %718 : vector<8x128xf32>
    %721 = arith.addf %635, %720 : vector<8x128xf32>
    %722 = arith.subf %699, %639 : vector<8x128xf32>
    %723 = vector.broadcast %707 : vector<8x1xf32> to vector<8x128xf32>
    %724 = arith.mulf %723, %722 : vector<8x128xf32>
    %725 = arith.addf %639, %724 : vector<8x128xf32>
    %c0_190 = arith.constant 0 : index
    %c0_191 = arith.constant 0 : index
    %c0_192 = arith.constant 0 : index
    %726 = vector.load %arg14[%c0_190, %c0_191, %c0_192] : memref<8x8x128xf32, #tpu.memory_space<vmem>>, vector<8x8x128xf32>
    %c0_193 = arith.constant 0 : index
    %c0_194 = arith.constant 0 : index
    %c0_195 = arith.constant 0 : index
    %727 = vector.load %arg17[%c0_193, %c0_194, %c0_195] : memref<8x8x128xf32, #tpu.memory_space<vmem>>, vector<8x8x128xf32>
    %728 = arith.addf %726, %727 : vector<8x8x128xf32>
    %c0_196 = arith.constant 0 : index
    %c0_197 = arith.constant 0 : index
    %c0_198 = arith.constant 0 : index
    %729 = vector.load %arg14[%c0_196, %c0_197, %c0_198] : memref<8x8x128xf32, #tpu.memory_space<vmem>>, vector<8x8x128xf32>
    tpu.vector_store %arg14[%c0_196, %c0_197, %c0_198], %728 {strides = array<i32>} : memref<8x8x128xf32, #tpu.memory_space<vmem>>, vector<8x8x128xf32>,
    %c0_199 = arith.constant 0 : index
    %c0_200 = arith.constant 0 : index
    %c0_201 = arith.constant 0 : index
    %730 = vector.load %arg15[%c0_199, %c0_200, %c0_201] : memref<2x8x128xf32, #tpu.memory_space<vmem>>, vector<1x8x128xf32>
    %731 = vector.shape_cast %730 : vector<1x8x128xf32> to vector<8x128xf32>
    %732 = vector.shape_cast %721 : vector<8x128xf32> to vector<1x8x128xf32>
    tpu.vector_store %arg15[%c0_199, %c0_200, %c0_201], %732 {strides = array<i32>} : memref<2x8x128xf32, #tpu.memory_space<vmem>>, vector<1x8x128xf32>,
    %c1_202 = arith.constant 1 : index
    %c0_203 = arith.constant 0 : index
    %c0_204 = arith.constant 0 : index
    %733 = vector.load %arg15[%c1_202, %c0_203, %c0_204] : memref<2x8x128xf32, #tpu.memory_space<vmem>>, vector<1x8x128xf32>
    %734 = vector.shape_cast %733 : vector<1x8x128xf32> to vector<8x128xf32>
    %735 = vector.shape_cast %725 : vector<8x128xf32> to vector<1x8x128xf32>
    tpu.vector_store %arg15[%c1_202, %c0_203, %c0_204], %735 {strides = array<i32>} : memref<2x8x128xf32, #tpu.memory_space<vmem>>, vector<1x8x128xf32>,
    return
  }
}

</mosaic_0001>

<llo_original>
// kernel: mlp_forward.1
$region0: #{mlp_forward.1}
  #allocation0 [shape = 'u32[]', space=smem, size = 0x4, offset = 0x4, fixed_abs, tag = 'smem constant byte address 0x4 - core index']
  #allocation1 [shape = 'u32[144,128]{1,0:T(1,128)}', space=vmem, size = 0x12000, scoped, tag = 'internal scratch']
  #allocation2 [shape = 'f32[8,8,768]{2,1,0:T(8,128)}', space=vmem, size = 0x30000, scoped, tag = 'scratch operand']
  #allocation3 [shape = 'f32[8,8,128]{2,1,0:T(8,128)}', space=vmem, size = 0x8000, scoped, tag = 'scratch operand']
  %s0 = inlined_call_operand.vmem [shape: bf16[8,8,128], index: 0, kind: input, shape index: {}]
  %s1 = inlined_call_operand.vmem [shape: f32[8,1], index: 1, kind: input, shape index: {}]
  %s2 = inlined_call_operand.hbm [shape: bf16[128,128], index: 2, kind: input, shape index: {}]
  %s3 = inlined_call_operand.vmem [shape: f32[1,128], index: 3, kind: input, shape index: {}]
  %s4 = inlined_call_operand.hbm [shape: bf16[128,128], index: 4, kind: input, shape index: {}]
  %s5 = inlined_call_operand.vmem [shape: f32[1,128], index: 5, kind: input, shape index: {}]
  %s6 = inlined_call_operand.hbm [shape: bf16[128,128], index: 6, kind: input, shape index: {}]
  %s7 = inlined_call_operand.vmem [shape: f32[1,128], index: 7, kind: input, shape index: {}]
  %s8 = inlined_call_operand.hbm [shape: bf16[128,768], index: 8, kind: input, shape index: {}]
  %s9 = inlined_call_operand.vmem [shape: f32[1,768], index: 9, kind: input, shape index: {}]
  %s10 = inlined_call_operand.vmem [shape: bf16[128,384], index: 10, kind: input, shape index: {}]
  %s11 = inlined_call_operand.vmem [shape: f32[1,384], index: 11, kind: input, shape index: {}]
  %s12 = inlined_call_operand.hbm [shape: bf16[128,384], index: 12, kind: input, shape index: {}]
  %s13 = inlined_call_operand.vmem [shape: f32[1,384], index: 13, kind: input, shape index: {}]
  %s14 = inlined_call_operand.vmem [shape: f32[8,8,128], index: 14, kind: output, shape index: {0}]
  %s15 = inlined_call_operand.vmem [shape: f32[2,8,128], index: 15, kind: output, shape index: {1}]
  %16 = xla_tuple %s14, %s15
  %s17 = sld [smem:[#allocation0]]
  $region94: #{mlp_forward.1} parent=0
    _
  %s19 = ssub.s32 1, %s17
  %s20 = scalar_select 0, %s19, %s17
  $region1: #{mlp_forward.1} parent=0
    #allocation4 [shape = 'u8[32768]{0}', space=vmem, size = 0x8000, scoped, tag = 'input window, operand 2, single buffered']
    #allocation5 [shape = 's32[1]{0}', space=sflag, size = 0x4, scoped, tag = 'scoped memory for mlp_forward.1']
    #allocation6 [shape = 'u8[32768]{0}', space=vmem, size = 0x8000, scoped, tag = 'input window, operand 4, single buffered']
    #allocation7 [shape = 's32[1]{0}', space=sflag, size = 0x4, scoped, tag = 'scoped memory for mlp_forward.1']
    #allocation8 [shape = 'u8[32768]{0}', space=vmem, size = 0x8000, scoped, tag = 'input window, operand 6, single buffered']
    #allocation9 [shape = 'u8[196608]{0}', space=vmem, size = 0x30000, scoped, tag = 'input window, operand 8, single buffered']
    #allocation10 [shape = 's32[1]{0}', space=sflag, size = 0x4, scoped, tag = 'scoped memory for mlp_forward.1']
    #allocation11 [shape = 'u8[98304]{0}', space=vmem, size = 0x18000, scoped, tag = 'input window, operand 12, single buffered']
    %21 = vsyncpa [#allocation5], 0
    %22 = vsyncpa [#allocation7], 0
    %23 = vsyncpa [#allocation10], 0
    // Predicated region
    $region2: #{mlp_forward.1} parent=1 // pred_check
      _
    $region3: #{mlp_forward.1} parent=1 // pred_check_branch
      %25 = sbr.rel (0) target = $region5
    $region4: #{mlp_forward.1} parent=1 // pred_region
      _
    $region5: #{mlp_forward.1} parent=1 // pred_fallthru
      _
    // Predicated region
    $region6: #{mlp_forward.1} parent=1 // pred_check
      _
    $region7: #{mlp_forward.1} parent=1 // pred_check_branch
      %27 = sbr.rel (0) target = $region9
    $region8: #{mlp_forward.1} parent=1 // pred_region
      _
    $region9: #{mlp_forward.1} parent=1 // pred_fallthru
      _
    // Predicated region
    $region10: #{mlp_forward.1} parent=1 // pred_check
      _
    $region11: #{mlp_forward.1} parent=1 // pred_check_branch
      %29 = sbr.rel (0) target = $region13
    $region12: #{mlp_forward.1} parent=1 // pred_region
      %s31 = ssub.s32 1024, 1024
      %32 = vsyncadd [#allocation5], %s31
      %s33 = sshll.u32 [#allocation4], 4
      %s34 = int_to_ptr.vmem [resolvable:$true] %s33
      %39 = dma.hbm_to_vmem [thread:$0]  %s2, 1024, %s34, [#allocation5], 64, 64, 4
    $region13: #{mlp_forward.1} parent=1 // pred_fallthru
      _
    // Predicated region
    $region14: #{mlp_forward.1} parent=1 // pred_check
      _
    $region15: #{mlp_forward.1} parent=1 // pred_check_branch
      %41 = sbr.rel (0) target = $region17
    $region16: #{mlp_forward.1} parent=1 // pred_region
      _
    $region17: #{mlp_forward.1} parent=1 // pred_fallthru
      _
    // Predicated region
    $region18: #{mlp_forward.1} parent=1 // pred_check
      _
    $region19: #{mlp_forward.1} parent=1 // pred_check_branch
      %43 = sbr.rel (0) target = $region21
    $region20: #{mlp_forward.1} parent=1 // pred_region
      %s45 = ssub.s32 1024, 1024
      %46 = vsyncadd [#allocation7], %s45
      %s47 = sshll.u32 [#allocation6], 4
      %s48 = int_to_ptr.vmem [resolvable:$true] %s47
      %53 = dma.hbm_to_vmem [thread:$0]  %s4, 1024, %s48, [#allocation7], 64, 64, 4
    $region21: #{mlp_forward.1} parent=1 // pred_fallthru
      _
    // Predicated region
    $region22: #{mlp_forward.1} parent=1 // pred_check
      _
    $region23: #{mlp_forward.1} parent=1 // pred_check_branch
      %55 = sbr.rel (0) target = $region25
    $region24: #{mlp_forward.1} parent=1 // pred_region
      _
    $region25: #{mlp_forward.1} parent=1 // pred_fallthru
      _
    // Predicated region
    $region26: #{mlp_forward.1} parent=1 // pred_check
      _
    $region27: #{mlp_forward.1} parent=1 // pred_check_branch
      %57 = sbr.rel (0) target = $region29
    $region28: #{mlp_forward.1} parent=1 // pred_region
      %s59 = ssub.s32 1024, 1024
      %60 = vsyncadd [#allocation7], %s59
      %s61 = sshll.u32 [#allocation8], 4
      %s62 = int_to_ptr.vmem [resolvable:$true] %s61
      %67 = dma.hbm_to_vmem [thread:$0]  %s6, 1024, %s62, [#allocation7], 64, 64, 4
    $region29: #{mlp_forward.1} parent=1 // pred_fallthru
      _
    // Predicated region
    $region30: #{mlp_forward.1} parent=1 // pred_check
      _
    $region31: #{mlp_forward.1} parent=1 // pred_check_branch
      %69 = sbr.rel (0) target = $region33
    $region32: #{mlp_forward.1} parent=1 // pred_region
      _
    $region33: #{mlp_forward.1} parent=1 // pred_fallthru
      _
    // Predicated region
    $region34: #{mlp_forward.1} parent=1 // pred_check
      _
    $region35: #{mlp_forward.1} parent=1 // pred_check_branch
      %71 = sbr.rel (0) target = $region37
    $region36: #{mlp_forward.1} parent=1 // pred_region
      %s73 = ssub.s32 6144, 6144
      %74 = vsyncadd [#allocation10], %s73
      %s75 = sshll.u32 [#allocation9], 4
      %s76 = int_to_ptr.vmem [resolvable:$true] %s75
      %81 = dma.hbm_to_vmem [thread:$0]  %s8, 6144, %s76, [#allocation10], 384, 384, 24
    $region37: #{mlp_forward.1} parent=1 // pred_fallthru
      _
    // Predicated region
    $region38: #{mlp_forward.1} parent=1 // pred_check
      _
    $region39: #{mlp_forward.1} parent=1 // pred_check_branch
      %83 = sbr.rel (0) target = $region41
    $region40: #{mlp_forward.1} parent=1 // pred_region
      _
    $region41: #{mlp_forward.1} parent=1 // pred_fallthru
      _
    // Predicated region
    $region42: #{mlp_forward.1} parent=1 // pred_check
      _
    $region43: #{mlp_forward.1} parent=1 // pred_check_branch
      %85 = sbr.rel (0) target = $region45
    $region44: #{mlp_forward.1} parent=1 // pred_region
      _
    $region45: #{mlp_forward.1} parent=1 // pred_fallthru
      _
    // Predicated region
    $region46: #{mlp_forward.1} parent=1 // pred_check
      _
    $region47: #{mlp_forward.1} parent=1 // pred_check_branch
      %87 = sbr.rel (0) target = $region49
    $region48: #{mlp_forward.1} parent=1 // pred_region
      _
    $region49: #{mlp_forward.1} parent=1 // pred_fallthru
      _
    // Predicated region
    $region50: #{mlp_forward.1} parent=1 // pred_check
      _
    $region51: #{mlp_forward.1} parent=1 // pred_check_branch
      %89 = sbr.rel (0) target = $region53
    $region52: #{mlp_forward.1} parent=1 // pred_region
      %s91 = ssub.s32 3072, 3072
      %92 = vsyncadd [#allocation10], %s91
      %s93 = sshll.u32 [#allocation11], 4
      %s94 = int_to_ptr.vmem [resolvable:$true] %s93
      %99 = dma.hbm_to_vmem [thread:$0]  %s12, 3072, %s94, [#allocation10], 192, 192, 12
    $region53: #{mlp_forward.1} parent=1 // pred_fallthru
      _
    // Predicated region
    $region54: #{mlp_forward.1} parent=1 // pred_check
      _
    $region55: #{mlp_forward.1} parent=1 // pred_check_branch
      %101 = sbr.rel (0) target = $region57
    $region56: #{mlp_forward.1} parent=1 // pred_region
      _
    $region57: #{mlp_forward.1} parent=1 // pred_fallthru
      _
    // Predicated region
    $region58: #{mlp_forward.1} parent=1 // pred_check
      _
    $region59: #{mlp_forward.1} parent=1 // pred_check_branch
      %103 = sbr.rel (0) target = $region61
    $region60: #{mlp_forward.1} parent=1 // pred_region
      %104 = dma.done [#allocation5], 1024
    $region61: #{mlp_forward.1} parent=1 // pred_fallthru
      _
    // Predicated region
    $region62: #{mlp_forward.1} parent=1 // pred_check
      _
    $region63: #{mlp_forward.1} parent=1 // pred_check_branch
      %106 = sbr.rel (0) target = $region65
    $region64: #{mlp_forward.1} parent=1 // pred_region
      %107 = dma.done [#allocation7], 1024
    $region65: #{mlp_forward.1} parent=1 // pred_fallthru
      _
    // Predicated region
    $region66: #{mlp_forward.1} parent=1 // pred_check
      _
    $region67: #{mlp_forward.1} parent=1 // pred_check_branch
      %109 = sbr.rel (0) target = $region69
    $region68: #{mlp_forward.1} parent=1 // pred_region
      %110 = dma.done [#allocation7], 1024
    $region69: #{mlp_forward.1} parent=1 // pred_fallthru
      _
    // Predicated region
    $region70: #{mlp_forward.1} parent=1 // pred_check
      _
    $region71: #{mlp_forward.1} parent=1 // pred_check_branch
      %112 = sbr.rel (0) target = $region73
    $region72: #{mlp_forward.1} parent=1 // pred_region
      %113 = dma.done [#allocation10], 6144
    $region73: #{mlp_forward.1} parent=1 // pred_fallthru
      _
    // Predicated region
    $region74: #{mlp_forward.1} parent=1 // pred_check
      _
    $region75: #{mlp_forward.1} parent=1 // pred_check_branch
      %115 = sbr.rel (0) target = $region77
    $region76: #{mlp_forward.1} parent=1 // pred_region
      %116 = dma.done [#allocation10], 3072
    $region77: #{mlp_forward.1} parent=1 // pred_fallthru
      _
    %v118 = vld [vmem:[%s0] sm:$0xf]
    %v119 = vld [vmem:[%s0 + $0x4] sm:$0xf]
    %v120 = vld [vmem:[%s0 + $0x8] sm:$0xf]
    %v121 = vld [vmem:[%s0 + $0xc] sm:$0xf]
    %v122 = vld [vmem:[%s0 + $0x10] sm:$0xf]
    %v123 = vld [vmem:[%s0 + $0x14] sm:$0xf]
    %v124 = vld [vmem:[%s0 + $0x18] sm:$0xf]
    %v125 = vld [vmem:[%s0 + $0x1c] sm:$0xf]
    %v126 = vld [vmem:[#allocation4] sm:$0xf]
    %v127 = vld [vmem:[#allocation4 + $0x4] sm:$0xf]
    %v128 = vld [vmem:[#allocation4 + $0x8] sm:$0xf]
    %v129 = vld [vmem:[#allocation4 + $0xc] sm:$0xf]
    %v130 = vld [vmem:[#allocation4 + $0x10] sm:$0xf]
    %v131 = vld [vmem:[#allocation4 + $0x14] sm:$0xf]
    %v132 = vld [vmem:[#allocation4 + $0x18] sm:$0xf]
    %v133 = vld [vmem:[#allocation4 + $0x1c] sm:$0xf]
    %v134 = vld [vmem:[#allocation4 + $0x20] sm:$0xf]
    %v135 = vld [vmem:[#allocation4 + $0x24] sm:$0xf]
    %v136 = vld [vmem:[#allocation4 + $0x28] sm:$0xf]
    %v137 = vld [vmem:[#allocation4 + $0x2c] sm:$0xf]
    %v138 = vld [vmem:[#allocation4 + $0x30] sm:$0xf]
    %v139 = vld [vmem:[#allocation4 + $0x34] sm:$0xf]
    %v140 = vld [vmem:[#allocation4 + $0x38] sm:$0xf]
    %v141 = vld [vmem:[#allocation4 + $0x3c] sm:$0xf]
    %v142 = vld [vmem:[%s3] sm:$0x1]
    %v144 = vlaneseq
    %v145 = vshrl.u32 %v144, 7
    %v146 = vsub.s32 0, %v145
    %v147 = vrot.slane %v142, %v146
    %v157 = vunpack.c.l.b16 %v118
    %v158 = vunpack.c.l.b16 %v119
    %v159 = vunpack.c.l.b16 %v120
    %v160 = vunpack.c.l.b16 %v121
    %v161 = vunpack.c.l.b16 %v122
    %v162 = vunpack.c.l.b16 %v123
    %v163 = vunpack.c.l.b16 %v124
    %v164 = vunpack.c.l.b16 %v125
    %v165 = vpack.c.b16 %v158, %v157
    %v166 = vpack.c.b16 %v160, %v159
    %v167 = vpack.c.b16 %v162, %v161
    %v168 = vpack.c.b16 %v164, %v163
    %v189 = vunpack.c.l.b16 %v126
    %v190 = vunpack.c.l.b16 %v127
    %v191 = vunpack.c.l.b16 %v128
    %v192 = vunpack.c.l.b16 %v129
    %v193 = vunpack.c.l.b16 %v130
    %v194 = vunpack.c.l.b16 %v131
    %v195 = vunpack.c.l.b16 %v132
    %v196 = vunpack.c.l.b16 %v133
    %v197 = vunpack.c.l.b16 %v134
    %v198 = vunpack.c.l.b16 %v135
    %v199 = vunpack.c.l.b16 %v136
    %v200 = vunpack.c.l.b16 %v137
    %v201 = vunpack.c.l.b16 %v138
    %v202 = vunpack.c.l.b16 %v139
    %v203 = vunpack.c.l.b16 %v140
    %v204 = vunpack.c.l.b16 %v141
    %v205 = vpack.c.b16 %v190, %v189
    %v206 = vpack.c.b16 %v192, %v191
    %v207 = vpack.c.b16 %v194, %v193
    %v208 = vpack.c.b16 %v196, %v195
    %v209 = vpack.c.b16 %v198, %v197
    %v210 = vpack.c.b16 %v200, %v199
    %v211 = vpack.c.b16 %v202, %v201
    %v212 = vpack.c.b16 %v204, %v203
    %221 = vmatprep.subr.bf16.mxu0 0
    %222 = vmatpush1.bf16.msra.mxu0 %v205
    %223 = vmatprep.subr.bf16.mxu0 0
    %224 = vmatpush1.bf16.msra.mxu0 %v206
    %225 = vmatprep.subr.bf16.mxu0 0
    %226 = vmatpush1.bf16.msra.mxu0 %v207
    %227 = vmatprep.subr.bf16.mxu0 0
    %228 = vmatpush1.bf16.msra.mxu0 %v208
    %229 = vmatprep.subr.bf16.mxu0 0
    %230 = vmatpush1.bf16.msra.mxu0 %v209
    %231 = vmatprep.subr.bf16.mxu0 0
    %232 = vmatpush1.bf16.msra.mxu0 %v210
    %233 = vmatprep.subr.bf16.mxu0 0
    %234 = vmatpush1.bf16.msra.mxu0 %v211
    %235 = vmatprep.subr.bf16.mxu0 0
    %236 = vmatpush1.bf16.msra.mxu0 %v212
    %237 = vmatprep.subr.bf16.mxu0 0
    %238 = vmatpush1.bf16.msra.mxu0 0
    %239 = vmatprep.subr.bf16.mxu0 0
    %240 = vmatpush1.bf16.msra.mxu0 0
    %241 = vmatprep.subr.bf16.mxu0 0
    %242 = vmatpush1.bf16.msra.mxu0 0
    %243 = vmatprep.subr.bf16.mxu0 0
    %244 = vmatpush1.bf16.msra.mxu0 0
    %245 = vmatprep.subr.bf16.mxu0 0
    %246 = vmatpush1.bf16.msra.mxu0 0
    %247 = vmatprep.subr.bf16.mxu0 0
    %248 = vmatpush1.bf16.msra.mxu0 0
    %249 = vmatprep.subr.bf16.mxu0 0
    %250 = vmatpush1.bf16.msra.mxu0 0
    %251 = vmatprep.subr.bf16.mxu0 0
    %252 = vmatpush1.bf16.msra.mxu0 0
    %253 = vmatprep.mubr.bf16.mxu0 0
    %254 = vmatmul.mubr.bf16.gmra.mrb[0].mxu0 %v165
    %v255 = vpop.f32.mrb[0].mxu0
    %v256 = vadd.f32 %v147, %v255
    %v257 = vpop.f32.mrb[0].mxu0
    %v258 = vpop.f32.mrb[0].mxu0
    %v259 = vadd.f32 %v147, %v258
    %v260 = vpop.f32.mrb[0].mxu0
    %261 = vmatprep.mubr.bf16.mxu0 0
    %262 = vmatmul.mubr.bf16.gmra.mrb[0].mxu0 %v166
    %v263 = vpop.f32.mrb[0].mxu0
    %v264 = vadd.f32 %v147, %v263
    %v265 = vpop.f32.mrb[0].mxu0
    %v266 = vpop.f32.mrb[0].mxu0
    %v267 = vadd.f32 %v147, %v266
    %v268 = vpop.f32.mrb[0].mxu0
    %269 = vmatprep.mubr.bf16.mxu0 0
    %270 = vmatmul.mubr.bf16.gmra.mrb[0].mxu0 %v167
    %v271 = vpop.f32.mrb[0].mxu0
    %v272 = vadd.f32 %v147, %v271
    %v273 = vpop.f32.mrb[0].mxu0
    %v274 = vpop.f32.mrb[0].mxu0
    %v275 = vadd.f32 %v147, %v274
    %v276 = vpop.f32.mrb[0].mxu0
    %277 = vmatprep.mubr.bf16.mxu0 0
    %278 = vmatmul.mubr.bf16.gmra.mrb[0].mxu0 %v168
    %v279 = vpop.f32.mrb[0].mxu0
    %v280 = vadd.f32 %v147, %v279
    %v281 = vpop.f32.mrb[0].mxu0
    %v282 = vpop.f32.mrb[0].mxu0
    %v283 = vadd.f32 %v147, %v282
    %v284 = vpop.f32.mrb[0].mxu0
    %285 = vdwg.mxu0
    %v286 = vmax.f32 %v256, 0.0
    %v287 = vmax.f32 %v259, 0.0
    %v288 = vmax.f32 %v264, 0.0
    %v289 = vmax.f32 %v267, 0.0
    %v290 = vmax.f32 %v272, 0.0
    %v291 = vmax.f32 %v275, 0.0
    %v292 = vmax.f32 %v280, 0.0
    %v293 = vmax.f32 %v283, 0.0
    %v294 = vpack.c.bf16 %v287, %v286
    %v295 = vpack.c.bf16 %v289, %v288
    %v296 = vpack.c.bf16 %v291, %v290
    %v297 = vpack.c.bf16 %v293, %v292
    %v298 = vld [vmem:[#allocation6] sm:$0xf]
    %v299 = vld [vmem:[#allocation6 + $0x4] sm:$0xf]
    %v300 = vld [vmem:[#allocation6 + $0x8] sm:$0xf]
    %v301 = vld [vmem:[#allocation6 + $0xc] sm:$0xf]
    %v302 = vld [vmem:[#allocation6 + $0x10] sm:$0xf]
    %v303 = vld [vmem:[#allocation6 + $0x14] sm:$0xf]
    %v304 = vld [vmem:[#allocation6 + $0x18] sm:$0xf]
    %v305 = vld [vmem:[#allocation6 + $0x1c] sm:$0xf]
    %v306 = vld [vmem:[#allocation6 + $0x20] sm:$0xf]
    %v307 = vld [vmem:[#allocation6 + $0x24] sm:$0xf]
    %v308 = vld [vmem:[#allocation6 + $0x28] sm:$0xf]
    %v309 = vld [vmem:[#allocation6 + $0x2c] sm:$0xf]
    %v310 = vld [vmem:[#allocation6 + $0x30] sm:$0xf]
    %v311 = vld [vmem:[#allocation6 + $0x34] sm:$0xf]
    %v312 = vld [vmem:[#allocation6 + $0x38] sm:$0xf]
    %v313 = vld [vmem:[#allocation6 + $0x3c] sm:$0xf]
    %v314 = vld [vmem:[%s5] sm:$0x1]
    %v316 = vlaneseq
    %v317 = vshrl.u32 %v316, 7
    %v318 = vsub.s32 0, %v317
    %v319 = vrot.slane %v314, %v318
    %v337 = vunpack.c.l.b16 %v298
    %v338 = vunpack.c.l.b16 %v299
    %v339 = vunpack.c.l.b16 %v300
    %v340 = vunpack.c.l.b16 %v301
    %v341 = vunpack.c.l.b16 %v302
    %v342 = vunpack.c.l.b16 %v303
    %v343 = vunpack.c.l.b16 %v304
    %v344 = vunpack.c.l.b16 %v305
    %v345 = vunpack.c.l.b16 %v306
    %v346 = vunpack.c.l.b16 %v307
    %v347 = vunpack.c.l.b16 %v308
    %v348 = vunpack.c.l.b16 %v309
    %v349 = vunpack.c.l.b16 %v310
    %v350 = vunpack.c.l.b16 %v311
    %v351 = vunpack.c.l.b16 %v312
    %v352 = vunpack.c.l.b16 %v313
    %v353 = vpack.c.b16 %v338, %v337
    %v354 = vpack.c.b16 %v340, %v339
    %v355 = vpack.c.b16 %v342, %v341
    %v356 = vpack.c.b16 %v344, %v343
    %v357 = vpack.c.b16 %v346, %v345
    %v358 = vpack.c.b16 %v348, %v347
    %v359 = vpack.c.b16 %v350, %v349
    %v360 = vpack.c.b16 %v352, %v351
    %369 = vmatprep.subr.bf16.mxu0 0
    %370 = vmatpush1.bf16.msra.mxu0 %v353
    %371 = vmatprep.subr.bf16.mxu0 0
    %372 = vmatpush1.bf16.msra.mxu0 %v354
    %373 = vmatprep.subr.bf16.mxu0 0
    %374 = vmatpush1.bf16.msra.mxu0 %v355
    %375 = vmatprep.subr.bf16.mxu0 0
    %376 = vmatpush1.bf16.msra.mxu0 %v356
    %377 = vmatprep.subr.bf16.mxu0 0
    %378 = vmatpush1.bf16.msra.mxu0 %v357
    %379 = vmatprep.subr.bf16.mxu0 0
    %380 = vmatpush1.bf16.msra.mxu0 %v358
    %381 = vmatprep.subr.bf16.mxu0 0
    %382 = vmatpush1.bf16.msra.mxu0 %v359
    %383 = vmatprep.subr.bf16.mxu0 0
    %384 = vmatpush1.bf16.msra.mxu0 %v360
    %385 = vmatprep.subr.bf16.mxu0 0
    %386 = vmatpush1.bf16.msra.mxu0 0
    %387 = vmatprep.subr.bf16.mxu0 0
    %388 = vmatpush1.bf16.msra.mxu0 0
    %389 = vmatprep.subr.bf16.mxu0 0
    %390 = vmatpush1.bf16.msra.mxu0 0
    %391 = vmatprep.subr.bf16.mxu0 0
    %392 = vmatpush1.bf16.msra.mxu0 0
    %393 = vmatprep.subr.bf16.mxu0 0
    %394 = vmatpush1.bf16.msra.mxu0 0
    %395 = vmatprep.subr.bf16.mxu0 0
    %396 = vmatpush1.bf16.msra.mxu0 0
    %397 = vmatprep.subr.bf16.mxu0 0
    %398 = vmatpush1.bf16.msra.mxu0 0
    %399 = vmatprep.subr.bf16.mxu0 0
    %400 = vmatpush1.bf16.msra.mxu0 0
    %401 = vmatprep.mubr.bf16.mxu0 0
    %402 = vmatmul.mubr.bf16.gmra.mrb[0].mxu0 %v294
    %v403 = vpop.f32.mrb[0].mxu0
    %v404 = vadd.f32 %v319, %v403
    %v405 = vpop.f32.mrb[0].mxu0
    %v406 = vpop.f32.mrb[0].mxu0
    %v407 = vadd.f32 %v319, %v406
    %v408 = vpop.f32.mrb[0].mxu0
    %409 = vmatprep.mubr.bf16.mxu0 0
    %410 = vmatmul.mubr.bf16.gmra.mrb[0].mxu0 %v295
    %v411 = vpop.f32.mrb[0].mxu0
    %v412 = vadd.f32 %v319, %v411
    %v413 = vpop.f32.mrb[0].mxu0
    %v414 = vpop.f32.mrb[0].mxu0
    %v415 = vadd.f32 %v319, %v414
    %v416 = vpop.f32.mrb[0].mxu0
    %417 = vmatprep.mubr.bf16.mxu0 0
    %418 = vmatmul.mubr.bf16.gmra.mrb[0].mxu0 %v296
    %v419 = vpop.f32.mrb[0].mxu0
    %v420 = vadd.f32 %v319, %v419
    %v421 = vpop.f32.mrb[0].mxu0
    %v422 = vpop.f32.mrb[0].mxu0
    %v423 = vadd.f32 %v319, %v422
    %v424 = vpop.f32.mrb[0].mxu0
    %425 = vmatprep.mubr.bf16.mxu0 0
    %426 = vmatmul.mubr.bf16.gmra.mrb[0].mxu0 %v297
    %v427 = vpop.f32.mrb[0].mxu0
    %v428 = vadd.f32 %v319, %v427
    %v429 = vpop.f32.mrb[0].mxu0
    %v430 = vpop.f32.mrb[0].mxu0
    %v431 = vadd.f32 %v319, %v430
    %v432 = vpop.f32.mrb[0].mxu0
    %433 = vdwg.mxu0
    %v434 = vmax.f32 %v404, 0.0
    %v435 = vmax.f32 %v407, 0.0
    %v436 = vmax.f32 %v412, 0.0
    %v437 = vmax.f32 %v415, 0.0
    %v438 = vmax.f32 %v420, 0.0
    %v439 = vmax.f32 %v423, 0.0
    %v440 = vmax.f32 %v428, 0.0
    %v441 = vmax.f32 %v431, 0.0
    %v442 = vpack.c.bf16 %v435, %v434
    %v443 = vpack.c.bf16 %v437, %v436
    %v444 = vpack.c.bf16 %v439, %v438
    %v445 = vpack.c.bf16 %v441, %v440
    %v446 = vld [vmem:[#allocation8] sm:$0xf]
    %v447 = vld [vmem:[#allocation8 + $0x4] sm:$0xf]
    %v448 = vld [vmem:[#allocation8 + $0x8] sm:$0xf]
    %v449 = vld [vmem:[#allocation8 + $0xc] sm:$0xf]
    %v450 = vld [vmem:[#allocation8 + $0x10] sm:$0xf]
    %v451 = vld [vmem:[#allocation8 + $0x14] sm:$0xf]
    %v452 = vld [vmem:[#allocation8 + $0x18] sm:$0xf]
    %v453 = vld [vmem:[#allocation8 + $0x1c] sm:$0xf]
    %v454 = vld [vmem:[#allocation8 + $0x20] sm:$0xf]
    %v455 = vld [vmem:[#allocation8 + $0x24] sm:$0xf]
    %v456 = vld [vmem:[#allocation8 + $0x28] sm:$0xf]
    %v457 = vld [vmem:[#allocation8 + $0x2c] sm:$0xf]
    %v458 = vld [vmem:[#allocation8 + $0x30] sm:$0xf]
    %v459 = vld [vmem:[#allocation8 + $0x34] sm:$0xf]
    %v460 = vld [vmem:[#allocation8 + $0x38] sm:$0xf]
    %v461 = vld [vmem:[#allocation8 + $0x3c] sm:$0xf]
    %v462 = vld [vmem:[%s7] sm:$0x1]
    %v464 = vlaneseq
    %v465 = vshrl.u32 %v464, 7
    %v466 = vsub.s32 0, %v465
    %v467 = vrot.slane %v462, %v466
    %v485 = vunpack.c.l.b16 %v446
    %v486 = vunpack.c.l.b16 %v447
    %v487 = vunpack.c.l.b16 %v448
    %v488 = vunpack.c.l.b16 %v449
    %v489 = vunpack.c.l.b16 %v450
    %v490 = vunpack.c.l.b16 %v451
    %v491 = vunpack.c.l.b16 %v452
    %v492 = vunpack.c.l.b16 %v453
    %v493 = vunpack.c.l.b16 %v454
    %v494 = vunpack.c.l.b16 %v455
    %v495 = vunpack.c.l.b16 %v456
    %v496 = vunpack.c.l.b16 %v457
    %v497 = vunpack.c.l.b16 %v458
    %v498 = vunpack.c.l.b16 %v459
    %v499 = vunpack.c.l.b16 %v460
    %v500 = vunpack.c.l.b16 %v461
    %v501 = vpack.c.b16 %v486, %v485
    %v502 = vpack.c.b16 %v488, %v487
    %v503 = vpack.c.b16 %v490, %v489
    %v504 = vpack.c.b16 %v492, %v491
    %v505 = vpack.c.b16 %v494, %v493
    %v506 = vpack.c.b16 %v496, %v495
    %v507 = vpack.c.b16 %v498, %v497
    %v508 = vpack.c.b16 %v500, %v499
    %517 = vmatprep.subr.bf16.mxu0 0
    %518 = vmatpush1.bf16.msra.mxu0 %v501
    %519 = vmatprep.subr.bf16.mxu0 0
    %520 = vmatpush1.bf16.msra.mxu0 %v502
    %521 = vmatprep.subr.bf16.mxu0 0
    %522 = vmatpush1.bf16.msra.mxu0 %v503
    %523 = vmatprep.subr.bf16.mxu0 0
    %524 = vmatpush1.bf16.msra.mxu0 %v504
    %525 = vmatprep.subr.bf16.mxu0 0
    %526 = vmatpush1.bf16.msra.mxu0 %v505
    %527 = vmatprep.subr.bf16.mxu0 0
    %528 = vmatpush1.bf16.msra.mxu0 %v506
    %529 = vmatprep.subr.bf16.mxu0 0
    %530 = vmatpush1.bf16.msra.mxu0 %v507
    %531 = vmatprep.subr.bf16.mxu0 0
    %532 = vmatpush1.bf16.msra.mxu0 %v508
    %533 = vmatprep.subr.bf16.mxu0 0
    %534 = vmatpush1.bf16.msra.mxu0 0
    %535 = vmatprep.subr.bf16.mxu0 0
    %536 = vmatpush1.bf16.msra.mxu0 0
    %537 = vmatprep.subr.bf16.mxu0 0
    %538 = vmatpush1.bf16.msra.mxu0 0
    %539 = vmatprep.subr.bf16.mxu0 0
    %540 = vmatpush1.bf16.msra.mxu0 0
    %541 = vmatprep.subr.bf16.mxu0 0
    %542 = vmatpush1.bf16.msra.mxu0 0
    %543 = vmatprep.subr.bf16.mxu0 0
    %544 = vmatpush1.bf16.msra.mxu0 0
    %545 = vmatprep.subr.bf16.mxu0 0
    %546 = vmatpush1.bf16.msra.mxu0 0
    %547 = vmatprep.subr.bf16.mxu0 0
    %548 = vmatpush1.bf16.msra.mxu0 0
    %549 = vmatprep.mubr.bf16.mxu0 0
    %550 = vmatmul.mubr.bf16.gmra.mrb[0].mxu0 %v442
    %v551 = vpop.f32.mrb[0].mxu0
    %v552 = vadd.f32 %v467, %v551
    %v553 = vpop.f32.mrb[0].mxu0
    %v554 = vpop.f32.mrb[0].mxu0
    %v555 = vadd.f32 %v467, %v554
    %v556 = vpop.f32.mrb[0].mxu0
    %557 = vmatprep.mubr.bf16.mxu0 0
    %558 = vmatmul.mubr.bf16.gmra.mrb[0].mxu0 %v443
    %v559 = vpop.f32.mrb[0].mxu0
    %v560 = vadd.f32 %v467, %v559
    %v561 = vpop.f32.mrb[0].mxu0
    %v562 = vpop.f32.mrb[0].mxu0
    %v563 = vadd.f32 %v467, %v562
    %v564 = vpop.f32.mrb[0].mxu0
    %565 = vmatprep.mubr.bf16.mxu0 0
    %566 = vmatmul.mubr.bf16.gmra.mrb[0].mxu0 %v444
    %v567 = vpop.f32.mrb[0].mxu0
    %v568 = vadd.f32 %v467, %v567
    %v569 = vpop.f32.mrb[0].mxu0
    %v570 = vpop.f32.mrb[0].mxu0
    %v571 = vadd.f32 %v467, %v570
    %v572 = vpop.f32.mrb[0].mxu0
    %573 = vmatprep.mubr.bf16.mxu0 0
    %574 = vmatmul.mubr.bf16.gmra.mrb[0].mxu0 %v445
    %v575 = vpop.f32.mrb[0].mxu0
    %v576 = vadd.f32 %v467, %v575
    %v577 = vpop.f32.mrb[0].mxu0
    %v578 = vpop.f32.mrb[0].mxu0
    %v579 = vadd.f32 %v467, %v578
    %v580 = vpop.f32.mrb[0].mxu0
    %581 = vdwg.mxu0
    %v582 = vpack.c.bf16 %v555, %v552
    %v583 = vpack.c.bf16 %v563, %v560
    %v584 = vpack.c.bf16 %v571, %v568
    %v585 = vpack.c.bf16 %v579, %v576
    %v586 = vld [vmem:[#allocation9] sm:$0xff]
    %v587 = vld [vmem:[#allocation9 + $0x8] sm:$0xff]
    %v588 = vld [vmem:[#allocation9 + $0x10] sm:$0xff]
    %v589 = vld [vmem:[#allocation9 + $0x18] sm:$0xff]
    %v590 = vld [vmem:[#allocation9 + $0x20] sm:$0xff]
    %v591 = vld [vmem:[#allocation9 + $0x28] sm:$0xff]
    %v592 = vld [vmem:[#allocation9 + $0x30] sm:$0xff]
    %v593 = vld [vmem:[#allocation9 + $0x38] sm:$0xff]
    %v594 = vld [vmem:[#allocation9 + $0x40] sm:$0xff]
    %v595 = vld [vmem:[#allocation9 + $0x48] sm:$0xff]
    %v596 = vld [vmem:[#allocation9 + $0x50] sm:$0xff]
    %v597 = vld [vmem:[#allocation9 + $0x58] sm:$0xff]
    %v598 = vld [vmem:[#allocation9 + $0x60] sm:$0xff]
    %v599 = vld [vmem:[#allocation9 + $0x68] sm:$0xff]
    %v600 = vld [vmem:[#allocation9 + $0x70] sm:$0xff]
    %v601 = vld [vmem:[#allocation9 + $0x78] sm:$0xff]
    %v602 = vld [vmem:[#allocation9 + $0x80] sm:$0xff]
    %v603 = vld [vmem:[#allocation9 + $0x88] sm:$0xff]
    %v604 = vld [vmem:[#allocation9 + $0x90] sm:$0xff]
    %v605 = vld [vmem:[#allocation9 + $0x98] sm:$0xff]
    %v606 = vld [vmem:[#allocation9 + $0xa0] sm:$0xff]
    %v607 = vld [vmem:[#allocation9 + $0xa8] sm:$0xff]
    %v608 = vld [vmem:[#allocation9 + $0xb0] sm:$0xff]
    %v609 = vld [vmem:[#allocation9 + $0xb8] sm:$0xff]
    %v610 = vld [vmem:[#allocation9 + $0xc0] sm:$0xff]
    %v611 = vld [vmem:[#allocation9 + $0xc8] sm:$0xff]
    %v612 = vld [vmem:[#allocation9 + $0xd0] sm:$0xff]
    %v613 = vld [vmem:[#allocation9 + $0xd8] sm:$0xff]
    %v614 = vld [vmem:[#allocation9 + $0xe0] sm:$0xff]
    %v615 = vld [vmem:[#allocation9 + $0xe8] sm:$0xff]
    %v616 = vld [vmem:[#allocation9 + $0xf0] sm:$0xff]
    %v617 = vld [vmem:[#allocation9 + $0xf8] sm:$0xff]
    %v618 = vld [vmem:[#allocation9 + $0x100] sm:$0xff]
    %v619 = vld [vmem:[#allocation9 + $0x108] sm:$0xff]
    %v620 = vld [vmem:[#allocation9 + $0x110] sm:$0xff]
    %v621 = vld [vmem:[#allocation9 + $0x118] sm:$0xff]
    %v622 = vld [vmem:[#allocation9 + $0x120] sm:$0xff]
    %v623 = vld [vmem:[#allocation9 + $0x128] sm:$0xff]
    %v624 = vld [vmem:[#allocation9 + $0x130] sm:$0xff]
    %v625 = vld [vmem:[#allocation9 + $0x138] sm:$0xff]
    %v626 = vld [vmem:[#allocation9 + $0x140] sm:$0xff]
    %v627 = vld [vmem:[#allocation9 + $0x148] sm:$0xff]
    %v628 = vld [vmem:[#allocation9 + $0x150] sm:$0xff]
    %v629 = vld [vmem:[#allocation9 + $0x158] sm:$0xff]
    %v630 = vld [vmem:[#allocation9 + $0x160] sm:$0xff]
    %v631 = vld [vmem:[#allocation9 + $0x168] sm:$0xff]
    %v632 = vld [vmem:[#allocation9 + $0x170] sm:$0xff]
    %v633 = vld [vmem:[#allocation9 + $0x178] sm:$0xff]
    %v634 = vld [vmem:[%s9] sm:$0x3f]
    %v636 = vlaneseq
    %v637 = vshrl.u32 %v636, 7
    %v638 = vsub.s32 0, %v637
    %v639 = vrot.slane %v634, %v638
    %v640 = vlaneseq
    %v641 = vshrl.u32 %v640, 7
    %v642 = vsub.s32 1, %v641
    %v643 = vrot.slane %v634, %v642
    %v644 = vlaneseq
    %v645 = vshrl.u32 %v644, 7
    %v646 = vsub.s32 2, %v645
    %v647 = vrot.slane %v634, %v646
    %v648 = vlaneseq
    %v649 = vshrl.u32 %v648, 7
    %v650 = vsub.s32 3, %v649
    %v651 = vrot.slane %v634, %v650
    %v652 = vlaneseq
    %v653 = vshrl.u32 %v652, 7
    %v654 = vsub.s32 4, %v653
    %v655 = vrot.slane %v634, %v654
    %v656 = vlaneseq
    %v657 = vshrl.u32 %v656, 7
    %v658 = vsub.s32 5, %v657
    %v659 = vrot.slane %v634, %v658
    %v714 = vunpack.c.l.b16 %v586
    %v715 = vunpack.c.h.b16 %v586
    %v716 = vunpack.c.l.b16 %v587
    %v717 = vunpack.c.h.b16 %v587
    %v718 = vunpack.c.l.b16 %v588
    %v719 = vunpack.c.h.b16 %v588
    %v720 = vunpack.c.l.b16 %v589
    %v721 = vunpack.c.h.b16 %v589
    %v722 = vunpack.c.l.b16 %v590
    %v723 = vunpack.c.h.b16 %v590
    %v724 = vunpack.c.l.b16 %v591
    %v725 = vunpack.c.h.b16 %v591
    %v726 = vunpack.c.l.b16 %v592
    %v727 = vunpack.c.h.b16 %v592
    %v728 = vunpack.c.l.b16 %v593
    %v729 = vunpack.c.h.b16 %v593
    %v730 = vunpack.c.l.b16 %v594
    %v731 = vunpack.c.h.b16 %v594
    %v732 = vunpack.c.l.b16 %v595
    %v733 = vunpack.c.h.b16 %v595
    %v734 = vunpack.c.l.b16 %v596
    %v735 = vunpack.c.h.b16 %v596
    %v736 = vunpack.c.l.b16 %v597
    %v737 = vunpack.c.h.b16 %v597
    %v738 = vunpack.c.l.b16 %v598
    %v739 = vunpack.c.h.b16 %v598
    %v740 = vunpack.c.l.b16 %v599
    %v741 = vunpack.c.h.b16 %v599
    %v742 = vunpack.c.l.b16 %v600
    %v743 = vunpack.c.h.b16 %v600
    %v744 = vunpack.c.l.b16 %v601
    %v745 = vunpack.c.h.b16 %v601
    %v746 = vunpack.c.l.b16 %v602
    %v747 = vunpack.c.h.b16 %v602
    %v748 = vunpack.c.l.b16 %v603
    %v749 = vunpack.c.h.b16 %v603
    %v750 = vunpack.c.l.b16 %v604
    %v751 = vunpack.c.h.b16 %v604
    %v752 = vunpack.c.l.b16 %v605
    %v753 = vunpack.c.h.b16 %v605
    %v754 = vunpack.c.l.b16 %v606
    %v755 = vunpack.c.h.b16 %v606
    %v756 = vunpack.c.l.b16 %v607
    %v757 = vunpack.c.h.b16 %v607
    %v758 = vunpack.c.l.b16 %v608
    %v759 = vunpack.c.h.b16 %v608
    %v760 = vunpack.c.l.b16 %v609
    %v761 = vunpack.c.h.b16 %v609
    %v762 = vunpack.c.l.b16 %v610
    %v763 = vunpack.c.h.b16 %v610
    %v764 = vunpack.c.l.b16 %v611
    %v765 = vunpack.c.h.b16 %v611
    %v766 = vunpack.c.l.b16 %v612
    %v767 = vunpack.c.h.b16 %v612
    %v768 = vunpack.c.l.b16 %v613
    %v769 = vunpack.c.h.b16 %v613
    %v770 = vunpack.c.l.b16 %v614
    %v771 = vunpack.c.h.b16 %v614
    %v772 = vunpack.c.l.b16 %v615
    %v773 = vunpack.c.h.b16 %v615
    %v774 = vunpack.c.l.b16 %v616
    %v775 = vunpack.c.h.b16 %v616
    %v776 = vunpack.c.l.b16 %v617
    %v777 = vunpack.c.h.b16 %v617
    %v778 = vunpack.c.l.b16 %v618
    %v779 = vunpack.c.h.b16 %v618
    %v780 = vunpack.c.l.b16 %v619
    %v781 = vunpack.c.h.b16 %v619
    %v782 = vunpack.c.l.b16 %v620
    %v783 = vunpack.c.h.b16 %v620
    %v784 = vunpack.c.l.b16 %v621
    %v785 = vunpack.c.h.b16 %v621
    %v786 = vunpack.c.l.b16 %v622
    %v787 = vunpack.c.h.b16 %v622
    %v788 = vunpack.c.l.b16 %v623
    %v789 = vunpack.c.h.b16 %v623
    %v790 = vunpack.c.l.b16 %v624
    %v791 = vunpack.c.h.b16 %v624
    %v792 = vunpack.c.l.b16 %v625
    %v793 = vunpack.c.h.b16 %v625
    %v794 = vunpack.c.l.b16 %v626
    %v795 = vunpack.c.h.b16 %v626
    %v796 = vunpack.c.l.b16 %v627
    %v797 = vunpack.c.h.b16 %v627
    %v798 = vunpack.c.l.b16 %v628
    %v799 = vunpack.c.h.b16 %v628
    %v800 = vunpack.c.l.b16 %v629
    %v801 = vunpack.c.h.b16 %v629
    %v802 = vunpack.c.l.b16 %v630
    %v803 = vunpack.c.h.b16 %v630
    %v804 = vunpack.c.l.b16 %v631
    %v805 = vunpack.c.h.b16 %v631
    %v806 = vunpack.c.l.b16 %v632
    %v807 = vunpack.c.h.b16 %v632
    %v808 = vunpack.c.l.b16 %v633
    %v809 = vunpack.c.h.b16 %v633
    %v810 = vpack.c.b16 %v720, %v714
    %v811 = vpack.c.b16 %v721, %v715
    %v812 = vpack.c.b16 %v722, %v716
    %v813 = vpack.c.b16 %v723, %v717
    %v814 = vpack.c.b16 %v724, %v718
    %v815 = vpack.c.b16 %v725, %v719
    %v816 = vpack.c.b16 %v732, %v726
    %v817 = vpack.c.b16 %v733, %v727
    %v818 = vpack.c.b16 %v734, %v728
    %v819 = vpack.c.b16 %v735, %v729
    %v820 = vpack.c.b16 %v736, %v730
    %v821 = vpack.c.b16 %v737, %v731
    %v822 = vpack.c.b16 %v744, %v738
    %v823 = vpack.c.b16 %v745, %v739
    %v824 = vpack.c.b16 %v746, %v740
    %v825 = vpack.c.b16 %v747, %v741
    %v826 = vpack.c.b16 %v748, %v742
    %v827 = vpack.c.b16 %v749, %v743
    %v828 = vpack.c.b16 %v756, %v750
    %v829 = vpack.c.b16 %v757, %v751
    %v830 = vpack.c.b16 %v758, %v752
    %v831 = vpack.c.b16 %v759, %v753
    %v832 = vpack.c.b16 %v760, %v754
    %v833 = vpack.c.b16 %v761, %v755
    %v834 = vpack.c.b16 %v768, %v762
    %v835 = vpack.c.b16 %v769, %v763
    %v836 = vpack.c.b16 %v770, %v764
    %v837 = vpack.c.b16 %v771, %v765
    %v838 = vpack.c.b16 %v772, %v766
    %v839 = vpack.c.b16 %v773, %v767
    %v840 = vpack.c.b16 %v780, %v774
    %v841 = vpack.c.b16 %v781, %v775
    %v842 = vpack.c.b16 %v782, %v776
    %v843 = vpack.c.b16 %v783, %v777
    %v844 = vpack.c.b16 %v784, %v778
    %v845 = vpack.c.b16 %v785, %v779
    %v846 = vpack.c.b16 %v792, %v786
    %v847 = vpack.c.b16 %v793, %v787
    %v848 = vpack.c.b16 %v794, %v788
    %v849 = vpack.c.b16 %v795, %v789
    %v850 = vpack.c.b16 %v796, %v790
    %v851 = vpack.c.b16 %v797, %v791
    %v852 = vpack.c.b16 %v804, %v798
    %v853 = vpack.c.b16 %v805, %v799
    %v854 = vpack.c.b16 %v806, %v800
    %v855 = vpack.c.b16 %v807, %v801
    %v856 = vpack.c.b16 %v808, %v802
    %v857 = vpack.c.b16 %v809, %v803
    %906 = vmatprep.subr.bf16.mxu0 %v811
    %907 = vmatpush1.bf16.msra.mxu0 %v810
    %908 = vmatprep.subr.bf16.mxu0 %v817
    %909 = vmatpush1.bf16.msra.mxu0 %v816
    %910 = vmatprep.subr.bf16.mxu0 %v823
    %911 = vmatpush1.bf16.msra.mxu0 %v822
    %912 = vmatprep.subr.bf16.mxu0 %v829
    %913 = vmatpush1.bf16.msra.mxu0 %v828
    %914 = vmatprep.subr.bf16.mxu0 %v835
    %915 = vmatpush1.bf16.msra.mxu0 %v834
    %916 = vmatprep.subr.bf16.mxu0 %v841
    %917 = vmatpush1.bf16.msra.mxu0 %v840
    %918 = vmatprep.subr.bf16.mxu0 %v847
    %919 = vmatpush1.bf16.msra.mxu0 %v846
    %920 = vmatprep.subr.bf16.mxu0 %v853
    %921 = vmatpush1.bf16.msra.mxu0 %v852
    %922 = vmatprep.subr.bf16.mxu0 0
    %923 = vmatpush1.bf16.msra.mxu0 0
    %924 = vmatprep.subr.bf16.mxu0 0
    %925 = vmatpush1.bf16.msra.mxu0 0
    %926 = vmatprep.subr.bf16.mxu0 0
    %927 = vmatpush1.bf16.msra.mxu0 0
    %928 = vmatprep.subr.bf16.mxu0 0
    %929 = vmatpush1.bf16.msra.mxu0 0
    %930 = vmatprep.subr.bf16.mxu0 0
    %931 = vmatpush1.bf16.msra.mxu0 0
    %932 = vmatprep.subr.bf16.mxu0 0
    %933 = vmatpush1.bf16.msra.mxu0 0
    %934 = vmatprep.subr.bf16.mxu0 0
    %935 = vmatpush1.bf16.msra.mxu0 0
    %936 = vmatprep.subr.bf16.mxu0 0
    %937 = vmatpush1.bf16.msra.mxu0 0
    %938 = vmatprep.mubr.bf16.mxu0 0
    %939 = vmatmul.mubr.bf16.gmra.mrb[0].mxu0 %v582
    %v940 = vpop.f32.mrb[0].mxu0
    %v941 = vadd.f32 %v639, %v940
    %v942 = vpop.f32.mrb[0].mxu0
    %v943 = vadd.f32 %v643, %v942
    %v944 = vpop.f32.mrb[0].mxu0
    %v945 = vadd.f32 %v639, %v944
    %v946 = vpop.f32.mrb[0].mxu0
    %v947 = vadd.f32 %v643, %v946
    %948 = vmatprep.mubr.bf16.mxu0 0
    %949 = vmatmul.mubr.bf16.gmra.mrb[0].mxu0 %v583
    %v950 = vpop.f32.mrb[0].mxu0
    %v951 = vadd.f32 %v639, %v950
    %v952 = vpop.f32.mrb[0].mxu0
    %v953 = vadd.f32 %v643, %v952
    %v954 = vpop.f32.mrb[0].mxu0
    %v955 = vadd.f32 %v639, %v954
    %v956 = vpop.f32.mrb[0].mxu0
    %v957 = vadd.f32 %v643, %v956
    %958 = vmatprep.mubr.bf16.mxu0 0
    %959 = vmatmul.mubr.bf16.gmra.mrb[0].mxu0 %v584
    %v960 = vpop.f32.mrb[0].mxu0
    %v961 = vadd.f32 %v639, %v960
    %v962 = vpop.f32.mrb[0].mxu0
    %v963 = vadd.f32 %v643, %v962
    %v964 = vpop.f32.mrb[0].mxu0
    %v965 = vadd.f32 %v639, %v964
    %v966 = vpop.f32.mrb[0].mxu0
    %v967 = vadd.f32 %v643, %v966
    %968 = vmatprep.mubr.bf16.mxu0 0
    %969 = vmatmul.mubr.bf16.gmra.mrb[0].mxu0 %v585
    %v970 = vpop.f32.mrb[0].mxu0
    %v971 = vadd.f32 %v639, %v970
    %v972 = vpop.f32.mrb[0].mxu0
    %v973 = vadd.f32 %v643, %v972
    %v974 = vpop.f32.mrb[0].mxu0
    %v975 = vadd.f32 %v639, %v974
    %v976 = vpop.f32.mrb[0].mxu0
    %v977 = vadd.f32 %v643, %v976
    %978 = vdwg.mxu0
    %979 = vmatprep.subr.bf16.mxu0 %v813
    %980 = vmatpush1.bf16.msra.mxu0 %v812
    %981 = vmatprep.subr.bf16.mxu0 %v819
    %982 = vmatpush1.bf16.msra.mxu0 %v818
    %983 = vmatprep.subr.bf16.mxu0 %v825
    %984 = vmatpush1.bf16.msra.mxu0 %v824
    %985 = vmatprep.subr.bf16.mxu0 %v831
    %986 = vmatpush1.bf16.msra.mxu0 %v830
    %987 = vmatprep.subr.bf16.mxu0 %v837
    %988 = vmatpush1.bf16.msra.mxu0 %v836
    %989 = vmatprep.subr.bf16.mxu0 %v843
    %990 = vmatpush1.bf16.msra.mxu0 %v842
    %991 = vmatprep.subr.bf16.mxu0 %v849
    %992 = vmatpush1.bf16.msra.mxu0 %v848
    %993 = vmatprep.subr.bf16.mxu0 %v855
    %994 = vmatpush1.bf16.msra.mxu0 %v854
    %995 = vmatprep.subr.bf16.mxu0 0
    %996 = vmatpush1.bf16.msra.mxu0 0
    %997 = vmatprep.subr.bf16.mxu0 0
    %998 = vmatpush1.bf16.msra.mxu0 0
    %999 = vmatprep.subr.bf16.mxu0 0
    %1000 = vmatpush1.bf16.msra.mxu0 0
    %1001 = vmatprep.subr.bf16.mxu0 0
    %1002 = vmatpush1.bf16.msra.mxu0 0
    %1003 = vmatprep.subr.bf16.mxu0 0
    %1004 = vmatpush1.bf16.msra.mxu0 0
    %1005 = vmatprep.subr.bf16.mxu0 0
    %1006 = vmatpush1.bf16.msra.mxu0 0
    %1007 = vmatprep.subr.bf16.mxu0 0
    %1008 = vmatpush1.bf16.msra.mxu0 0
    %1009 = vmatprep.subr.bf16.mxu0 0
    %1010 = vmatpush1.bf16.msra.mxu0 0
    %1011 = vmatprep.mubr.bf16.mxu0 0
    %1012 = vmatmul.mubr.bf16.gmra.mrb[0].mxu0 %v582
    %v1013 = vpop.f32.mrb[0].mxu0
    %v1014 = vadd.f32 %v647, %v1013
    %v1015 = vpop.f32.mrb[0].mxu0
    %v1016 = vadd.f32 %v651, %v1015
    %v1017 = vpop.f32.mrb[0].mxu0
    %v1018 = vadd.f32 %v647, %v1017
    %v1019 = vpop.f32.mrb[0].mxu0
    %v1020 = vadd.f32 %v651, %v1019
    %1021 = vmatprep.mubr.bf16.mxu0 0
    %1022 = vmatmul.mubr.bf16.gmra.mrb[0].mxu0 %v583
    %v1023 = vpop.f32.mrb[0].mxu0
    %v1024 = vadd.f32 %v647, %v1023
    %v1025 = vpop.f32.mrb[0].mxu0
    %v1026 = vadd.f32 %v651, %v1025
    %v1027 = vpop.f32.mrb[0].mxu0
    %v1028 = vadd.f32 %v647, %v1027
    %v1029 = vpop.f32.mrb[0].mxu0
    %v1030 = vadd.f32 %v651, %v1029
    %1031 = vmatprep.mubr.bf16.mxu0 0
    %1032 = vmatmul.mubr.bf16.gmra.mrb[0].mxu0 %v584
    %v1033 = vpop.f32.mrb[0].mxu0
    %v1034 = vadd.f32 %v647, %v1033
    %v1035 = vpop.f32.mrb[0].mxu0
    %v1036 = vadd.f32 %v651, %v1035
    %v1037 = vpop.f32.mrb[0].mxu0
    %v1038 = vadd.f32 %v647, %v1037
    %v1039 = vpop.f32.mrb[0].mxu0
    %v1040 = vadd.f32 %v651, %v1039
    %1041 = vmatprep.mubr.bf16.mxu0 0
    %1042 = vmatmul.mubr.bf16.gmra.mrb[0].mxu0 %v585
    %v1043 = vpop.f32.mrb[0].mxu0
    %v1044 = vadd.f32 %v647, %v1043
    %v1045 = vpop.f32.mrb[0].mxu0
    %v1046 = vadd.f32 %v651, %v1045
    %v1047 = vpop.f32.mrb[0].mxu0
    %v1048 = vadd.f32 %v647, %v1047
    %v1049 = vpop.f32.mrb[0].mxu0
    %v1050 = vadd.f32 %v651, %v1049
    %1051 = vdwg.mxu0
    %1052 = vmatprep.subr.bf16.mxu0 %v815
    %1053 = vmatpush1.bf16.msra.mxu0 %v814
    %1054 = vmatprep.subr.bf16.mxu0 %v821
    %1055 = vmatpush1.bf16.msra.mxu0 %v820
    %1056 = vmatprep.subr.bf16.mxu0 %v827
    %1057 = vmatpush1.bf16.msra.mxu0 %v826
    %1058 = vmatprep.subr.bf16.mxu0 %v833
    %1059 = vmatpush1.bf16.msra.mxu0 %v832
    %1060 = vmatprep.subr.bf16.mxu0 %v839
    %1061 = vmatpush1.bf16.msra.mxu0 %v838
    %1062 = vmatprep.subr.bf16.mxu0 %v845
    %1063 = vmatpush1.bf16.msra.mxu0 %v844
    %1064 = vmatprep.subr.bf16.mxu0 %v851
    %1065 = vmatpush1.bf16.msra.mxu0 %v850
    %1066 = vmatprep.subr.bf16.mxu0 %v857
    %1067 = vmatpush1.bf16.msra.mxu0 %v856
    %1068 = vmatprep.subr.bf16.mxu0 0
    %1069 = vmatpush1.bf16.msra.mxu0 0
    %1070 = vmatprep.subr.bf16.mxu0 0
    %1071 = vmatpush1.bf16.msra.mxu0 0
    %1072 = vmatprep.subr.bf16.mxu0 0
    %1073 = vmatpush1.bf16.msra.mxu0 0
    %1074 = vmatprep.subr.bf16.mxu0 0
    %1075 = vmatpush1.bf16.msra.mxu0 0
    %1076 = vmatprep.subr.bf16.mxu0 0
    %1077 = vmatpush1.bf16.msra.mxu0 0
    %1078 = vmatprep.subr.bf16.mxu0 0
    %1079 = vmatpush1.bf16.msra.mxu0 0
    %1080 = vmatprep.subr.bf16.mxu0 0
    %1081 = vmatpush1.bf16.msra.mxu0 0
    %1082 = vmatprep.subr.bf16.mxu0 0
    %1083 = vmatpush1.bf16.msra.mxu0 0
    %1084 = vmatprep.mubr.bf16.mxu0 0
    %1085 = vmatmul.mubr.bf16.gmra.mrb[0].mxu0 %v582
    %v1086 = vpop.f32.mrb[0].mxu0
    %v1087 = vadd.f32 %v655, %v1086
    %v1088 = vpop.f32.mrb[0].mxu0
    %v1089 = vadd.f32 %v659, %v1088
    %v1090 = vpop.f32.mrb[0].mxu0
    %v1091 = vadd.f32 %v655, %v1090
    %v1092 = vpop.f32.mrb[0].mxu0
    %v1093 = vadd.f32 %v659, %v1092
    %1094 = vmatprep.mubr.bf16.mxu0 0
    %1095 = vmatmul.mubr.bf16.gmra.mrb[0].mxu0 %v583
    %v1096 = vpop.f32.mrb[0].mxu0
    %v1097 = vadd.f32 %v655, %v1096
    %v1098 = vpop.f32.mrb[0].mxu0
    %v1099 = vadd.f32 %v659, %v1098
    %v1100 = vpop.f32.mrb[0].mxu0
    %v1101 = vadd.f32 %v655, %v1100
    %v1102 = vpop.f32.mrb[0].mxu0
    %v1103 = vadd.f32 %v659, %v1102
    %1104 = vmatprep.mubr.bf16.mxu0 0
    %1105 = vmatmul.mubr.bf16.gmra.mrb[0].mxu0 %v584
    %v1106 = vpop.f32.mrb[0].mxu0
    %v1107 = vadd.f32 %v655, %v1106
    %v1108 = vpop.f32.mrb[0].mxu0
    %v1109 = vadd.f32 %v659, %v1108
    %v1110 = vpop.f32.mrb[0].mxu0
    %v1111 = vadd.f32 %v655, %v1110
    %v1112 = vpop.f32.mrb[0].mxu0
    %v1113 = vadd.f32 %v659, %v1112
    %1114 = vmatprep.mubr.bf16.mxu0 0
    %1115 = vmatmul.mubr.bf16.gmra.mrb[0].mxu0 %v585
    %v1116 = vpop.f32.mrb[0].mxu0
    %v1117 = vadd.f32 %v655, %v1116
    %v1118 = vpop.f32.mrb[0].mxu0
    %v1119 = vadd.f32 %v659, %v1118
    %v1120 = vpop.f32.mrb[0].mxu0
    %v1121 = vadd.f32 %v655, %v1120
    %v1122 = vpop.f32.mrb[0].mxu0
    %v1123 = vadd.f32 %v659, %v1122
    %1124 = vdwg.mxu0
    %1125 = vst [vmem:[#allocation2] sm:$0xff] %v941
    %1126 = vst [vmem:[#allocation2 + $0x8] sm:$0xff] %v943
    %1127 = vst [vmem:[#allocation2 + $0x10] sm:$0xff] %v1014
    %1128 = vst [vmem:[#allocation2 + $0x18] sm:$0xff] %v1016
    %1129 = vst [vmem:[#allocation2 + $0x20] sm:$0xff] %v1087
    %1130 = vst [vmem:[#allocation2 + $0x28] sm:$0xff] %v1089
    %1131 = vst [vmem:[#allocation2 + $0x30] sm:$0xff] %v945
    %1132 = vst [vmem:[#allocation2 + $0x38] sm:$0xff] %v947
    %1133 = vst [vmem:[#allocation2 + $0x40] sm:$0xff] %v1018
    %1134 = vst [vmem:[#allocation2 + $0x48] sm:$0xff] %v1020
    %1135 = vst [vmem:[#allocation2 + $0x50] sm:$0xff] %v1091
    %1136 = vst [vmem:[#allocation2 + $0x58] sm:$0xff] %v1093
    %1137 = vst [vmem:[#allocation2 + $0x60] sm:$0xff] %v951
    %1138 = vst [vmem:[#allocation2 + $0x68] sm:$0xff] %v953
    %1139 = vst [vmem:[#allocation2 + $0x70] sm:$0xff] %v1024
    %1140 = vst [vmem:[#allocation2 + $0x78] sm:$0xff] %v1026
    %1141 = vst [vmem:[#allocation2 + $0x80] sm:$0xff] %v1097
    %1142 = vst [vmem:[#allocation2 + $0x88] sm:$0xff] %v1099
    %1143 = vst [vmem:[#allocation2 + $0x90] sm:$0xff] %v955
    %1144 = vst [vmem:[#allocation2 + $0x98] sm:$0xff] %v957
    %1145 = vst [vmem:[#allocation2 + $0xa0] sm:$0xff] %v1028
    %1146 = vst [vmem:[#allocation2 + $0xa8] sm:$0xff] %v1030
    %1147 = vst [vmem:[#allocation2 + $0xb0] sm:$0xff] %v1101
    %1148 = vst [vmem:[#allocation2 + $0xb8] sm:$0xff] %v1103
    %1149 = vst [vmem:[#allocation2 + $0xc0] sm:$0xff] %v961
    %1150 = vst [vmem:[#allocation2 + $0xc8] sm:$0xff] %v963
    %1151 = vst [vmem:[#allocation2 + $0xd0] sm:$0xff] %v1034
    %1152 = vst [vmem:[#allocation2 + $0xd8] sm:$0xff] %v1036
    %1153 = vst [vmem:[#allocation2 + $0xe0] sm:$0xff] %v1107
    %1154 = vst [vmem:[#allocation2 + $0xe8] sm:$0xff] %v1109
    %1155 = vst [vmem:[#allocation2 + $0xf0] sm:$0xff] %v965
    %1156 = vst [vmem:[#allocation2 + $0xf8] sm:$0xff] %v967
    %1157 = vst [vmem:[#allocation2 + $0x100] sm:$0xff] %v1038
    %1158 = vst [vmem:[#allocation2 + $0x108] sm:$0xff] %v1040
    %1159 = vst [vmem:[#allocation2 + $0x110] sm:$0xff] %v1111
    %1160 = vst [vmem:[#allocation2 + $0x118] sm:$0xff] %v1113
    %1161 = vst [vmem:[#allocation2 + $0x120] sm:$0xff] %v971
    %1162 = vst [vmem:[#allocation2 + $0x128] sm:$0xff] %v973
    %1163 = vst [vmem:[#allocation2 + $0x130] sm:$0xff] %v1044
    %1164 = vst [vmem:[#allocation2 + $0x138] sm:$0xff] %v1046
    %1165 = vst [vmem:[#allocation2 + $0x140] sm:$0xff] %v1117
    %1166 = vst [vmem:[#allocation2 + $0x148] sm:$0xff] %v1119
    %1167 = vst [vmem:[#allocation2 + $0x150] sm:$0xff] %v975
    %1168 = vst [vmem:[#allocation2 + $0x158] sm:$0xff] %v977
    %1169 = vst [vmem:[#allocation2 + $0x160] sm:$0xff] %v1048
    %1170 = vst [vmem:[#allocation2 + $0x168] sm:$0xff] %v1050
    %1171 = vst [vmem:[#allocation2 + $0x170] sm:$0xff] %v1121
    %1172 = vst [vmem:[#allocation2 + $0x178] sm:$0xff] %v1123
    %v1173 = vld [vmem:[%s1] sm:$0xff]
    %v1174 = vld [vmem:[%s10] sm:$0xff]
    %v1175 = vld [vmem:[%s10 + $0x8] sm:$0xf]
    %v1176 = vld [vmem:[%s10 + $0xc] sm:$0xff]
    %v1177 = vld [vmem:[%s10 + $0x14] sm:$0xf]
    %v1178 = vld [vmem:[%s10 + $0x18] sm:$0xff]
    %v1179 = vld [vmem:[%s10 + $0x20] sm:$0xf]
    %v1180 = vld [vmem:[%s10 + $0x24] sm:$0xff]
    %v1181 = vld [vmem:[%s10 + $0x2c] sm:$0xf]
    %v1182 = vld [vmem:[%s10 + $0x30] sm:$0xff]
    %v1183 = vld [vmem:[%s10 + $0x38] sm:$0xf]
    %v1184 = vld [vmem:[%s10 + $0x3c] sm:$0xff]
    %v1185 = vld [vmem:[%s10 + $0x44] sm:$0xf]
    %v1186 = vld [vmem:[%s10 + $0x48] sm:$0xff]
    %v1187 = vld [vmem:[%s10 + $0x50] sm:$0xf]
    %v1188 = vld [vmem:[%s10 + $0x54] sm:$0xff]
    %v1189 = vld [vmem:[%s10 + $0x5c] sm:$0xf]
    %v1190 = vld [vmem:[%s10 + $0x60] sm:$0xff]
    %v1191 = vld [vmem:[%s10 + $0x68] sm:$0xf]
    %v1192 = vld [vmem:[%s10 + $0x6c] sm:$0xff]
    %v1193 = vld [vmem:[%s10 + $0x74] sm:$0xf]
    %v1194 = vld [vmem:[%s10 + $0x78] sm:$0xff]
    %v1195 = vld [vmem:[%s10 + $0x80] sm:$0xf]
    %v1196 = vld [vmem:[%s10 + $0x84] sm:$0xff]
    %v1197 = vld [vmem:[%s10 + $0x8c] sm:$0xf]
    %v1198 = vld [vmem:[%s10 + $0x90] sm:$0xff]
    %v1199 = vld [vmem:[%s10 + $0x98] sm:$0xf]
    %v1200 = vld [vmem:[%s10 + $0x9c] sm:$0xff]
    %v1201 = vld [vmem:[%s10 + $0xa4] sm:$0xf]
    %v1202 = vld [vmem:[%s10 + $0xa8] sm:$0xff]
    %v1203 = vld [vmem:[%s10 + $0xb0] sm:$0xf]
    %v1204 = vld [vmem:[%s10 + $0xb4] sm:$0xff]
    %v1205 = vld [vmem:[%s10 + $0xbc] sm:$0xf]
    %v1206 = vld [vmem:[#allocation11] sm:$0xff]
    %v1207 = vld [vmem:[#allocation11 + $0x8] sm:$0xf]
    %v1208 = vld [vmem:[#allocation11 + $0xc] sm:$0xff]
    %v1209 = vld [vmem:[#allocation11 + $0x14] sm:$0xf]
    %v1210 = vld [vmem:[#allocation11 + $0x18] sm:$0xff]
    %v1211 = vld [vmem:[#allocation11 + $0x20] sm:$0xf]
    %v1212 = vld [vmem:[#allocation11 + $0x24] sm:$0xff]
    %v1213 = vld [vmem:[#allocation11 + $0x2c] sm:$0xf]
    %v1214 = vld [vmem:[#allocation11 + $0x30] sm:$0xff]
    %v1215 = vld [vmem:[#allocation11 + $0x38] sm:$0xf]
    %v1216 = vld [vmem:[#allocation11 + $0x3c] sm:$0xff]
    %v1217 = vld [vmem:[#allocation11 + $0x44] sm:$0xf]
    %v1218 = vld [vmem:[#allocation11 + $0x48] sm:$0xff]
    %v1219 = vld [vmem:[#allocation11 + $0x50] sm:$0xf]
    %v1220 = vld [vmem:[#allocation11 + $0x54] sm:$0xff]
    %v1221 = vld [vmem:[#allocation11 + $0x5c] sm:$0xf]
    %v1222 = vld [vmem:[#allocation11 + $0x60] sm:$0xff]
    %v1223 = vld [vmem:[#allocation11 + $0x68] sm:$0xf]
    %v1224 = vld [vmem:[#allocation11 + $0x6c] sm:$0xff]
    %v1225 = vld [vmem:[#allocation11 + $0x74] sm:$0xf]
    %v1226 = vld [vmem:[#allocation11 + $0x78] sm:$0xff]
    %v1227 = vld [vmem:[#allocation11 + $0x80] sm:$0xf]
    %v1228 = vld [vmem:[#allocation11 + $0x84] sm:$0xff]
    %v1229 = vld [vmem:[#allocation11 + $0x8c] sm:$0xf]
    %v1230 = vld [vmem:[#allocation11 + $0x90] sm:$0xff]
    %v1231 = vld [vmem:[#allocation11 + $0x98] sm:$0xf]
    %v1232 = vld [vmem:[#allocation11 + $0x9c] sm:$0xff]
    %v1233 = vld [vmem:[#allocation11 + $0xa4] sm:$0xf]
    %v1234 = vld [vmem:[#allocation11 + $0xa8] sm:$0xff]
    %v1235 = vld [vmem:[#allocation11 + $0xb0] sm:$0xf]
    %v1236 = vld [vmem:[#allocation11 + $0xb4] sm:$0xff]
    %v1237 = vld [vmem:[#allocation11 + $0xbc] sm:$0xf]
    %v1238 = vld [vmem:[%s11] sm:$0x7]
    %v1239 = vld [vmem:[%s13] sm:$0x7]
    %v1240 = vld [vmem:[#allocation2] sm:$0xff]
    %v1241 = vld [vmem:[#allocation2 + $0x8] sm:$0xff]
    %v1242 = vld [vmem:[#allocation2 + $0x10] sm:$0xff]
    %v1244 = vlaneseq
    %v1245 = vshrl.u32 %v1244, 7
    %v1246 = vsub.s32 0, %v1245
    %v1247 = vrot.slane %v1238, %v1246
    %v1248 = vlaneseq
    %v1249 = vshrl.u32 %v1248, 7
    %v1250 = vsub.s32 1, %v1249
    %v1251 = vrot.slane %v1238, %v1250
    %v1252 = vlaneseq
    %v1253 = vshrl.u32 %v1252, 7
    %v1254 = vsub.s32 2, %v1253
    %v1255 = vrot.slane %v1238, %v1254
    %v1291 = vunpack.c.l.b16 %v1174
    %v1292 = vunpack.c.h.b16 %v1174
    %v1293 = vunpack.c.l.b16 %v1175
    %v1294 = vunpack.c.l.b16 %v1176
    %v1295 = vunpack.c.h.b16 %v1176
    %v1296 = vunpack.c.l.b16 %v1177
    %v1297 = vunpack.c.l.b16 %v1178
    %v1298 = vunpack.c.h.b16 %v1178
    %v1299 = vunpack.c.l.b16 %v1179
    %v1300 = vunpack.c.l.b16 %v1180
    %v1301 = vunpack.c.h.b16 %v1180
    %v1302 = vunpack.c.l.b16 %v1181
    %v1303 = vunpack.c.l.b16 %v1182
    %v1304 = vunpack.c.h.b16 %v1182
    %v1305 = vunpack.c.l.b16 %v1183
    %v1306 = vunpack.c.l.b16 %v1184
    %v1307 = vunpack.c.h.b16 %v1184
    %v1308 = vunpack.c.l.b16 %v1185
    %v1309 = vunpack.c.l.b16 %v1186
    %v1310 = vunpack.c.h.b16 %v1186
    %v1311 = vunpack.c.l.b16 %v1187
    %v1312 = vunpack.c.l.b16 %v1188
    %v1313 = vunpack.c.h.b16 %v1188
    %v1314 = vunpack.c.l.b16 %v1189
    %v1315 = vunpack.c.l.b16 %v1190
    %v1316 = vunpack.c.h.b16 %v1190
    %v1317 = vunpack.c.l.b16 %v1191
    %v1318 = vunpack.c.l.b16 %v1192
    %v1319 = vunpack.c.h.b16 %v1192
    %v1320 = vunpack.c.l.b16 %v1193
    %v1321 = vunpack.c.l.b16 %v1194
    %v1322 = vunpack.c.h.b16 %v1194
    %v1323 = vunpack.c.l.b16 %v1195
    %v1324 = vunpack.c.l.b16 %v1196
    %v1325 = vunpack.c.h.b16 %v1196
    %v1326 = vunpack.c.l.b16 %v1197
    %v1327 = vunpack.c.l.b16 %v1198
    %v1328 = vunpack.c.h.b16 %v1198
    %v1329 = vunpack.c.l.b16 %v1199
    %v1330 = vunpack.c.l.b16 %v1200
    %v1331 = vunpack.c.h.b16 %v1200
    %v1332 = vunpack.c.l.b16 %v1201
    %v1333 = vunpack.c.l.b16 %v1202
    %v1334 = vunpack.c.h.b16 %v1202
    %v1335 = vunpack.c.l.b16 %v1203
    %v1336 = vunpack.c.l.b16 %v1204
    %v1337 = vunpack.c.h.b16 %v1204
    %v1338 = vunpack.c.l.b16 %v1205
    %v1339 = vpack.c.b16 %v1294, %v1291
    %v1340 = vpack.c.b16 %v1295, %v1292
    %v1341 = vpack.c.b16 %v1296, %v1293
    %v1342 = vpack.c.b16 %v1300, %v1297
    %v1343 = vpack.c.b16 %v1301, %v1298
    %v1344 = vpack.c.b16 %v1302, %v1299
    %v1345 = vpack.c.b16 %v1306, %v1303
    %v1346 = vpack.c.b16 %v1307, %v1304
    %v1347 = vpack.c.b16 %v1308, %v1305
    %v1348 = vpack.c.b16 %v1312, %v1309
    %v1349 = vpack.c.b16 %v1313, %v1310
    %v1350 = vpack.c.b16 %v1314, %v1311
    %v1351 = vpack.c.b16 %v1318, %v1315
    %v1352 = vpack.c.b16 %v1319, %v1316
    %v1353 = vpack.c.b16 %v1320, %v1317
    %v1354 = vpack.c.b16 %v1324, %v1321
    %v1355 = vpack.c.b16 %v1325, %v1322
    %v1356 = vpack.c.b16 %v1326, %v1323
    %v1357 = vpack.c.b16 %v1330, %v1327
    %v1358 = vpack.c.b16 %v1331, %v1328
    %v1359 = vpack.c.b16 %v1332, %v1329
    %v1360 = vpack.c.b16 %v1336, %v1333
    %v1361 = vpack.c.b16 %v1337, %v1334
    %v1362 = vpack.c.b16 %v1338, %v1335
    %1387 = vmatprep.subr.bf16.mxu0 %v1340
    %1388 = vmatpush1.bf16.msra.mxu0 %v1339
    %1389 = vmatprep.subr.bf16.mxu0 %v1343
    %1390 = vmatpush1.bf16.msra.mxu0 %v1342
    %1391 = vmatprep.subr.bf16.mxu0 %v1346
    %1392 = vmatpush1.bf16.msra.mxu0 %v1345
    %1393 = vmatprep.subr.bf16.mxu0 %v1349
    %1394 = vmatpush1.bf16.msra.mxu0 %v1348
    %1395 = vmatprep.subr.bf16.mxu0 %v1352
    %1396 = vmatpush1.bf16.msra.mxu0 %v1351
    %1397 = vmatprep.subr.bf16.mxu0 %v1355
    %1398 = vmatpush1.bf16.msra.mxu0 %v1354
    %1399 = vmatprep.subr.bf16.mxu0 %v1358
    %1400 = vmatpush1.bf16.msra.mxu0 %v1357
    %1401 = vmatprep.subr.bf16.mxu0 %v1361
    %1402 = vmatpush1.bf16.msra.mxu0 %v1360
    %1403 = vmatprep.subr.bf16.mxu0 0
    %1404 = vmatpush1.bf16.msra.mxu0 0
    %1405 = vmatprep.subr.bf16.mxu0 0
    %1406 = vmatpush1.bf16.msra.mxu0 0
    %1407 = vmatprep.subr.bf16.mxu0 0
    %1408 = vmatpush1.bf16.msra.mxu0 0
    %1409 = vmatprep.subr.bf16.mxu0 0
    %1410 = vmatpush1.bf16.msra.mxu0 0
    %1411 = vmatprep.subr.bf16.mxu0 0
    %1412 = vmatpush1.bf16.msra.mxu0 0
    %1413 = vmatprep.subr.bf16.mxu0 0
    %1414 = vmatpush1.bf16.msra.mxu0 0
    %1415 = vmatprep.subr.bf16.mxu0 0
    %1416 = vmatpush1.bf16.msra.mxu0 0
    %1417 = vmatprep.subr.bf16.mxu0 0
    %1418 = vmatpush1.bf16.msra.mxu0 0
    %1419 = vmatprep.mubr.bf16.mxu0 0
    %1420 = vmatmul.mubr.bf16.gmra.mrb[0].mxu0 0
    %v1421 = vpop.f32.mrb[0].mxu0
    %v1422 = vadd.f32 %v1247, %v1421
    %v1423 = vpop.f32.mrb[0].mxu0
    %v1424 = vadd.f32 %v1251, %v1423
    %v1425 = vpop.f32.mrb[0].mxu0
    %v1426 = vpop.f32.mrb[0].mxu0
    %1427 = vdwg.mxu0
    %1428 = vmatprep.subr.bf16.mxu0 0
    %1429 = vmatpush1.bf16.msra.mxu0 %v1341
    %1430 = vmatprep.subr.bf16.mxu0 0
    %1431 = vmatpush1.bf16.msra.mxu0 %v1344
    %1432 = vmatprep.subr.bf16.mxu0 0
    %1433 = vmatpush1.bf16.msra.mxu0 %v1347
    %1434 = vmatprep.subr.bf16.mxu0 0
    %1435 = vmatpush1.bf16.msra.mxu0 %v1350
    %1436 = vmatprep.subr.bf16.mxu0 0
    %1437 = vmatpush1.bf16.msra.mxu0 %v1353
    %1438 = vmatprep.subr.bf16.mxu0 0
    %1439 = vmatpush1.bf16.msra.mxu0 %v1356
    %1440 = vmatprep.subr.bf16.mxu0 0
    %1441 = vmatpush1.bf16.msra.mxu0 %v1359
    %1442 = vmatprep.subr.bf16.mxu0 0
    %1443 = vmatpush1.bf16.msra.mxu0 %v1362
    %1444 = vmatprep.subr.bf16.mxu0 0
    %1445 = vmatpush1.bf16.msra.mxu0 0
    %1446 = vmatprep.subr.bf16.mxu0 0
    %1447 = vmatpush1.bf16.msra.mxu0 0
    %1448 = vmatprep.subr.bf16.mxu0 0
    %1449 = vmatpush1.bf16.msra.mxu0 0
    %1450 = vmatprep.subr.bf16.mxu0 0
    %1451 = vmatpush1.bf16.msra.mxu0 0
    %1452 = vmatprep.subr.bf16.mxu0 0
    %1453 = vmatpush1.bf16.msra.mxu0 0
    %1454 = vmatprep.subr.bf16.mxu0 0
    %1455 = vmatpush1.bf16.msra.mxu0 0
    %1456 = vmatprep.subr.bf16.mxu0 0
    %1457 = vmatpush1.bf16.msra.mxu0 0
    %1458 = vmatprep.subr.bf16.mxu0 0
    %1459 = vmatpush1.bf16.msra.mxu0 0
    %1460 = vmatprep.mubr.bf16.mxu0 0
    %1461 = vmatmul.mubr.bf16.gmra.mrb[0].mxu0 0
    %v1462 = vpop.f32.mrb[0].mxu0
    %v1463 = vadd.f32 %v1255, %v1462
    %v1464 = vpop.f32.mrb[0].mxu0
    %v1465 = vpop.f32.mrb[0].mxu0
    %v1466 = vpop.f32.mrb[0].mxu0
    %1467 = vdwg.mxu0
    %v1468 = vadd.f32 %v1240, %v1422
    %v1469 = vxor.u32 %v1468, 2147483648
    %v1470 = vmul.f32 %v1469, 1.442695
    %v1471 = vpow.pop %v1470
    %v1472 = vadd.f32 %v1471, 1.0
    %v1473 = vrcp.pop %v1472
    %v1474 = vmul.f32 1.0, %v1473
    %v1475 = vadd.f32 %v1241, %v1424
    %v1476 = vxor.u32 %v1475, 2147483648
    %v1477 = vmul.f32 %v1476, 1.442695
    %v1478 = vpow.pop %v1477
    %v1479 = vadd.f32 %v1478, 1.0
    %v1480 = vrcp.pop %v1479
    %v1481 = vmul.f32 1.0, %v1480
    %v1482 = vmul.f32 %v1474, %v1463
    %v1483 = vadd.f32 %v1242, %v1482
    %v1484 = vtanh.pop %v1483
    %v1485 = vsub.f32 0.0, %v1484
    %v1486 = vmul.f32 %v1481, %v1485
    %v1487 = vadd.f32 %v1484, %v1486
    %s1488 = scalar_lea.vmem [#allocation2], 336
    %v1489 = vld [vmem:[%s1488 + $0x18] sm:$0xff]
    %v1490 = vld [vmem:[%s1488 + $0x20] sm:$0xff]
    %v1491 = vld [vmem:[%s1488 + $0x28] sm:$0xff]
    %v1493 = vlaneseq
    %v1494 = vshrl.u32 %v1493, 7
    %v1495 = vsub.s32 0, %v1494
    %v1496 = vrot.slane %v1239, %v1495
    %v1497 = vlaneseq
    %v1498 = vshrl.u32 %v1497, 7
    %v1499 = vsub.s32 1, %v1498
    %v1500 = vrot.slane %v1239, %v1499
    %v1501 = vlaneseq
    %v1502 = vshrl.u32 %v1501, 7
    %v1503 = vsub.s32 2, %v1502
    %v1504 = vrot.slane %v1239, %v1503
    %v1540 = vunpack.c.l.b16 %v1206
    %v1541 = vunpack.c.h.b16 %v1206
    %v1542 = vunpack.c.l.b16 %v1207
    %v1543 = vunpack.c.l.b16 %v1208
    %v1544 = vunpack.c.h.b16 %v1208
    %v1545 = vunpack.c.l.b16 %v1209
    %v1546 = vunpack.c.l.b16 %v1210
    %v1547 = vunpack.c.h.b16 %v1210
    %v1548 = vunpack.c.l.b16 %v1211
    %v1549 = vunpack.c.l.b16 %v1212
    %v1550 = vunpack.c.h.b16 %v1212
    %v1551 = vunpack.c.l.b16 %v1213
    %v1552 = vunpack.c.l.b16 %v1214
    %v1553 = vunpack.c.h.b16 %v1214
    %v1554 = vunpack.c.l.b16 %v1215
    %v1555 = vunpack.c.l.b16 %v1216
    %v1556 = vunpack.c.h.b16 %v1216
    %v1557 = vunpack.c.l.b16 %v1217
    %v1558 = vunpack.c.l.b16 %v1218
    %v1559 = vunpack.c.h.b16 %v1218
    %v1560 = vunpack.c.l.b16 %v1219
    %v1561 = vunpack.c.l.b16 %v1220
    %v1562 = vunpack.c.h.b16 %v1220
    %v1563 = vunpack.c.l.b16 %v1221
    %v1564 = vunpack.c.l.b16 %v1222
    %v1565 = vunpack.c.h.b16 %v1222
    %v1566 = vunpack.c.l.b16 %v1223
    %v1567 = vunpack.c.l.b16 %v1224
    %v1568 = vunpack.c.h.b16 %v1224
    %v1569 = vunpack.c.l.b16 %v1225
    %v1570 = vunpack.c.l.b16 %v1226
    %v1571 = vunpack.c.h.b16 %v1226
    %v1572 = vunpack.c.l.b16 %v1227
    %v1573 = vunpack.c.l.b16 %v1228
    %v1574 = vunpack.c.h.b16 %v1228
    %v1575 = vunpack.c.l.b16 %v1229
    %v1576 = vunpack.c.l.b16 %v1230
    %v1577 = vunpack.c.h.b16 %v1230
    %v1578 = vunpack.c.l.b16 %v1231
    %v1579 = vunpack.c.l.b16 %v1232
    %v1580 = vunpack.c.h.b16 %v1232
    %v1581 = vunpack.c.l.b16 %v1233
    %v1582 = vunpack.c.l.b16 %v1234
    %v1583 = vunpack.c.h.b16 %v1234
    %v1584 = vunpack.c.l.b16 %v1235
    %v1585 = vunpack.c.l.b16 %v1236
    %v1586 = vunpack.c.h.b16 %v1236
    %v1587 = vunpack.c.l.b16 %v1237
    %v1588 = vpack.c.b16 %v1543, %v1540
    %v1589 = vpack.c.b16 %v1544, %v1541
    %v1590 = vpack.c.b16 %v1545, %v1542
    %v1591 = vpack.c.b16 %v1549, %v1546
    %v1592 = vpack.c.b16 %v1550, %v1547
    %v1593 = vpack.c.b16 %v1551, %v1548
    %v1594 = vpack.c.b16 %v1555, %v1552
    %v1595 = vpack.c.b16 %v1556, %v1553
    %v1596 = vpack.c.b16 %v1557, %v1554
    %v1597 = vpack.c.b16 %v1561, %v1558
    %v1598 = vpack.c.b16 %v1562, %v1559
    %v1599 = vpack.c.b16 %v1563, %v1560
    %v1600 = vpack.c.b16 %v1567, %v1564
    %v1601 = vpack.c.b16 %v1568, %v1565
    %v1602 = vpack.c.b16 %v1569, %v1566
    %v1603 = vpack.c.b16 %v1573, %v1570
    %v1604 = vpack.c.b16 %v1574, %v1571
    %v1605 = vpack.c.b16 %v1575, %v1572
    %v1606 = vpack.c.b16 %v1579, %v1576
    %v1607 = vpack.c.b16 %v1580, %v1577
    %v1608 = vpack.c.b16 %v1581, %v1578
    %v1609 = vpack.c.b16 %v1585, %v1582
    %v1610 = vpack.c.b16 %v1586, %v1583
    %v1611 = vpack.c.b16 %v1587, %v1584
    %1636 = vmatprep.subr.bf16.mxu0 %v1589
    %1637 = vmatpush1.bf16.msra.mxu0 %v1588
    %1638 = vmatprep.subr.bf16.mxu0 %v1592
    %1639 = vmatpush1.bf16.msra.mxu0 %v1591
    %1640 = vmatprep.subr.bf16.mxu0 %v1595
    %1641 = vmatpush1.bf16.msra.mxu0 %v1594
    %1642 = vmatprep.subr.bf16.mxu0 %v1598
    %1643 = vmatpush1.bf16.msra.mxu0 %v1597
    %1644 = vmatprep.subr.bf16.mxu0 %v1601
    %1645 = vmatpush1.bf16.msra.mxu0 %v1600
    %1646 = vmatprep.subr.bf16.mxu0 %v1604
    %1647 = vmatpush1.bf16.msra.mxu0 %v1603
    %1648 = vmatprep.subr.bf16.mxu0 %v1607
    %1649 = vmatpush1.bf16.msra.mxu0 %v1606
    %1650 = vmatprep.subr.bf16.mxu0 %v1610
    %1651 = vmatpush1.bf16.msra.mxu0 %v1609
    %1652 = vmatprep.subr.bf16.mxu0 0
    %1653 = vmatpush1.bf16.msra.mxu0 0
    %1654 = vmatprep.subr.bf16.mxu0 0
    %1655 = vmatpush1.bf16.msra.mxu0 0
    %1656 = vmatprep.subr.bf16.mxu0 0
    %1657 = vmatpush1.bf16.msra.mxu0 0
    %1658 = vmatprep.subr.bf16.mxu0 0
    %1659 = vmatpush1.bf16.msra.mxu0 0
    %1660 = vmatprep.subr.bf16.mxu0 0
    %1661 = vmatpush1.bf16.msra.mxu0 0
    %1662 = vmatprep.subr.bf16.mxu0 0
    %1663 = vmatpush1.bf16.msra.mxu0 0
    %1664 = vmatprep.subr.bf16.mxu0 0
    %1665 = vmatpush1.bf16.msra.mxu0 0
    %1666 = vmatprep.subr.bf16.mxu0 0
    %1667 = vmatpush1.bf16.msra.mxu0 0
    %1668 = vmatprep.mubr.bf16.mxu0 0
    %1669 = vmatmul.mubr.bf16.gmra.mrb[0].mxu0 0
    %v1670 = vpop.f32.mrb[0].mxu0
    %v1671 = vadd.f32 %v1496, %v1670
    %v1672 = vpop.f32.mrb[0].mxu0
    %v1673 = vadd.f32 %v1500, %v1672
    %v1674 = vpop.f32.mrb[0].mxu0
    %v1675 = vpop.f32.mrb[0].mxu0
    %1676 = vdwg.mxu0
    %1677 = vmatprep.subr.bf16.mxu0 0
    %1678 = vmatpush1.bf16.msra.mxu0 %v1590
    %1679 = vmatprep.subr.bf16.mxu0 0
    %1680 = vmatpush1.bf16.msra.mxu0 %v1593
    %1681 = vmatprep.subr.bf16.mxu0 0
    %1682 = vmatpush1.bf16.msra.mxu0 %v1596
    %1683 = vmatprep.subr.bf16.mxu0 0
    %1684 = vmatpush1.bf16.msra.mxu0 %v1599
    %1685 = vmatprep.subr.bf16.mxu0 0
    %1686 = vmatpush1.bf16.msra.mxu0 %v1602
    %1687 = vmatprep.subr.bf16.mxu0 0
    %1688 = vmatpush1.bf16.msra.mxu0 %v1605
    %1689 = vmatprep.subr.bf16.mxu0 0
    %1690 = vmatpush1.bf16.msra.mxu0 %v1608
    %1691 = vmatprep.subr.bf16.mxu0 0
    %1692 = vmatpush1.bf16.msra.mxu0 %v1611
    %1693 = vmatprep.subr.bf16.mxu0 0
    %1694 = vmatpush1.bf16.msra.mxu0 0
    %1695 = vmatprep.subr.bf16.mxu0 0
    %1696 = vmatpush1.bf16.msra.mxu0 0
    %1697 = vmatprep.subr.bf16.mxu0 0
    %1698 = vmatpush1.bf16.msra.mxu0 0
    %1699 = vmatprep.subr.bf16.mxu0 0
    %1700 = vmatpush1.bf16.msra.mxu0 0
    %1701 = vmatprep.subr.bf16.mxu0 0
    %1702 = vmatpush1.bf16.msra.mxu0 0
    %1703 = vmatprep.subr.bf16.mxu0 0
    %1704 = vmatpush1.bf16.msra.mxu0 0
    %1705 = vmatprep.subr.bf16.mxu0 0
    %1706 = vmatpush1.bf16.msra.mxu0 0
    %1707 = vmatprep.subr.bf16.mxu0 0
    %1708 = vmatpush1.bf16.msra.mxu0 0
    %1709 = vmatprep.mubr.bf16.mxu0 0
    %1710 = vmatmul.mubr.bf16.gmra.mrb[0].mxu0 0
    %v1711 = vpop.f32.mrb[0].mxu0
    %v1712 = vadd.f32 %v1504, %v1711
    %v1713 = vpop.f32.mrb[0].mxu0
    %v1714 = vpop.f32.mrb[0].mxu0
    %v1715 = vpop.f32.mrb[0].mxu0
    %1716 = vdwg.mxu0
    %v1717 = vadd.f32 %v1489, %v1671
    %v1718 = vxor.u32 %v1717, 2147483648
    %v1719 = vmul.f32 %v1718, 1.442695
    %v1720 = vpow.pop %v1719
    %v1721 = vadd.f32 %v1720, 1.0
    %v1722 = vrcp.pop %v1721
    %v1723 = vmul.f32 1.0, %v1722
    %v1724 = vadd.f32 %v1490, %v1673
    %v1725 = vxor.u32 %v1724, 2147483648
    %v1726 = vmul.f32 %v1725, 1.442695
    %v1727 = vpow.pop %v1726
    %v1728 = vadd.f32 %v1727, 1.0
    %v1729 = vrcp.pop %v1728
    %v1730 = vmul.f32 1.0, %v1729
    %v1731 = vmul.f32 %v1723, %v1712
    %v1732 = vadd.f32 %v1491, %v1731
    %v1733 = vtanh.pop %v1732
    %v1734 = vsub.f32 0.0, %v1733
    %v1735 = vmul.f32 %v1730, %v1734
    %v1736 = vadd.f32 %v1733, %v1735
    %vm1737 = vcmp.gt.f32.partialorder %v1173, 0.0
    %v1738 = vsel %vm1737, 1, 0
    %v1739 = vcvt.s32.f32 %v1738
    %vm1740 = vcmp.gt.f32.partialorder %v1173, 7.0
    %v1741 = vsel %vm1740, 1, 0
    %v1742 = vcvt.s32.f32 %v1741
    %1744 = vset.pattern.permute.xlu0 0
    %1745 = vperm.xlu0 %1744, %v1739
    %v1746 = vpop.permute.xlu0 %1745
    %v1748 = vmul.f32 %v1746, %v1487
    %1749 = vst [vmem:[%s14] sm:$0xff] %v1748
    %1751 = vset.pattern.permute.xlu0 0
    %1752 = vperm.xlu0 %1751, %v1742
    %v1753 = vpop.permute.xlu0 %1752
    %v1755 = vmul.f32 %v1753, %v1736
    %s1756 = scalar_lea.vmem [#allocation3], 56
    %1757 = vst [vmem:[%s1756] sm:$0xff] %v1755
    %v1758 = vadd.f32 %v1748, 0.0
    %v1759 = vadd.f32 %v1755, 0.0
    %s1760 = scalar_lea.vmem [#allocation2], 48
    %v1761 = vld [vmem:[%s1760] sm:$0xff]
    %v1762 = vld [vmem:[%s1760 + $0x8] sm:$0xff]
    %v1763 = vld [vmem:[%s1760 + $0x10] sm:$0xff]
    %v1764 = vpack.c.bf16 %v1758, %v1758
    %1765 = vmatprep.subr.bf16.mxu0 %v1340
    %1766 = vmatpush1.bf16.msra.mxu0 %v1339
    %1767 = vmatprep.subr.bf16.mxu0 %v1343
    %1768 = vmatpush1.bf16.msra.mxu0 %v1342
    %1769 = vmatprep.subr.bf16.mxu0 %v1346
    %1770 = vmatpush1.bf16.msra.mxu0 %v1345
    %1771 = vmatprep.subr.bf16.mxu0 %v1349
    %1772 = vmatpush1.bf16.msra.mxu0 %v1348
    %1773 = vmatprep.subr.bf16.mxu0 %v1352
    %1774 = vmatpush1.bf16.msra.mxu0 %v1351
    %1775 = vmatprep.subr.bf16.mxu0 %v1355
    %1776 = vmatpush1.bf16.msra.mxu0 %v1354
    %1777 = vmatprep.subr.bf16.mxu0 %v1358
    %1778 = vmatpush1.bf16.msra.mxu0 %v1357
    %1779 = vmatprep.subr.bf16.mxu0 %v1361
    %1780 = vmatpush1.bf16.msra.mxu0 %v1360
    %1781 = vmatprep.subr.bf16.mxu0 0
    %1782 = vmatpush1.bf16.msra.mxu0 0
    %1783 = vmatprep.subr.bf16.mxu0 0
    %1784 = vmatpush1.bf16.msra.mxu0 0
    %1785 = vmatprep.subr.bf16.mxu0 0
    %1786 = vmatpush1.bf16.msra.mxu0 0
    %1787 = vmatprep.subr.bf16.mxu0 0
    %1788 = vmatpush1.bf16.msra.mxu0 0
    %1789 = vmatprep.subr.bf16.mxu0 0
    %1790 = vmatpush1.bf16.msra.mxu0 0
    %1791 = vmatprep.subr.bf16.mxu0 0
    %1792 = vmatpush1.bf16.msra.mxu0 0
    %1793 = vmatprep.subr.bf16.mxu0 0
    %1794 = vmatpush1.bf16.msra.mxu0 0
    %1795 = vmatprep.subr.bf16.mxu0 0
    %1796 = vmatpush1.bf16.msra.mxu0 0
    %1797 = vmatprep.mubr.bf16.mxu0 0
    %1798 = vmatmul.mubr.bf16.gmra.mrb[0].mxu0 %v1764
    %v1799 = vpop.f32.mrb[0].mxu0
    %v1800 = vadd.f32 %v1247, %v1799
    %v1801 = vpop.f32.mrb[0].mxu0
    %v1802 = vadd.f32 %v1251, %v1801
    %v1803 = vpop.f32.mrb[0].mxu0
    %v1804 = vpop.f32.mrb[0].mxu0
    %1805 = vdwg.mxu0
    %1806 = vmatprep.subr.bf16.mxu0 0
    %1807 = vmatpush1.bf16.msra.mxu0 %v1341
    %1808 = vmatprep.subr.bf16.mxu0 0
    %1809 = vmatpush1.bf16.msra.mxu0 %v1344
    %1810 = vmatprep.subr.bf16.mxu0 0
    %1811 = vmatpush1.bf16.msra.mxu0 %v1347
    %1812 = vmatprep.subr.bf16.mxu0 0
    %1813 = vmatpush1.bf16.msra.mxu0 %v1350
    %1814 = vmatprep.subr.bf16.mxu0 0
    %1815 = vmatpush1.bf16.msra.mxu0 %v1353
    %1816 = vmatprep.subr.bf16.mxu0 0
    %1817 = vmatpush1.bf16.msra.mxu0 %v1356
    %1818 = vmatprep.subr.bf16.mxu0 0
    %1819 = vmatpush1.bf16.msra.mxu0 %v1359
    %1820 = vmatprep.subr.bf16.mxu0 0
    %1821 = vmatpush1.bf16.msra.mxu0 %v1362
    %1822 = vmatprep.subr.bf16.mxu0 0
    %1823 = vmatpush1.bf16.msra.mxu0 0
    %1824 = vmatprep.subr.bf16.mxu0 0
    %1825 = vmatpush1.bf16.msra.mxu0 0
    %1826 = vmatprep.subr.bf16.mxu0 0
    %1827 = vmatpush1.bf16.msra.mxu0 0
    %1828 = vmatprep.subr.bf16.mxu0 0
    %1829 = vmatpush1.bf16.msra.mxu0 0
    %1830 = vmatprep.subr.bf16.mxu0 0
    %1831 = vmatpush1.bf16.msra.mxu0 0
    %1832 = vmatprep.subr.bf16.mxu0 0
    %1833 = vmatpush1.bf16.msra.mxu0 0
    %1834 = vmatprep.subr.bf16.mxu0 0
    %1835 = vmatpush1.bf16.msra.mxu0 0
    %1836 = vmatprep.subr.bf16.mxu0 0
    %1837 = vmatpush1.bf16.msra.mxu0 0
    %1838 = vmatprep.mubr.bf16.mxu0 0
    %1839 = vmatmul.mubr.bf16.gmra.mrb[0].mxu0 %v1764
    %v1840 = vpop.f32.mrb[0].mxu0
    %v1841 = vadd.f32 %v1255, %v1840
    %v1842 = vpop.f32.mrb[0].mxu0
    %v1843 = vpop.f32.mrb[0].mxu0
    %v1844 = vpop.f32.mrb[0].mxu0
    %1845 = vdwg.mxu0
    %v1846 = vadd.f32 %v1761, %v1800
    %v1847 = vxor.u32 %v1846, 2147483648
    %v1848 = vmul.f32 %v1847, 1.442695
    %v1849 = vpow.pop %v1848
    %v1850 = vadd.f32 %v1849, 1.0
    %v1851 = vrcp.pop %v1850
    %v1852 = vmul.f32 1.0, %v1851
    %v1853 = vadd.f32 %v1762, %v1802
    %v1854 = vxor.u32 %v1853, 2147483648
    %v1855 = vmul.f32 %v1854, 1.442695
    %v1856 = vpow.pop %v1855
    %v1857 = vadd.f32 %v1856, 1.0
    %v1858 = vrcp.pop %v1857
    %v1859 = vmul.f32 1.0, %v1858
    %v1860 = vmul.f32 %v1852, %v1841
    %v1861 = vadd.f32 %v1763, %v1860
    %v1862 = vtanh.pop %v1861
    %v1863 = vsub.f32 %v1758, %v1862
    %v1864 = vmul.f32 %v1859, %v1863
    %v1865 = vadd.f32 %v1862, %v1864
    %s1866 = scalar_lea.vmem [#allocation2], 288
    %v1867 = vld [vmem:[%s1866 + $0x18] sm:$0xff]
    %v1868 = vld [vmem:[%s1866 + $0x20] sm:$0xff]
    %v1869 = vld [vmem:[%s1866 + $0x28] sm:$0xff]
    %v1870 = vpack.c.bf16 %v1759, %v1759
    %1871 = vmatprep.subr.bf16.mxu0 %v1589
    %1872 = vmatpush1.bf16.msra.mxu0 %v1588
    %1873 = vmatprep.subr.bf16.mxu0 %v1592
    %1874 = vmatpush1.bf16.msra.mxu0 %v1591
    %1875 = vmatprep.subr.bf16.mxu0 %v1595
    %1876 = vmatpush1.bf16.msra.mxu0 %v1594
    %1877 = vmatprep.subr.bf16.mxu0 %v1598
    %1878 = vmatpush1.bf16.msra.mxu0 %v1597
    %1879 = vmatprep.subr.bf16.mxu0 %v1601
    %1880 = vmatpush1.bf16.msra.mxu0 %v1600
    %1881 = vmatprep.subr.bf16.mxu0 %v1604
    %1882 = vmatpush1.bf16.msra.mxu0 %v1603
    %1883 = vmatprep.subr.bf16.mxu0 %v1607
    %1884 = vmatpush1.bf16.msra.mxu0 %v1606
    %1885 = vmatprep.subr.bf16.mxu0 %v1610
    %1886 = vmatpush1.bf16.msra.mxu0 %v1609
    %1887 = vmatprep.subr.bf16.mxu0 0
    %1888 = vmatpush1.bf16.msra.mxu0 0
    %1889 = vmatprep.subr.bf16.mxu0 0
    %1890 = vmatpush1.bf16.msra.mxu0 0
    %1891 = vmatprep.subr.bf16.mxu0 0
    %1892 = vmatpush1.bf16.msra.mxu0 0
    %1893 = vmatprep.subr.bf16.mxu0 0
    %1894 = vmatpush1.bf16.msra.mxu0 0
    %1895 = vmatprep.subr.bf16.mxu0 0
    %1896 = vmatpush1.bf16.msra.mxu0 0
    %1897 = vmatprep.subr.bf16.mxu0 0
    %1898 = vmatpush1.bf16.msra.mxu0 0
    %1899 = vmatprep.subr.bf16.mxu0 0
    %1900 = vmatpush1.bf16.msra.mxu0 0
    %1901 = vmatprep.subr.bf16.mxu0 0
    %1902 = vmatpush1.bf16.msra.mxu0 0
    %1903 = vmatprep.mubr.bf16.mxu0 0
    %1904 = vmatmul.mubr.bf16.gmra.mrb[0].mxu0 %v1870
    %v1905 = vpop.f32.mrb[0].mxu0
    %v1906 = vadd.f32 %v1496, %v1905
    %v1907 = vpop.f32.mrb[0].mxu0
    %v1908 = vadd.f32 %v1500, %v1907
    %v1909 = vpop.f32.mrb[0].mxu0
    %v1910 = vpop.f32.mrb[0].mxu0
    %1911 = vdwg.mxu0
    %1912 = vmatprep.subr.bf16.mxu0 0
    %1913 = vmatpush1.bf16.msra.mxu0 %v1590
    %1914 = vmatprep.subr.bf16.mxu0 0
    %1915 = vmatpush1.bf16.msra.mxu0 %v1593
    %1916 = vmatprep.subr.bf16.mxu0 0
    %1917 = vmatpush1.bf16.msra.mxu0 %v1596
    %1918 = vmatprep.subr.bf16.mxu0 0
    %1919 = vmatpush1.bf16.msra.mxu0 %v1599
    %1920 = vmatprep.subr.bf16.mxu0 0
    %1921 = vmatpush1.bf16.msra.mxu0 %v1602
    %1922 = vmatprep.subr.bf16.mxu0 0
    %1923 = vmatpush1.bf16.msra.mxu0 %v1605
    %1924 = vmatprep.subr.bf16.mxu0 0
    %1925 = vmatpush1.bf16.msra.mxu0 %v1608
    %1926 = vmatprep.subr.bf16.mxu0 0
    %1927 = vmatpush1.bf16.msra.mxu0 %v1611
    %1928 = vmatprep.subr.bf16.mxu0 0
    %1929 = vmatpush1.bf16.msra.mxu0 0
    %1930 = vmatprep.subr.bf16.mxu0 0
    %1931 = vmatpush1.bf16.msra.mxu0 0
    %1932 = vmatprep.subr.bf16.mxu0 0
    %1933 = vmatpush1.bf16.msra.mxu0 0
    %1934 = vmatprep.subr.bf16.mxu0 0
    %1935 = vmatpush1.bf16.msra.mxu0 0
    %1936 = vmatprep.subr.bf16.mxu0 0
    %1937 = vmatpush1.bf16.msra.mxu0 0
    %1938 = vmatprep.subr.bf16.mxu0 0
    %1939 = vmatpush1.bf16.msra.mxu0 0
    %1940 = vmatprep.subr.bf16.mxu0 0
    %1941 = vmatpush1.bf16.msra.mxu0 0
    %1942 = vmatprep.subr.bf16.mxu0 0
    %1943 = vmatpush1.bf16.msra.mxu0 0
    %1944 = vmatprep.mubr.bf16.mxu0 0
    %1945 = vmatmul.mubr.bf16.gmra.mrb[0].mxu0 %v1870
    %v1946 = vpop.f32.mrb[0].mxu0
    %v1947 = vadd.f32 %v1504, %v1946
    %v1948 = vpop.f32.mrb[0].mxu0
    %v1949 = vpop.f32.mrb[0].mxu0
    %v1950 = vpop.f32.mrb[0].mxu0
    %1951 = vdwg.mxu0
    %v1952 = vadd.f32 %v1867, %v1906
    %v1953 = vxor.u32 %v1952, 2147483648
    %v1954 = vmul.f32 %v1953, 1.442695
    %v1955 = vpow.pop %v1954
    %v1956 = vadd.f32 %v1955, 1.0
    %v1957 = vrcp.pop %v1956
    %v1958 = vmul.f32 1.0, %v1957
    %v1959 = vadd.f32 %v1868, %v1908
    %v1960 = vxor.u32 %v1959, 2147483648
    %v1961 = vmul.f32 %v1960, 1.442695
    %v1962 = vpow.pop %v1961
    %v1963 = vadd.f32 %v1962, 1.0
    %v1964 = vrcp.pop %v1963
    %v1965 = vmul.f32 1.0, %v1964
    %v1966 = vmul.f32 %v1958, %v1947
    %v1967 = vadd.f32 %v1869, %v1966
    %v1968 = vtanh.pop %v1967
    %v1969 = vsub.f32 %v1759, %v1968
    %v1970 = vmul.f32 %v1965, %v1969
    %v1971 = vadd.f32 %v1968, %v1970
    %vm1972 = vcmp.gt.f32.partialorder %v1173, 1.0
    %v1973 = vsel %vm1972, 1, 0
    %v1974 = vcvt.s32.f32 %v1973
    %vm1975 = vcmp.gt.f32.partialorder %v1173, 6.0
    %v1976 = vsel %vm1975, 1, 0
    %v1977 = vcvt.s32.f32 %v1976
    %1979 = vset.pattern.permute.xlu0 0
    %1980 = vperm.xlu0 %1979, %v1974
    %v1981 = vpop.permute.xlu0 %1980
    %v1983 = vmul.f32 %v1981, %v1865
    %s1984 = scalar_lea.vmem %s14, 8
    %1985 = vst [vmem:[%s1984] sm:$0xff] %v1983
    %1987 = vset.pattern.permute.xlu0 0
    %1988 = vperm.xlu0 %1987, %v1977
    %v1989 = vpop.permute.xlu0 %1988
    %v1991 = vmul.f32 %v1989, %v1971
    %s1992 = scalar_lea.vmem [#allocation3], 48
    %1993 = vst [vmem:[%s1992] sm:$0xff] %v1991
    %v1994 = vsub.f32 %v1865, %v1758
    %v1995 = vmul.f32 %v1981, %v1994
    %v1996 = vadd.f32 %v1758, %v1995
    %v1997 = vsub.f32 %v1971, %v1759
    %v1998 = vmul.f32 %v1989, %v1997
    %v1999 = vadd.f32 %v1759, %v1998
    %s2000 = scalar_lea.vmem [#allocation2], 96
    %v2001 = vld [vmem:[%s2000] sm:$0xff]
    %v2002 = vld [vmem:[%s2000 + $0x8] sm:$0xff]
    %v2003 = vld [vmem:[%s2000 + $0x10] sm:$0xff]
    %v2004 = vpack.c.bf16 %v1996, %v1996
    %2005 = vmatprep.subr.bf16.mxu0 %v1340
    %2006 = vmatpush1.bf16.msra.mxu0 %v1339
    %2007 = vmatprep.subr.bf16.mxu0 %v1343
    %2008 = vmatpush1.bf16.msra.mxu0 %v1342
    %2009 = vmatprep.subr.bf16.mxu0 %v1346
    %2010 = vmatpush1.bf16.msra.mxu0 %v1345
    %2011 = vmatprep.subr.bf16.mxu0 %v1349
    %2012 = vmatpush1.bf16.msra.mxu0 %v1348
    %2013 = vmatprep.subr.bf16.mxu0 %v1352
    %2014 = vmatpush1.bf16.msra.mxu0 %v1351
    %2015 = vmatprep.subr.bf16.mxu0 %v1355
    %2016 = vmatpush1.bf16.msra.mxu0 %v1354
    %2017 = vmatprep.subr.bf16.mxu0 %v1358
    %2018 = vmatpush1.bf16.msra.mxu0 %v1357
    %2019 = vmatprep.subr.bf16.mxu0 %v1361
    %2020 = vmatpush1.bf16.msra.mxu0 %v1360
    %2021 = vmatprep.subr.bf16.mxu0 0
    %2022 = vmatpush1.bf16.msra.mxu0 0
    %2023 = vmatprep.subr.bf16.mxu0 0
    %2024 = vmatpush1.bf16.msra.mxu0 0
    %2025 = vmatprep.subr.bf16.mxu0 0
    %2026 = vmatpush1.bf16.msra.mxu0 0
    %2027 = vmatprep.subr.bf16.mxu0 0
    %2028 = vmatpush1.bf16.msra.mxu0 0
    %2029 = vmatprep.subr.bf16.mxu0 0
    %2030 = vmatpush1.bf16.msra.mxu0 0
    %2031 = vmatprep.subr.bf16.mxu0 0
    %2032 = vmatpush1.bf16.msra.mxu0 0
    %2033 = vmatprep.subr.bf16.mxu0 0
    %2034 = vmatpush1.bf16.msra.mxu0 0
    %2035 = vmatprep.subr.bf16.mxu0 0
    %2036 = vmatpush1.bf16.msra.mxu0 0
    %2037 = vmatprep.mubr.bf16.mxu0 0
    %2038 = vmatmul.mubr.bf16.gmra.mrb[0].mxu0 %v2004
    %v2039 = vpop.f32.mrb[0].mxu0
    %v2040 = vadd.f32 %v1247, %v2039
    %v2041 = vpop.f32.mrb[0].mxu0
    %v2042 = vadd.f32 %v1251, %v2041
    %v2043 = vpop.f32.mrb[0].mxu0
    %v2044 = vpop.f32.mrb[0].mxu0
    %2045 = vdwg.mxu0
    %2046 = vmatprep.subr.bf16.mxu0 0
    %2047 = vmatpush1.bf16.msra.mxu0 %v1341
    %2048 = vmatprep.subr.bf16.mxu0 0
    %2049 = vmatpush1.bf16.msra.mxu0 %v1344
    %2050 = vmatprep.subr.bf16.mxu0 0
    %2051 = vmatpush1.bf16.msra.mxu0 %v1347
    %2052 = vmatprep.subr.bf16.mxu0 0
    %2053 = vmatpush1.bf16.msra.mxu0 %v1350
    %2054 = vmatprep.subr.bf16.mxu0 0
    %2055 = vmatpush1.bf16.msra.mxu0 %v1353
    %2056 = vmatprep.subr.bf16.mxu0 0
    %2057 = vmatpush1.bf16.msra.mxu0 %v1356
    %2058 = vmatprep.subr.bf16.mxu0 0
    %2059 = vmatpush1.bf16.msra.mxu0 %v1359
    %2060 = vmatprep.subr.bf16.mxu0 0
    %2061 = vmatpush1.bf16.msra.mxu0 %v1362
    %2062 = vmatprep.subr.bf16.mxu0 0
    %2063 = vmatpush1.bf16.msra.mxu0 0
    %2064 = vmatprep.subr.bf16.mxu0 0
    %2065 = vmatpush1.bf16.msra.mxu0 0
    %2066 = vmatprep.subr.bf16.mxu0 0
    %2067 = vmatpush1.bf16.msra.mxu0 0
    %2068 = vmatprep.subr.bf16.mxu0 0
    %2069 = vmatpush1.bf16.msra.mxu0 0
    %2070 = vmatprep.subr.bf16.mxu0 0
    %2071 = vmatpush1.bf16.msra.mxu0 0
    %2072 = vmatprep.subr.bf16.mxu0 0
    %2073 = vmatpush1.bf16.msra.mxu0 0
    %2074 = vmatprep.subr.bf16.mxu0 0
    %2075 = vmatpush1.bf16.msra.mxu0 0
    %2076 = vmatprep.subr.bf16.mxu0 0
    %2077 = vmatpush1.bf16.msra.mxu0 0
    %2078 = vmatprep.mubr.bf16.mxu0 0
    %2079 = vmatmul.mubr.bf16.gmra.mrb[0].mxu0 %v2004
    %v2080 = vpop.f32.mrb[0].mxu0
    %v2081 = vadd.f32 %v1255, %v2080
    %v2082 = vpop.f32.mrb[0].mxu0
    %v2083 = vpop.f32.mrb[0].mxu0
    %v2084 = vpop.f32.mrb[0].mxu0
    %2085 = vdwg.mxu0
    %v2086 = vadd.f32 %v2001, %v2040
    %v2087 = vxor.u32 %v2086, 2147483648
    %v2088 = vmul.f32 %v2087, 1.442695
    %v2089 = vpow.pop %v2088
    %v2090 = vadd.f32 %v2089, 1.0
    %v2091 = vrcp.pop %v2090
    %v2092 = vmul.f32 1.0, %v2091
    %v2093 = vadd.f32 %v2002, %v2042
    %v2094 = vxor.u32 %v2093, 2147483648
    %v2095 = vmul.f32 %v2094, 1.442695
    %v2096 = vpow.pop %v2095
    %v2097 = vadd.f32 %v2096, 1.0
    %v2098 = vrcp.pop %v2097
    %v2099 = vmul.f32 1.0, %v2098
    %v2100 = vmul.f32 %v2092, %v2081
    %v2101 = vadd.f32 %v2003, %v2100
    %v2102 = vtanh.pop %v2101
    %v2103 = vsub.f32 %v1996, %v2102
    %v2104 = vmul.f32 %v2099, %v2103
    %v2105 = vadd.f32 %v2102, %v2104
    %s2106 = scalar_lea.vmem [#allocation2], 240
    %v2107 = vld [vmem:[%s2106 + $0x18] sm:$0xff]
    %v2108 = vld [vmem:[%s2106 + $0x20] sm:$0xff]
    %v2109 = vld [vmem:[%s2106 + $0x28] sm:$0xff]
    %v2110 = vpack.c.bf16 %v1999, %v1999
    %2111 = vmatprep.subr.bf16.mxu0 %v1589
    %2112 = vmatpush1.bf16.msra.mxu0 %v1588
    %2113 = vmatprep.subr.bf16.mxu0 %v1592
    %2114 = vmatpush1.bf16.msra.mxu0 %v1591
    %2115 = vmatprep.subr.bf16.mxu0 %v1595
    %2116 = vmatpush1.bf16.msra.mxu0 %v1594
    %2117 = vmatprep.subr.bf16.mxu0 %v1598
    %2118 = vmatpush1.bf16.msra.mxu0 %v1597
    %2119 = vmatprep.subr.bf16.mxu0 %v1601
    %2120 = vmatpush1.bf16.msra.mxu0 %v1600
    %2121 = vmatprep.subr.bf16.mxu0 %v1604
    %2122 = vmatpush1.bf16.msra.mxu0 %v1603
    %2123 = vmatprep.subr.bf16.mxu0 %v1607
    %2124 = vmatpush1.bf16.msra.mxu0 %v1606
    %2125 = vmatprep.subr.bf16.mxu0 %v1610
    %2126 = vmatpush1.bf16.msra.mxu0 %v1609
    %2127 = vmatprep.subr.bf16.mxu0 0
    %2128 = vmatpush1.bf16.msra.mxu0 0
    %2129 = vmatprep.subr.bf16.mxu0 0
    %2130 = vmatpush1.bf16.msra.mxu0 0
    %2131 = vmatprep.subr.bf16.mxu0 0
    %2132 = vmatpush1.bf16.msra.mxu0 0
    %2133 = vmatprep.subr.bf16.mxu0 0
    %2134 = vmatpush1.bf16.msra.mxu0 0
    %2135 = vmatprep.subr.bf16.mxu0 0
    %2136 = vmatpush1.bf16.msra.mxu0 0
    %2137 = vmatprep.subr.bf16.mxu0 0
    %2138 = vmatpush1.bf16.msra.mxu0 0
    %2139 = vmatprep.subr.bf16.mxu0 0
    %2140 = vmatpush1.bf16.msra.mxu0 0
    %2141 = vmatprep.subr.bf16.mxu0 0
    %2142 = vmatpush1.bf16.msra.mxu0 0
    %2143 = vmatprep.mubr.bf16.mxu0 0
    %2144 = vmatmul.mubr.bf16.gmra.mrb[0].mxu0 %v2110
    %v2145 = vpop.f32.mrb[0].mxu0
    %v2146 = vadd.f32 %v1496, %v2145
    %v2147 = vpop.f32.mrb[0].mxu0
    %v2148 = vadd.f32 %v1500, %v2147
    %v2149 = vpop.f32.mrb[0].mxu0
    %v2150 = vpop.f32.mrb[0].mxu0
    %2151 = vdwg.mxu0
    %2152 = vmatprep.subr.bf16.mxu0 0
    %2153 = vmatpush1.bf16.msra.mxu0 %v1590
    %2154 = vmatprep.subr.bf16.mxu0 0
    %2155 = vmatpush1.bf16.msra.mxu0 %v1593
    %2156 = vmatprep.subr.bf16.mxu0 0
    %2157 = vmatpush1.bf16.msra.mxu0 %v1596
    %2158 = vmatprep.subr.bf16.mxu0 0
    %2159 = vmatpush1.bf16.msra.mxu0 %v1599
    %2160 = vmatprep.subr.bf16.mxu0 0
    %2161 = vmatpush1.bf16.msra.mxu0 %v1602
    %2162 = vmatprep.subr.bf16.mxu0 0
    %2163 = vmatpush1.bf16.msra.mxu0 %v1605
    %2164 = vmatprep.subr.bf16.mxu0 0
    %2165 = vmatpush1.bf16.msra.mxu0 %v1608
    %2166 = vmatprep.subr.bf16.mxu0 0
    %2167 = vmatpush1.bf16.msra.mxu0 %v1611
    %2168 = vmatprep.subr.bf16.mxu0 0
    %2169 = vmatpush1.bf16.msra.mxu0 0
    %2170 = vmatprep.subr.bf16.mxu0 0
    %2171 = vmatpush1.bf16.msra.mxu0 0
    %2172 = vmatprep.subr.bf16.mxu0 0
    %2173 = vmatpush1.bf16.msra.mxu0 0
    %2174 = vmatprep.subr.bf16.mxu0 0
    %2175 = vmatpush1.bf16.msra.mxu0 0
    %2176 = vmatprep.subr.bf16.mxu0 0
    %2177 = vmatpush1.bf16.msra.mxu0 0
    %2178 = vmatprep.subr.bf16.mxu0 0
    %2179 = vmatpush1.bf16.msra.mxu0 0
    %2180 = vmatprep.subr.bf16.mxu0 0
    %2181 = vmatpush1.bf16.msra.mxu0 0
    %2182 = vmatprep.subr.bf16.mxu0 0
    %2183 = vmatpush1.bf16.msra.mxu0 0
    %2184 = vmatprep.mubr.bf16.mxu0 0
    %2185 = vmatmul.mubr.bf16.gmra.mrb[0].mxu0 %v2110
    %v2186 = vpop.f32.mrb[0].mxu0
    %v2187 = vadd.f32 %v1504, %v2186
    %v2188 = vpop.f32.mrb[0].mxu0
    %v2189 = vpop.f32.mrb[0].mxu0
    %v2190 = vpop.f32.mrb[0].mxu0
    %2191 = vdwg.mxu0
    %v2192 = vadd.f32 %v2107, %v2146
    %v2193 = vxor.u32 %v2192, 2147483648
    %v2194 = vmul.f32 %v2193, 1.442695
    %v2195 = vpow.pop %v2194
    %v2196 = vadd.f32 %v2195, 1.0
    %v2197 = vrcp.pop %v2196
    %v2198 = vmul.f32 1.0, %v2197
    %v2199 = vadd.f32 %v2108, %v2148
    %v2200 = vxor.u32 %v2199, 2147483648
    %v2201 = vmul.f32 %v2200, 1.442695
    %v2202 = vpow.pop %v2201
    %v2203 = vadd.f32 %v2202, 1.0
    %v2204 = vrcp.pop %v2203
    %v2205 = vmul.f32 1.0, %v2204
    %v2206 = vmul.f32 %v2198, %v2187
    %v2207 = vadd.f32 %v2109, %v2206
    %v2208 = vtanh.pop %v2207
    %v2209 = vsub.f32 %v1999, %v2208
    %v2210 = vmul.f32 %v2205, %v2209
    %v2211 = vadd.f32 %v2208, %v2210
    %vm2212 = vcmp.gt.f32.partialorder %v1173, 2.0
    %v2213 = vsel %vm2212, 1, 0
    %v2214 = vcvt.s32.f32 %v2213
    %vm2215 = vcmp.gt.f32.partialorder %v1173, 5.0
    %v2216 = vsel %vm2215, 1, 0
    %v2217 = vcvt.s32.f32 %v2216
    %2219 = vset.pattern.permute.xlu0 0
    %2220 = vperm.xlu0 %2219, %v2214
    %v2221 = vpop.permute.xlu0 %2220
    %v2223 = vmul.f32 %v2221, %v2105
    %s2224 = scalar_lea.vmem %s14, 16
    %2225 = vst [vmem:[%s2224] sm:$0xff] %v2223
    %2227 = vset.pattern.permute.xlu0 0
    %2228 = vperm.xlu0 %2227, %v2217
    %v2229 = vpop.permute.xlu0 %2228
    %v2231 = vmul.f32 %v2229, %v2211
    %s2232 = scalar_lea.vmem [#allocation3], 40
    %2233 = vst [vmem:[%s2232] sm:$0xff] %v2231
    %v2234 = vsub.f32 %v2105, %v1996
    %v2235 = vmul.f32 %v2221, %v2234
    %v2236 = vadd.f32 %v1996, %v2235
    %v2237 = vsub.f32 %v2211, %v1999
    %v2238 = vmul.f32 %v2229, %v2237
    %v2239 = vadd.f32 %v1999, %v2238
    %s2240 = scalar_lea.vmem [#allocation2], 144
    %v2241 = vld [vmem:[%s2240] sm:$0xff]
    %v2242 = vld [vmem:[%s2240 + $0x8] sm:$0xff]
    %v2243 = vld [vmem:[%s2240 + $0x10] sm:$0xff]
    %v2244 = vpack.c.bf16 %v2236, %v2236
    %2245 = vmatprep.subr.bf16.mxu0 %v1340
    %2246 = vmatpush1.bf16.msra.mxu0 %v1339
    %2247 = vmatprep.subr.bf16.mxu0 %v1343
    %2248 = vmatpush1.bf16.msra.mxu0 %v1342
    %2249 = vmatprep.subr.bf16.mxu0 %v1346
    %2250 = vmatpush1.bf16.msra.mxu0 %v1345
    %2251 = vmatprep.subr.bf16.mxu0 %v1349
    %2252 = vmatpush1.bf16.msra.mxu0 %v1348
    %2253 = vmatprep.subr.bf16.mxu0 %v1352
    %2254 = vmatpush1.bf16.msra.mxu0 %v1351
    %2255 = vmatprep.subr.bf16.mxu0 %v1355
    %2256 = vmatpush1.bf16.msra.mxu0 %v1354
    %2257 = vmatprep.subr.bf16.mxu0 %v1358
    %2258 = vmatpush1.bf16.msra.mxu0 %v1357
    %2259 = vmatprep.subr.bf16.mxu0 %v1361
    %2260 = vmatpush1.bf16.msra.mxu0 %v1360
    %2261 = vmatprep.subr.bf16.mxu0 0
    %2262 = vmatpush1.bf16.msra.mxu0 0
    %2263 = vmatprep.subr.bf16.mxu0 0
    %2264 = vmatpush1.bf16.msra.mxu0 0
    %2265 = vmatprep.subr.bf16.mxu0 0
    %2266 = vmatpush1.bf16.msra.mxu0 0
    %2267 = vmatprep.subr.bf16.mxu0 0
    %2268 = vmatpush1.bf16.msra.mxu0 0
    %2269 = vmatprep.subr.bf16.mxu0 0
    %2270 = vmatpush1.bf16.msra.mxu0 0
    %2271 = vmatprep.subr.bf16.mxu0 0
    %2272 = vmatpush1.bf16.msra.mxu0 0
    %2273 = vmatprep.subr.bf16.mxu0 0
    %2274 = vmatpush1.bf16.msra.mxu0 0
    %2275 = vmatprep.subr.bf16.mxu0 0
    %2276 = vmatpush1.bf16.msra.mxu0 0
    %2277 = vmatprep.mubr.bf16.mxu0 0
    %2278 = vmatmul.mubr.bf16.gmra.mrb[0].mxu0 %v2244
    %v2279 = vpop.f32.mrb[0].mxu0
    %v2280 = vadd.f32 %v1247, %v2279
    %v2281 = vpop.f32.mrb[0].mxu0
    %v2282 = vadd.f32 %v1251, %v2281
    %v2283 = vpop.f32.mrb[0].mxu0
    %v2284 = vpop.f32.mrb[0].mxu0
    %2285 = vdwg.mxu0
    %2286 = vmatprep.subr.bf16.mxu0 0
    %2287 = vmatpush1.bf16.msra.mxu0 %v1341
    %2288 = vmatprep.subr.bf16.mxu0 0
    %2289 = vmatpush1.bf16.msra.mxu0 %v1344
    %2290 = vmatprep.subr.bf16.mxu0 0
    %2291 = vmatpush1.bf16.msra.mxu0 %v1347
    %2292 = vmatprep.subr.bf16.mxu0 0
    %2293 = vmatpush1.bf16.msra.mxu0 %v1350
    %2294 = vmatprep.subr.bf16.mxu0 0
    %2295 = vmatpush1.bf16.msra.mxu0 %v1353
    %2296 = vmatprep.subr.bf16.mxu0 0
    %2297 = vmatpush1.bf16.msra.mxu0 %v1356
    %2298 = vmatprep.subr.bf16.mxu0 0
    %2299 = vmatpush1.bf16.msra.mxu0 %v1359
    %2300 = vmatprep.subr.bf16.mxu0 0
    %2301 = vmatpush1.bf16.msra.mxu0 %v1362
    %2302 = vmatprep.subr.bf16.mxu0 0
    %2303 = vmatpush1.bf16.msra.mxu0 0
    %2304 = vmatprep.subr.bf16.mxu0 0
    %2305 = vmatpush1.bf16.msra.mxu0 0
    %2306 = vmatprep.subr.bf16.mxu0 0
    %2307 = vmatpush1.bf16.msra.mxu0 0
    %2308 = vmatprep.subr.bf16.mxu0 0
    %2309 = vmatpush1.bf16.msra.mxu0 0
    %2310 = vmatprep.subr.bf16.mxu0 0
    %2311 = vmatpush1.bf16.msra.mxu0 0
    %2312 = vmatprep.subr.bf16.mxu0 0
    %2313 = vmatpush1.bf16.msra.mxu0 0
    %2314 = vmatprep.subr.bf16.mxu0 0
    %2315 = vmatpush1.bf16.msra.mxu0 0
    %2316 = vmatprep.subr.bf16.mxu0 0
    %2317 = vmatpush1.bf16.msra.mxu0 0
    %2318 = vmatprep.mubr.bf16.mxu0 0
    %2319 = vmatmul.mubr.bf16.gmra.mrb[0].mxu0 %v2244
    %v2320 = vpop.f32.mrb[0].mxu0
    %v2321 = vadd.f32 %v1255, %v2320
    %v2322 = vpop.f32.mrb[0].mxu0
    %v2323 = vpop.f32.mrb[0].mxu0
    %v2324 = vpop.f32.mrb[0].mxu0
    %2325 = vdwg.mxu0
    %v2326 = vadd.f32 %v2241, %v2280
    %v2327 = vxor.u32 %v2326, 2147483648
    %v2328 = vmul.f32 %v2327, 1.442695
    %v2329 = vpow.pop %v2328
    %v2330 = vadd.f32 %v2329, 1.0
    %v2331 = vrcp.pop %v2330
    %v2332 = vmul.f32 1.0, %v2331
    %v2333 = vadd.f32 %v2242, %v2282
    %v2334 = vxor.u32 %v2333, 2147483648
    %v2335 = vmul.f32 %v2334, 1.442695
    %v2336 = vpow.pop %v2335
    %v2337 = vadd.f32 %v2336, 1.0
    %v2338 = vrcp.pop %v2337
    %v2339 = vmul.f32 1.0, %v2338
    %v2340 = vmul.f32 %v2332, %v2321
    %v2341 = vadd.f32 %v2243, %v2340
    %v2342 = vtanh.pop %v2341
    %v2343 = vsub.f32 %v2236, %v2342
    %v2344 = vmul.f32 %v2339, %v2343
    %v2345 = vadd.f32 %v2342, %v2344
    %s2346 = scalar_lea.vmem [#allocation2], 192
    %v2347 = vld [vmem:[%s2346 + $0x18] sm:$0xff]
    %v2348 = vld [vmem:[%s2346 + $0x20] sm:$0xff]
    %v2349 = vld [vmem:[%s2346 + $0x28] sm:$0xff]
    %v2350 = vpack.c.bf16 %v2239, %v2239
    %2351 = vmatprep.subr.bf16.mxu0 %v1589
    %2352 = vmatpush1.bf16.msra.mxu0 %v1588
    %2353 = vmatprep.subr.bf16.mxu0 %v1592
    %2354 = vmatpush1.bf16.msra.mxu0 %v1591
    %2355 = vmatprep.subr.bf16.mxu0 %v1595
    %2356 = vmatpush1.bf16.msra.mxu0 %v1594
    %2357 = vmatprep.subr.bf16.mxu0 %v1598
    %2358 = vmatpush1.bf16.msra.mxu0 %v1597
    %2359 = vmatprep.subr.bf16.mxu0 %v1601
    %2360 = vmatpush1.bf16.msra.mxu0 %v1600
    %2361 = vmatprep.subr.bf16.mxu0 %v1604
    %2362 = vmatpush1.bf16.msra.mxu0 %v1603
    %2363 = vmatprep.subr.bf16.mxu0 %v1607
    %2364 = vmatpush1.bf16.msra.mxu0 %v1606
    %2365 = vmatprep.subr.bf16.mxu0 %v1610
    %2366 = vmatpush1.bf16.msra.mxu0 %v1609
    %2367 = vmatprep.subr.bf16.mxu0 0
    %2368 = vmatpush1.bf16.msra.mxu0 0
    %2369 = vmatprep.subr.bf16.mxu0 0
    %2370 = vmatpush1.bf16.msra.mxu0 0
    %2371 = vmatprep.subr.bf16.mxu0 0
    %2372 = vmatpush1.bf16.msra.mxu0 0
    %2373 = vmatprep.subr.bf16.mxu0 0
    %2374 = vmatpush1.bf16.msra.mxu0 0
    %2375 = vmatprep.subr.bf16.mxu0 0
    %2376 = vmatpush1.bf16.msra.mxu0 0
    %2377 = vmatprep.subr.bf16.mxu0 0
    %2378 = vmatpush1.bf16.msra.mxu0 0
    %2379 = vmatprep.subr.bf16.mxu0 0
    %2380 = vmatpush1.bf16.msra.mxu0 0
    %2381 = vmatprep.subr.bf16.mxu0 0
    %2382 = vmatpush1.bf16.msra.mxu0 0
    %2383 = vmatprep.mubr.bf16.mxu0 0
    %2384 = vmatmul.mubr.bf16.gmra.mrb[0].mxu0 %v2350
    %v2385 = vpop.f32.mrb[0].mxu0
    %v2386 = vadd.f32 %v1496, %v2385
    %v2387 = vpop.f32.mrb[0].mxu0
    %v2388 = vadd.f32 %v1500, %v2387
    %v2389 = vpop.f32.mrb[0].mxu0
    %v2390 = vpop.f32.mrb[0].mxu0
    %2391 = vdwg.mxu0
    %2392 = vmatprep.subr.bf16.mxu0 0
    %2393 = vmatpush1.bf16.msra.mxu0 %v1590
    %2394 = vmatprep.subr.bf16.mxu0 0
    %2395 = vmatpush1.bf16.msra.mxu0 %v1593
    %2396 = vmatprep.subr.bf16.mxu0 0
    %2397 = vmatpush1.bf16.msra.mxu0 %v1596
    %2398 = vmatprep.subr.bf16.mxu0 0
    %2399 = vmatpush1.bf16.msra.mxu0 %v1599
    %2400 = vmatprep.subr.bf16.mxu0 0
    %2401 = vmatpush1.bf16.msra.mxu0 %v1602
    %2402 = vmatprep.subr.bf16.mxu0 0
    %2403 = vmatpush1.bf16.msra.mxu0 %v1605
    %2404 = vmatprep.subr.bf16.mxu0 0
    %2405 = vmatpush1.bf16.msra.mxu0 %v1608
    %2406 = vmatprep.subr.bf16.mxu0 0
    %2407 = vmatpush1.bf16.msra.mxu0 %v1611
    %2408 = vmatprep.subr.bf16.mxu0 0
    %2409 = vmatpush1.bf16.msra.mxu0 0
    %2410 = vmatprep.subr.bf16.mxu0 0
    %2411 = vmatpush1.bf16.msra.mxu0 0
    %2412 = vmatprep.subr.bf16.mxu0 0
    %2413 = vmatpush1.bf16.msra.mxu0 0
    %2414 = vmatprep.subr.bf16.mxu0 0
    %2415 = vmatpush1.bf16.msra.mxu0 0
    %2416 = vmatprep.subr.bf16.mxu0 0
    %2417 = vmatpush1.bf16.msra.mxu0 0
    %2418 = vmatprep.subr.bf16.mxu0 0
    %2419 = vmatpush1.bf16.msra.mxu0 0
    %2420 = vmatprep.subr.bf16.mxu0 0
    %2421 = vmatpush1.bf16.msra.mxu0 0
    %2422 = vmatprep.subr.bf16.mxu0 0
    %2423 = vmatpush1.bf16.msra.mxu0 0
    %2424 = vmatprep.mubr.bf16.mxu0 0
    %2425 = vmatmul.mubr.bf16.gmra.mrb[0].mxu0 %v2350
    %v2426 = vpop.f32.mrb[0].mxu0
    %v2427 = vadd.f32 %v1504, %v2426
    %v2428 = vpop.f32.mrb[0].mxu0
    %v2429 = vpop.f32.mrb[0].mxu0
    %v2430 = vpop.f32.mrb[0].mxu0
    %2431 = vdwg.mxu0
    %v2432 = vadd.f32 %v2347, %v2386
    %v2433 = vxor.u32 %v2432, 2147483648
    %v2434 = vmul.f32 %v2433, 1.442695
    %v2435 = vpow.pop %v2434
    %v2436 = vadd.f32 %v2435, 1.0
    %v2437 = vrcp.pop %v2436
    %v2438 = vmul.f32 1.0, %v2437
    %v2439 = vadd.f32 %v2348, %v2388
    %v2440 = vxor.u32 %v2439, 2147483648
    %v2441 = vmul.f32 %v2440, 1.442695
    %v2442 = vpow.pop %v2441
    %v2443 = vadd.f32 %v2442, 1.0
    %v2444 = vrcp.pop %v2443
    %v2445 = vmul.f32 1.0, %v2444
    %v2446 = vmul.f32 %v2438, %v2427
    %v2447 = vadd.f32 %v2349, %v2446
    %v2448 = vtanh.pop %v2447
    %v2449 = vsub.f32 %v2239, %v2448
    %v2450 = vmul.f32 %v2445, %v2449
    %v2451 = vadd.f32 %v2448, %v2450
    %vm2452 = vcmp.gt.f32.partialorder %v1173, 3.0
    %v2453 = vsel %vm2452, 1, 0
    %v2454 = vcvt.s32.f32 %v2453
    %vm2455 = vcmp.gt.f32.partialorder %v1173, 4.0
    %v2456 = vsel %vm2455, 1, 0
    %v2457 = vcvt.s32.f32 %v2456
    %2459 = vset.pattern.permute.xlu0 0
    %2460 = vperm.xlu0 %2459, %v2454
    %v2461 = vpop.permute.xlu0 %2460
    %v2463 = vmul.f32 %v2461, %v2345
    %s2464 = scalar_lea.vmem %s14, 24
    %2465 = vst [vmem:[%s2464] sm:$0xff] %v2463
    %2467 = vset.pattern.permute.xlu0 0
    %2468 = vperm.xlu0 %2467, %v2457
    %v2469 = vpop.permute.xlu0 %2468
    %v2471 = vmul.f32 %v2469, %v2451
    %s2472 = scalar_lea.vmem [#allocation3], 32
    %2473 = vst [vmem:[%s2472] sm:$0xff] %v2471
    %v2474 = vsub.f32 %v2345, %v2236
    %v2475 = vmul.f32 %v2461, %v2474
    %v2476 = vadd.f32 %v2236, %v2475
    %v2477 = vsub.f32 %v2451, %v2239
    %v2478 = vmul.f32 %v2469, %v2477
    %v2479 = vadd.f32 %v2239, %v2478
    %v2480 = vld [vmem:[%s2346] sm:$0xff]
    %v2481 = vld [vmem:[%s2346 + $0x8] sm:$0xff]
    %v2482 = vld [vmem:[%s2346 + $0x10] sm:$0xff]
    %v2483 = vpack.c.bf16 %v2476, %v2476
    %2484 = vmatprep.subr.bf16.mxu0 %v1340
    %2485 = vmatpush1.bf16.msra.mxu0 %v1339
    %2486 = vmatprep.subr.bf16.mxu0 %v1343
    %2487 = vmatpush1.bf16.msra.mxu0 %v1342
    %2488 = vmatprep.subr.bf16.mxu0 %v1346
    %2489 = vmatpush1.bf16.msra.mxu0 %v1345
    %2490 = vmatprep.subr.bf16.mxu0 %v1349
    %2491 = vmatpush1.bf16.msra.mxu0 %v1348
    %2492 = vmatprep.subr.bf16.mxu0 %v1352
    %2493 = vmatpush1.bf16.msra.mxu0 %v1351
    %2494 = vmatprep.subr.bf16.mxu0 %v1355
    %2495 = vmatpush1.bf16.msra.mxu0 %v1354
    %2496 = vmatprep.subr.bf16.mxu0 %v1358
    %2497 = vmatpush1.bf16.msra.mxu0 %v1357
    %2498 = vmatprep.subr.bf16.mxu0 %v1361
    %2499 = vmatpush1.bf16.msra.mxu0 %v1360
    %2500 = vmatprep.subr.bf16.mxu0 0
    %2501 = vmatpush1.bf16.msra.mxu0 0
    %2502 = vmatprep.subr.bf16.mxu0 0
    %2503 = vmatpush1.bf16.msra.mxu0 0
    %2504 = vmatprep.subr.bf16.mxu0 0
    %2505 = vmatpush1.bf16.msra.mxu0 0
    %2506 = vmatprep.subr.bf16.mxu0 0
    %2507 = vmatpush1.bf16.msra.mxu0 0
    %2508 = vmatprep.subr.bf16.mxu0 0
    %2509 = vmatpush1.bf16.msra.mxu0 0
    %2510 = vmatprep.subr.bf16.mxu0 0
    %2511 = vmatpush1.bf16.msra.mxu0 0
    %2512 = vmatprep.subr.bf16.mxu0 0
    %2513 = vmatpush1.bf16.msra.mxu0 0
    %2514 = vmatprep.subr.bf16.mxu0 0
    %2515 = vmatpush1.bf16.msra.mxu0 0
    %2516 = vmatprep.mubr.bf16.mxu0 0
    %2517 = vmatmul.mubr.bf16.gmra.mrb[0].mxu0 %v2483
    %v2518 = vpop.f32.mrb[0].mxu0
    %v2519 = vadd.f32 %v1247, %v2518
    %v2520 = vpop.f32.mrb[0].mxu0
    %v2521 = vadd.f32 %v1251, %v2520
    %v2522 = vpop.f32.mrb[0].mxu0
    %v2523 = vpop.f32.mrb[0].mxu0
    %2524 = vdwg.mxu0
    %2525 = vmatprep.subr.bf16.mxu0 0
    %2526 = vmatpush1.bf16.msra.mxu0 %v1341
    %2527 = vmatprep.subr.bf16.mxu0 0
    %2528 = vmatpush1.bf16.msra.mxu0 %v1344
    %2529 = vmatprep.subr.bf16.mxu0 0
    %2530 = vmatpush1.bf16.msra.mxu0 %v1347
    %2531 = vmatprep.subr.bf16.mxu0 0
    %2532 = vmatpush1.bf16.msra.mxu0 %v1350
    %2533 = vmatprep.subr.bf16.mxu0 0
    %2534 = vmatpush1.bf16.msra.mxu0 %v1353
    %2535 = vmatprep.subr.bf16.mxu0 0
    %2536 = vmatpush1.bf16.msra.mxu0 %v1356
    %2537 = vmatprep.subr.bf16.mxu0 0
    %2538 = vmatpush1.bf16.msra.mxu0 %v1359
    %2539 = vmatprep.subr.bf16.mxu0 0
    %2540 = vmatpush1.bf16.msra.mxu0 %v1362
    %2541 = vmatprep.subr.bf16.mxu0 0
    %2542 = vmatpush1.bf16.msra.mxu0 0
    %2543 = vmatprep.subr.bf16.mxu0 0
    %2544 = vmatpush1.bf16.msra.mxu0 0
    %2545 = vmatprep.subr.bf16.mxu0 0
    %2546 = vmatpush1.bf16.msra.mxu0 0
    %2547 = vmatprep.subr.bf16.mxu0 0
    %2548 = vmatpush1.bf16.msra.mxu0 0
    %2549 = vmatprep.subr.bf16.mxu0 0
    %2550 = vmatpush1.bf16.msra.mxu0 0
    %2551 = vmatprep.subr.bf16.mxu0 0
    %2552 = vmatpush1.bf16.msra.mxu0 0
    %2553 = vmatprep.subr.bf16.mxu0 0
    %2554 = vmatpush1.bf16.msra.mxu0 0
    %2555 = vmatprep.subr.bf16.mxu0 0
    %2556 = vmatpush1.bf16.msra.mxu0 0
    %2557 = vmatprep.mubr.bf16.mxu0 0
    %2558 = vmatmul.mubr.bf16.gmra.mrb[0].mxu0 %v2483
    %v2559 = vpop.f32.mrb[0].mxu0
    %v2560 = vadd.f32 %v1255, %v2559
    %v2561 = vpop.f32.mrb[0].mxu0
    %v2562 = vpop.f32.mrb[0].mxu0
    %v2563 = vpop.f32.mrb[0].mxu0
    %2564 = vdwg.mxu0
    %v2565 = vadd.f32 %v2480, %v2519
    %v2566 = vxor.u32 %v2565, 2147483648
    %v2567 = vmul.f32 %v2566, 1.442695
    %v2568 = vpow.pop %v2567
    %v2569 = vadd.f32 %v2568, 1.0
    %v2570 = vrcp.pop %v2569
    %v2571 = vmul.f32 1.0, %v2570
    %v2572 = vadd.f32 %v2481, %v2521
    %v2573 = vxor.u32 %v2572, 2147483648
    %v2574 = vmul.f32 %v2573, 1.442695
    %v2575 = vpow.pop %v2574
    %v2576 = vadd.f32 %v2575, 1.0
    %v2577 = vrcp.pop %v2576
    %v2578 = vmul.f32 1.0, %v2577
    %v2579 = vmul.f32 %v2571, %v2560
    %v2580 = vadd.f32 %v2482, %v2579
    %v2581 = vtanh.pop %v2580
    %v2582 = vsub.f32 %v2476, %v2581
    %v2583 = vmul.f32 %v2578, %v2582
    %v2584 = vadd.f32 %v2581, %v2583
    %v2585 = vld [vmem:[%s2240 + $0x18] sm:$0xff]
    %v2586 = vld [vmem:[%s2240 + $0x20] sm:$0xff]
    %v2587 = vld [vmem:[%s2240 + $0x28] sm:$0xff]
    %v2588 = vpack.c.bf16 %v2479, %v2479
    %2589 = vmatprep.subr.bf16.mxu0 %v1589
    %2590 = vmatpush1.bf16.msra.mxu0 %v1588
    %2591 = vmatprep.subr.bf16.mxu0 %v1592
    %2592 = vmatpush1.bf16.msra.mxu0 %v1591
    %2593 = vmatprep.subr.bf16.mxu0 %v1595
    %2594 = vmatpush1.bf16.msra.mxu0 %v1594
    %2595 = vmatprep.subr.bf16.mxu0 %v1598
    %2596 = vmatpush1.bf16.msra.mxu0 %v1597
    %2597 = vmatprep.subr.bf16.mxu0 %v1601
    %2598 = vmatpush1.bf16.msra.mxu0 %v1600
    %2599 = vmatprep.subr.bf16.mxu0 %v1604
    %2600 = vmatpush1.bf16.msra.mxu0 %v1603
    %2601 = vmatprep.subr.bf16.mxu0 %v1607
    %2602 = vmatpush1.bf16.msra.mxu0 %v1606
    %2603 = vmatprep.subr.bf16.mxu0 %v1610
    %2604 = vmatpush1.bf16.msra.mxu0 %v1609
    %2605 = vmatprep.subr.bf16.mxu0 0
    %2606 = vmatpush1.bf16.msra.mxu0 0
    %2607 = vmatprep.subr.bf16.mxu0 0
    %2608 = vmatpush1.bf16.msra.mxu0 0
    %2609 = vmatprep.subr.bf16.mxu0 0
    %2610 = vmatpush1.bf16.msra.mxu0 0
    %2611 = vmatprep.subr.bf16.mxu0 0
    %2612 = vmatpush1.bf16.msra.mxu0 0
    %2613 = vmatprep.subr.bf16.mxu0 0
    %2614 = vmatpush1.bf16.msra.mxu0 0
    %2615 = vmatprep.subr.bf16.mxu0 0
    %2616 = vmatpush1.bf16.msra.mxu0 0
    %2617 = vmatprep.subr.bf16.mxu0 0
    %2618 = vmatpush1.bf16.msra.mxu0 0
    %2619 = vmatprep.subr.bf16.mxu0 0
    %2620 = vmatpush1.bf16.msra.mxu0 0
    %2621 = vmatprep.mubr.bf16.mxu0 0
    %2622 = vmatmul.mubr.bf16.gmra.mrb[0].mxu0 %v2588
    %v2623 = vpop.f32.mrb[0].mxu0
    %v2624 = vadd.f32 %v1496, %v2623
    %v2625 = vpop.f32.mrb[0].mxu0
    %v2626 = vadd.f32 %v1500, %v2625
    %v2627 = vpop.f32.mrb[0].mxu0
    %v2628 = vpop.f32.mrb[0].mxu0
    %2629 = vdwg.mxu0
    %2630 = vmatprep.subr.bf16.mxu0 0
    %2631 = vmatpush1.bf16.msra.mxu0 %v1590
    %2632 = vmatprep.subr.bf16.mxu0 0
    %2633 = vmatpush1.bf16.msra.mxu0 %v1593
    %2634 = vmatprep.subr.bf16.mxu0 0
    %2635 = vmatpush1.bf16.msra.mxu0 %v1596
    %2636 = vmatprep.subr.bf16.mxu0 0
    %2637 = vmatpush1.bf16.msra.mxu0 %v1599
    %2638 = vmatprep.subr.bf16.mxu0 0
    %2639 = vmatpush1.bf16.msra.mxu0 %v1602
    %2640 = vmatprep.subr.bf16.mxu0 0
    %2641 = vmatpush1.bf16.msra.mxu0 %v1605
    %2642 = vmatprep.subr.bf16.mxu0 0
    %2643 = vmatpush1.bf16.msra.mxu0 %v1608
    %2644 = vmatprep.subr.bf16.mxu0 0
    %2645 = vmatpush1.bf16.msra.mxu0 %v1611
    %2646 = vmatprep.subr.bf16.mxu0 0
    %2647 = vmatpush1.bf16.msra.mxu0 0
    %2648 = vmatprep.subr.bf16.mxu0 0
    %2649 = vmatpush1.bf16.msra.mxu0 0
    %2650 = vmatprep.subr.bf16.mxu0 0
    %2651 = vmatpush1.bf16.msra.mxu0 0
    %2652 = vmatprep.subr.bf16.mxu0 0
    %2653 = vmatpush1.bf16.msra.mxu0 0
    %2654 = vmatprep.subr.bf16.mxu0 0
    %2655 = vmatpush1.bf16.msra.mxu0 0
    %2656 = vmatprep.subr.bf16.mxu0 0
    %2657 = vmatpush1.bf16.msra.mxu0 0
    %2658 = vmatprep.subr.bf16.mxu0 0
    %2659 = vmatpush1.bf16.msra.mxu0 0
    %2660 = vmatprep.subr.bf16.mxu0 0
    %2661 = vmatpush1.bf16.msra.mxu0 0
    %2662 = vmatprep.mubr.bf16.mxu0 0
    %2663 = vmatmul.mubr.bf16.gmra.mrb[0].mxu0 %v2588
    %v2664 = vpop.f32.mrb[0].mxu0
    %v2665 = vadd.f32 %v1504, %v2664
    %v2666 = vpop.f32.mrb[0].mxu0
    %v2667 = vpop.f32.mrb[0].mxu0
    %v2668 = vpop.f32.mrb[0].mxu0
    %2669 = vdwg.mxu0
    %v2670 = vadd.f32 %v2585, %v2624
    %v2671 = vxor.u32 %v2670, 2147483648
    %v2672 = vmul.f32 %v2671, 1.442695
    %v2673 = vpow.pop %v2672
    %v2674 = vadd.f32 %v2673, 1.0
    %v2675 = vrcp.pop %v2674
    %v2676 = vmul.f32 1.0, %v2675
    %v2677 = vadd.f32 %v2586, %v2626
    %v2678 = vxor.u32 %v2677, 2147483648
    %v2679 = vmul.f32 %v2678, 1.442695
    %v2680 = vpow.pop %v2679
    %v2681 = vadd.f32 %v2680, 1.0
    %v2682 = vrcp.pop %v2681
    %v2683 = vmul.f32 1.0, %v2682
    %v2684 = vmul.f32 %v2676, %v2665
    %v2685 = vadd.f32 %v2587, %v2684
    %v2686 = vtanh.pop %v2685
    %v2687 = vsub.f32 %v2479, %v2686
    %v2688 = vmul.f32 %v2683, %v2687
    %v2689 = vadd.f32 %v2686, %v2688
    %v2690 = vmul.f32 %v2469, %v2584
    %s2691 = scalar_lea.vmem %s14, 32
    %2692 = vst [vmem:[%s2691] sm:$0xff] %v2690
    %v2693 = vmul.f32 %v2461, %v2689
    %s2694 = scalar_lea.vmem [#allocation3], 24
    %2695 = vst [vmem:[%s2694] sm:$0xff] %v2693
    %v2696 = vsub.f32 %v2584, %v2476
    %v2697 = vmul.f32 %v2469, %v2696
    %v2698 = vadd.f32 %v2476, %v2697
    %v2699 = vsub.f32 %v2689, %v2479
    %v2700 = vmul.f32 %v2461, %v2699
    %v2701 = vadd.f32 %v2479, %v2700
    %v2702 = vld [vmem:[%s2106] sm:$0xff]
    %v2703 = vld [vmem:[%s2106 + $0x8] sm:$0xff]
    %v2704 = vld [vmem:[%s2106 + $0x10] sm:$0xff]
    %v2705 = vpack.c.bf16 %v2698, %v2698
    %2706 = vmatprep.subr.bf16.mxu0 %v1340
    %2707 = vmatpush1.bf16.msra.mxu0 %v1339
    %2708 = vmatprep.subr.bf16.mxu0 %v1343
    %2709 = vmatpush1.bf16.msra.mxu0 %v1342
    %2710 = vmatprep.subr.bf16.mxu0 %v1346
    %2711 = vmatpush1.bf16.msra.mxu0 %v1345
    %2712 = vmatprep.subr.bf16.mxu0 %v1349
    %2713 = vmatpush1.bf16.msra.mxu0 %v1348
    %2714 = vmatprep.subr.bf16.mxu0 %v1352
    %2715 = vmatpush1.bf16.msra.mxu0 %v1351
    %2716 = vmatprep.subr.bf16.mxu0 %v1355
    %2717 = vmatpush1.bf16.msra.mxu0 %v1354
    %2718 = vmatprep.subr.bf16.mxu0 %v1358
    %2719 = vmatpush1.bf16.msra.mxu0 %v1357
    %2720 = vmatprep.subr.bf16.mxu0 %v1361
    %2721 = vmatpush1.bf16.msra.mxu0 %v1360
    %2722 = vmatprep.subr.bf16.mxu0 0
    %2723 = vmatpush1.bf16.msra.mxu0 0
    %2724 = vmatprep.subr.bf16.mxu0 0
    %2725 = vmatpush1.bf16.msra.mxu0 0
    %2726 = vmatprep.subr.bf16.mxu0 0
    %2727 = vmatpush1.bf16.msra.mxu0 0
    %2728 = vmatprep.subr.bf16.mxu0 0
    %2729 = vmatpush1.bf16.msra.mxu0 0
    %2730 = vmatprep.subr.bf16.mxu0 0
    %2731 = vmatpush1.bf16.msra.mxu0 0
    %2732 = vmatprep.subr.bf16.mxu0 0
    %2733 = vmatpush1.bf16.msra.mxu0 0
    %2734 = vmatprep.subr.bf16.mxu0 0
    %2735 = vmatpush1.bf16.msra.mxu0 0
    %2736 = vmatprep.subr.bf16.mxu0 0
    %2737 = vmatpush1.bf16.msra.mxu0 0
    %2738 = vmatprep.mubr.bf16.mxu0 0
    %2739 = vmatmul.mubr.bf16.gmra.mrb[0].mxu0 %v2705
    %v2740 = vpop.f32.mrb[0].mxu0
    %v2741 = vadd.f32 %v1247, %v2740
    %v2742 = vpop.f32.mrb[0].mxu0
    %v2743 = vadd.f32 %v1251, %v2742
    %v2744 = vpop.f32.mrb[0].mxu0
    %v2745 = vpop.f32.mrb[0].mxu0
    %2746 = vdwg.mxu0
    %2747 = vmatprep.subr.bf16.mxu0 0
    %2748 = vmatpush1.bf16.msra.mxu0 %v1341
    %2749 = vmatprep.subr.bf16.mxu0 0
    %2750 = vmatpush1.bf16.msra.mxu0 %v1344
    %2751 = vmatprep.subr.bf16.mxu0 0
    %2752 = vmatpush1.bf16.msra.mxu0 %v1347
    %2753 = vmatprep.subr.bf16.mxu0 0
    %2754 = vmatpush1.bf16.msra.mxu0 %v1350
    %2755 = vmatprep.subr.bf16.mxu0 0
    %2756 = vmatpush1.bf16.msra.mxu0 %v1353
    %2757 = vmatprep.subr.bf16.mxu0 0
    %2758 = vmatpush1.bf16.msra.mxu0 %v1356
    %2759 = vmatprep.subr.bf16.mxu0 0
    %2760 = vmatpush1.bf16.msra.mxu0 %v1359
    %2761 = vmatprep.subr.bf16.mxu0 0
    %2762 = vmatpush1.bf16.msra.mxu0 %v1362
    %2763 = vmatprep.subr.bf16.mxu0 0
    %2764 = vmatpush1.bf16.msra.mxu0 0
    %2765 = vmatprep.subr.bf16.mxu0 0
    %2766 = vmatpush1.bf16.msra.mxu0 0
    %2767 = vmatprep.subr.bf16.mxu0 0
    %2768 = vmatpush1.bf16.msra.mxu0 0
    %2769 = vmatprep.subr.bf16.mxu0 0
    %2770 = vmatpush1.bf16.msra.mxu0 0
    %2771 = vmatprep.subr.bf16.mxu0 0
    %2772 = vmatpush1.bf16.msra.mxu0 0
    %2773 = vmatprep.subr.bf16.mxu0 0
    %2774 = vmatpush1.bf16.msra.mxu0 0
    %2775 = vmatprep.subr.bf16.mxu0 0
    %2776 = vmatpush1.bf16.msra.mxu0 0
    %2777 = vmatprep.subr.bf16.mxu0 0
    %2778 = vmatpush1.bf16.msra.mxu0 0
    %2779 = vmatprep.mubr.bf16.mxu0 0
    %2780 = vmatmul.mubr.bf16.gmra.mrb[0].mxu0 %v2705
    %v2781 = vpop.f32.mrb[0].mxu0
    %v2782 = vadd.f32 %v1255, %v2781
    %v2783 = vpop.f32.mrb[0].mxu0
    %v2784 = vpop.f32.mrb[0].mxu0
    %v2785 = vpop.f32.mrb[0].mxu0
    %2786 = vdwg.mxu0
    %v2787 = vadd.f32 %v2702, %v2741
    %v2788 = vxor.u32 %v2787, 2147483648
    %v2789 = vmul.f32 %v2788, 1.442695
    %v2790 = vpow.pop %v2789
    %v2791 = vadd.f32 %v2790, 1.0
    %v2792 = vrcp.pop %v2791
    %v2793 = vmul.f32 1.0, %v2792
    %v2794 = vadd.f32 %v2703, %v2743
    %v2795 = vxor.u32 %v2794, 2147483648
    %v2796 = vmul.f32 %v2795, 1.442695
    %v2797 = vpow.pop %v2796
    %v2798 = vadd.f32 %v2797, 1.0
    %v2799 = vrcp.pop %v2798
    %v2800 = vmul.f32 1.0, %v2799
    %v2801 = vmul.f32 %v2793, %v2782
    %v2802 = vadd.f32 %v2704, %v2801
    %v2803 = vtanh.pop %v2802
    %v2804 = vsub.f32 %v2698, %v2803
    %v2805 = vmul.f32 %v2800, %v2804
    %v2806 = vadd.f32 %v2803, %v2805
    %v2807 = vld [vmem:[%s2000 + $0x18] sm:$0xff]
    %v2808 = vld [vmem:[%s2000 + $0x20] sm:$0xff]
    %v2809 = vld [vmem:[%s2000 + $0x28] sm:$0xff]
    %v2810 = vpack.c.bf16 %v2701, %v2701
    %2811 = vmatprep.subr.bf16.mxu0 %v1589
    %2812 = vmatpush1.bf16.msra.mxu0 %v1588
    %2813 = vmatprep.subr.bf16.mxu0 %v1592
    %2814 = vmatpush1.bf16.msra.mxu0 %v1591
    %2815 = vmatprep.subr.bf16.mxu0 %v1595
    %2816 = vmatpush1.bf16.msra.mxu0 %v1594
    %2817 = vmatprep.subr.bf16.mxu0 %v1598
    %2818 = vmatpush1.bf16.msra.mxu0 %v1597
    %2819 = vmatprep.subr.bf16.mxu0 %v1601
    %2820 = vmatpush1.bf16.msra.mxu0 %v1600
    %2821 = vmatprep.subr.bf16.mxu0 %v1604
    %2822 = vmatpush1.bf16.msra.mxu0 %v1603
    %2823 = vmatprep.subr.bf16.mxu0 %v1607
    %2824 = vmatpush1.bf16.msra.mxu0 %v1606
    %2825 = vmatprep.subr.bf16.mxu0 %v1610
    %2826 = vmatpush1.bf16.msra.mxu0 %v1609
    %2827 = vmatprep.subr.bf16.mxu0 0
    %2828 = vmatpush1.bf16.msra.mxu0 0
    %2829 = vmatprep.subr.bf16.mxu0 0
    %2830 = vmatpush1.bf16.msra.mxu0 0
    %2831 = vmatprep.subr.bf16.mxu0 0
    %2832 = vmatpush1.bf16.msra.mxu0 0
    %2833 = vmatprep.subr.bf16.mxu0 0
    %2834 = vmatpush1.bf16.msra.mxu0 0
    %2835 = vmatprep.subr.bf16.mxu0 0
    %2836 = vmatpush1.bf16.msra.mxu0 0
    %2837 = vmatprep.subr.bf16.mxu0 0
    %2838 = vmatpush1.bf16.msra.mxu0 0
    %2839 = vmatprep.subr.bf16.mxu0 0
    %2840 = vmatpush1.bf16.msra.mxu0 0
    %2841 = vmatprep.subr.bf16.mxu0 0
    %2842 = vmatpush1.bf16.msra.mxu0 0
    %2843 = vmatprep.mubr.bf16.mxu0 0
    %2844 = vmatmul.mubr.bf16.gmra.mrb[0].mxu0 %v2810
    %v2845 = vpop.f32.mrb[0].mxu0
    %v2846 = vadd.f32 %v1496, %v2845
    %v2847 = vpop.f32.mrb[0].mxu0
    %v2848 = vadd.f32 %v1500, %v2847
    %v2849 = vpop.f32.mrb[0].mxu0
    %v2850 = vpop.f32.mrb[0].mxu0
    %2851 = vdwg.mxu0
    %2852 = vmatprep.subr.bf16.mxu0 0
    %2853 = vmatpush1.bf16.msra.mxu0 %v1590
    %2854 = vmatprep.subr.bf16.mxu0 0
    %2855 = vmatpush1.bf16.msra.mxu0 %v1593
    %2856 = vmatprep.subr.bf16.mxu0 0
    %2857 = vmatpush1.bf16.msra.mxu0 %v1596
    %2858 = vmatprep.subr.bf16.mxu0 0
    %2859 = vmatpush1.bf16.msra.mxu0 %v1599
    %2860 = vmatprep.subr.bf16.mxu0 0
    %2861 = vmatpush1.bf16.msra.mxu0 %v1602
    %2862 = vmatprep.subr.bf16.mxu0 0
    %2863 = vmatpush1.bf16.msra.mxu0 %v1605
    %2864 = vmatprep.subr.bf16.mxu0 0
    %2865 = vmatpush1.bf16.msra.mxu0 %v1608
    %2866 = vmatprep.subr.bf16.mxu0 0
    %2867 = vmatpush1.bf16.msra.mxu0 %v1611
    %2868 = vmatprep.subr.bf16.mxu0 0
    %2869 = vmatpush1.bf16.msra.mxu0 0
    %2870 = vmatprep.subr.bf16.mxu0 0
    %2871 = vmatpush1.bf16.msra.mxu0 0
    %2872 = vmatprep.subr.bf16.mxu0 0
    %2873 = vmatpush1.bf16.msra.mxu0 0
    %2874 = vmatprep.subr.bf16.mxu0 0
    %2875 = vmatpush1.bf16.msra.mxu0 0
    %2876 = vmatprep.subr.bf16.mxu0 0
    %2877 = vmatpush1.bf16.msra.mxu0 0
    %2878 = vmatprep.subr.bf16.mxu0 0
    %2879 = vmatpush1.bf16.msra.mxu0 0
    %2880 = vmatprep.subr.bf16.mxu0 0
    %2881 = vmatpush1.bf16.msra.mxu0 0
    %2882 = vmatprep.subr.bf16.mxu0 0
    %2883 = vmatpush1.bf16.msra.mxu0 0
    %2884 = vmatprep.mubr.bf16.mxu0 0
    %2885 = vmatmul.mubr.bf16.gmra.mrb[0].mxu0 %v2810
    %v2886 = vpop.f32.mrb[0].mxu0
    %v2887 = vadd.f32 %v1504, %v2886
    %v2888 = vpop.f32.mrb[0].mxu0
    %v2889 = vpop.f32.mrb[0].mxu0
    %v2890 = vpop.f32.mrb[0].mxu0
    %2891 = vdwg.mxu0
    %v2892 = vadd.f32 %v2807, %v2846
    %v2893 = vxor.u32 %v2892, 2147483648
    %v2894 = vmul.f32 %v2893, 1.442695
    %v2895 = vpow.pop %v2894
    %v2896 = vadd.f32 %v2895, 1.0
    %v2897 = vrcp.pop %v2896
    %v2898 = vmul.f32 1.0, %v2897
    %v2899 = vadd.f32 %v2808, %v2848
    %v2900 = vxor.u32 %v2899, 2147483648
    %v2901 = vmul.f32 %v2900, 1.442695
    %v2902 = vpow.pop %v2901
    %v2903 = vadd.f32 %v2902, 1.0
    %v2904 = vrcp.pop %v2903
    %v2905 = vmul.f32 1.0, %v2904
    %v2906 = vmul.f32 %v2898, %v2887
    %v2907 = vadd.f32 %v2809, %v2906
    %v2908 = vtanh.pop %v2907
    %v2909 = vsub.f32 %v2701, %v2908
    %v2910 = vmul.f32 %v2905, %v2909
    %v2911 = vadd.f32 %v2908, %v2910
    %v2912 = vmul.f32 %v2229, %v2806
    %s2913 = scalar_lea.vmem %s14, 40
    %2914 = vst [vmem:[%s2913] sm:$0xff] %v2912
    %v2915 = vmul.f32 %v2221, %v2911
    %s2916 = scalar_lea.vmem [#allocation3], 16
    %2917 = vst [vmem:[%s2916] sm:$0xff] %v2915
    %v2918 = vsub.f32 %v2806, %v2698
    %v2919 = vmul.f32 %v2229, %v2918
    %v2920 = vadd.f32 %v2698, %v2919
    %v2921 = vsub.f32 %v2911, %v2701
    %v2922 = vmul.f32 %v2221, %v2921
    %v2923 = vadd.f32 %v2701, %v2922
    %v2924 = vld [vmem:[%s1866] sm:$0xff]
    %v2925 = vld [vmem:[%s1866 + $0x8] sm:$0xff]
    %v2926 = vld [vmem:[%s1866 + $0x10] sm:$0xff]
    %v2927 = vpack.c.bf16 %v2920, %v2920
    %2928 = vmatprep.subr.bf16.mxu0 %v1340
    %2929 = vmatpush1.bf16.msra.mxu0 %v1339
    %2930 = vmatprep.subr.bf16.mxu0 %v1343
    %2931 = vmatpush1.bf16.msra.mxu0 %v1342
    %2932 = vmatprep.subr.bf16.mxu0 %v1346
    %2933 = vmatpush1.bf16.msra.mxu0 %v1345
    %2934 = vmatprep.subr.bf16.mxu0 %v1349
    %2935 = vmatpush1.bf16.msra.mxu0 %v1348
    %2936 = vmatprep.subr.bf16.mxu0 %v1352
    %2937 = vmatpush1.bf16.msra.mxu0 %v1351
    %2938 = vmatprep.subr.bf16.mxu0 %v1355
    %2939 = vmatpush1.bf16.msra.mxu0 %v1354
    %2940 = vmatprep.subr.bf16.mxu0 %v1358
    %2941 = vmatpush1.bf16.msra.mxu0 %v1357
    %2942 = vmatprep.subr.bf16.mxu0 %v1361
    %2943 = vmatpush1.bf16.msra.mxu0 %v1360
    %2944 = vmatprep.subr.bf16.mxu0 0
    %2945 = vmatpush1.bf16.msra.mxu0 0
    %2946 = vmatprep.subr.bf16.mxu0 0
    %2947 = vmatpush1.bf16.msra.mxu0 0
    %2948 = vmatprep.subr.bf16.mxu0 0
    %2949 = vmatpush1.bf16.msra.mxu0 0
    %2950 = vmatprep.subr.bf16.mxu0 0
    %2951 = vmatpush1.bf16.msra.mxu0 0
    %2952 = vmatprep.subr.bf16.mxu0 0
    %2953 = vmatpush1.bf16.msra.mxu0 0
    %2954 = vmatprep.subr.bf16.mxu0 0
    %2955 = vmatpush1.bf16.msra.mxu0 0
    %2956 = vmatprep.subr.bf16.mxu0 0
    %2957 = vmatpush1.bf16.msra.mxu0 0
    %2958 = vmatprep.subr.bf16.mxu0 0
    %2959 = vmatpush1.bf16.msra.mxu0 0
    %2960 = vmatprep.mubr.bf16.mxu0 0
    %2961 = vmatmul.mubr.bf16.gmra.mrb[0].mxu0 %v2927
    %v2962 = vpop.f32.mrb[0].mxu0
    %v2963 = vadd.f32 %v1247, %v2962
    %v2964 = vpop.f32.mrb[0].mxu0
    %v2965 = vadd.f32 %v1251, %v2964
    %v2966 = vpop.f32.mrb[0].mxu0
    %v2967 = vpop.f32.mrb[0].mxu0
    %2968 = vdwg.mxu0
    %2969 = vmatprep.subr.bf16.mxu0 0
    %2970 = vmatpush1.bf16.msra.mxu0 %v1341
    %2971 = vmatprep.subr.bf16.mxu0 0
    %2972 = vmatpush1.bf16.msra.mxu0 %v1344
    %2973 = vmatprep.subr.bf16.mxu0 0
    %2974 = vmatpush1.bf16.msra.mxu0 %v1347
    %2975 = vmatprep.subr.bf16.mxu0 0
    %2976 = vmatpush1.bf16.msra.mxu0 %v1350
    %2977 = vmatprep.subr.bf16.mxu0 0
    %2978 = vmatpush1.bf16.msra.mxu0 %v1353
    %2979 = vmatprep.subr.bf16.mxu0 0
    %2980 = vmatpush1.bf16.msra.mxu0 %v1356
    %2981 = vmatprep.subr.bf16.mxu0 0
    %2982 = vmatpush1.bf16.msra.mxu0 %v1359
    %2983 = vmatprep.subr.bf16.mxu0 0
    %2984 = vmatpush1.bf16.msra.mxu0 %v1362
    %2985 = vmatprep.subr.bf16.mxu0 0
    %2986 = vmatpush1.bf16.msra.mxu0 0
    %2987 = vmatprep.subr.bf16.mxu0 0
    %2988 = vmatpush1.bf16.msra.mxu0 0
    %2989 = vmatprep.subr.bf16.mxu0 0
    %2990 = vmatpush1.bf16.msra.mxu0 0
    %2991 = vmatprep.subr.bf16.mxu0 0
    %2992 = vmatpush1.bf16.msra.mxu0 0
    %2993 = vmatprep.subr.bf16.mxu0 0
    %2994 = vmatpush1.bf16.msra.mxu0 0
    %2995 = vmatprep.subr.bf16.mxu0 0
    %2996 = vmatpush1.bf16.msra.mxu0 0
    %2997 = vmatprep.subr.bf16.mxu0 0
    %2998 = vmatpush1.bf16.msra.mxu0 0
    %2999 = vmatprep.subr.bf16.mxu0 0
    %3000 = vmatpush1.bf16.msra.mxu0 0
    %3001 = vmatprep.mubr.bf16.mxu0 0
    %3002 = vmatmul.mubr.bf16.gmra.mrb[0].mxu0 %v2927
    %v3003 = vpop.f32.mrb[0].mxu0
    %v3004 = vadd.f32 %v1255, %v3003
    %v3005 = vpop.f32.mrb[0].mxu0
    %v3006 = vpop.f32.mrb[0].mxu0
    %v3007 = vpop.f32.mrb[0].mxu0
    %3008 = vdwg.mxu0
    %v3009 = vadd.f32 %v2924, %v2963
    %v3010 = vxor.u32 %v3009, 2147483648
    %v3011 = vmul.f32 %v3010, 1.442695
    %v3012 = vpow.pop %v3011
    %v3013 = vadd.f32 %v3012, 1.0
    %v3014 = vrcp.pop %v3013
    %v3015 = vmul.f32 1.0, %v3014
    %v3016 = vadd.f32 %v2925, %v2965
    %v3017 = vxor.u32 %v3016, 2147483648
    %v3018 = vmul.f32 %v3017, 1.442695
    %v3019 = vpow.pop %v3018
    %v3020 = vadd.f32 %v3019, 1.0
    %v3021 = vrcp.pop %v3020
    %v3022 = vmul.f32 1.0, %v3021
    %v3023 = vmul.f32 %v3015, %v3004
    %v3024 = vadd.f32 %v2926, %v3023
    %v3025 = vtanh.pop %v3024
    %v3026 = vsub.f32 %v2920, %v3025
    %v3027 = vmul.f32 %v3022, %v3026
    %v3028 = vadd.f32 %v3025, %v3027
    %v3029 = vld [vmem:[%s1760 + $0x18] sm:$0xff]
    %v3030 = vld [vmem:[%s1760 + $0x20] sm:$0xff]
    %v3031 = vld [vmem:[%s1760 + $0x28] sm:$0xff]
    %v3032 = vpack.c.bf16 %v2923, %v2923
    %3033 = vmatprep.subr.bf16.mxu0 %v1589
    %3034 = vmatpush1.bf16.msra.mxu0 %v1588
    %3035 = vmatprep.subr.bf16.mxu0 %v1592
    %3036 = vmatpush1.bf16.msra.mxu0 %v1591
    %3037 = vmatprep.subr.bf16.mxu0 %v1595
    %3038 = vmatpush1.bf16.msra.mxu0 %v1594
    %3039 = vmatprep.subr.bf16.mxu0 %v1598
    %3040 = vmatpush1.bf16.msra.mxu0 %v1597
    %3041 = vmatprep.subr.bf16.mxu0 %v1601
    %3042 = vmatpush1.bf16.msra.mxu0 %v1600
    %3043 = vmatprep.subr.bf16.mxu0 %v1604
    %3044 = vmatpush1.bf16.msra.mxu0 %v1603
    %3045 = vmatprep.subr.bf16.mxu0 %v1607
    %3046 = vmatpush1.bf16.msra.mxu0 %v1606
    %3047 = vmatprep.subr.bf16.mxu0 %v1610
    %3048 = vmatpush1.bf16.msra.mxu0 %v1609
    %3049 = vmatprep.subr.bf16.mxu0 0
    %3050 = vmatpush1.bf16.msra.mxu0 0
    %3051 = vmatprep.subr.bf16.mxu0 0
    %3052 = vmatpush1.bf16.msra.mxu0 0
    %3053 = vmatprep.subr.bf16.mxu0 0
    %3054 = vmatpush1.bf16.msra.mxu0 0
    %3055 = vmatprep.subr.bf16.mxu0 0
    %3056 = vmatpush1.bf16.msra.mxu0 0
    %3057 = vmatprep.subr.bf16.mxu0 0
    %3058 = vmatpush1.bf16.msra.mxu0 0
    %3059 = vmatprep.subr.bf16.mxu0 0
    %3060 = vmatpush1.bf16.msra.mxu0 0
    %3061 = vmatprep.subr.bf16.mxu0 0
    %3062 = vmatpush1.bf16.msra.mxu0 0
    %3063 = vmatprep.subr.bf16.mxu0 0
    %3064 = vmatpush1.bf16.msra.mxu0 0
    %3065 = vmatprep.mubr.bf16.mxu0 0
    %3066 = vmatmul.mubr.bf16.gmra.mrb[0].mxu0 %v3032
    %v3067 = vpop.f32.mrb[0].mxu0
    %v3068 = vadd.f32 %v1496, %v3067
    %v3069 = vpop.f32.mrb[0].mxu0
    %v3070 = vadd.f32 %v1500, %v3069
    %v3071 = vpop.f32.mrb[0].mxu0
    %v3072 = vpop.f32.mrb[0].mxu0
    %3073 = vdwg.mxu0
    %3074 = vmatprep.subr.bf16.mxu0 0
    %3075 = vmatpush1.bf16.msra.mxu0 %v1590
    %3076 = vmatprep.subr.bf16.mxu0 0
    %3077 = vmatpush1.bf16.msra.mxu0 %v1593
    %3078 = vmatprep.subr.bf16.mxu0 0
    %3079 = vmatpush1.bf16.msra.mxu0 %v1596
    %3080 = vmatprep.subr.bf16.mxu0 0
    %3081 = vmatpush1.bf16.msra.mxu0 %v1599
    %3082 = vmatprep.subr.bf16.mxu0 0
    %3083 = vmatpush1.bf16.msra.mxu0 %v1602
    %3084 = vmatprep.subr.bf16.mxu0 0
    %3085 = vmatpush1.bf16.msra.mxu0 %v1605
    %3086 = vmatprep.subr.bf16.mxu0 0
    %3087 = vmatpush1.bf16.msra.mxu0 %v1608
    %3088 = vmatprep.subr.bf16.mxu0 0
    %3089 = vmatpush1.bf16.msra.mxu0 %v1611
    %3090 = vmatprep.subr.bf16.mxu0 0
    %3091 = vmatpush1.bf16.msra.mxu0 0
    %3092 = vmatprep.subr.bf16.mxu0 0
    %3093 = vmatpush1.bf16.msra.mxu0 0
    %3094 = vmatprep.subr.bf16.mxu0 0
    %3095 = vmatpush1.bf16.msra.mxu0 0
    %3096 = vmatprep.subr.bf16.mxu0 0
    %3097 = vmatpush1.bf16.msra.mxu0 0
    %3098 = vmatprep.subr.bf16.mxu0 0
    %3099 = vmatpush1.bf16.msra.mxu0 0
    %3100 = vmatprep.subr.bf16.mxu0 0
    %3101 = vmatpush1.bf16.msra.mxu0 0
    %3102 = vmatprep.subr.bf16.mxu0 0
    %3103 = vmatpush1.bf16.msra.mxu0 0
    %3104 = vmatprep.subr.bf16.mxu0 0
    %3105 = vmatpush1.bf16.msra.mxu0 0
    %3106 = vmatprep.mubr.bf16.mxu0 0
    %3107 = vmatmul.mubr.bf16.gmra.mrb[0].mxu0 %v3032
    %v3108 = vpop.f32.mrb[0].mxu0
    %v3109 = vadd.f32 %v1504, %v3108
    %v3110 = vpop.f32.mrb[0].mxu0
    %v3111 = vpop.f32.mrb[0].mxu0
    %v3112 = vpop.f32.mrb[0].mxu0
    %3113 = vdwg.mxu0
    %v3114 = vadd.f32 %v3029, %v3068
    %v3115 = vxor.u32 %v3114, 2147483648
    %v3116 = vmul.f32 %v3115, 1.442695
    %v3117 = vpow.pop %v3116
    %v3118 = vadd.f32 %v3117, 1.0
    %v3119 = vrcp.pop %v3118
    %v3120 = vmul.f32 1.0, %v3119
    %v3121 = vadd.f32 %v3030, %v3070
    %v3122 = vxor.u32 %v3121, 2147483648
    %v3123 = vmul.f32 %v3122, 1.442695
    %v3124 = vpow.pop %v3123
    %v3125 = vadd.f32 %v3124, 1.0
    %v3126 = vrcp.pop %v3125
    %v3127 = vmul.f32 1.0, %v3126
    %v3128 = vmul.f32 %v3120, %v3109
    %v3129 = vadd.f32 %v3031, %v3128
    %v3130 = vtanh.pop %v3129
    %v3131 = vsub.f32 %v2923, %v3130
    %v3132 = vmul.f32 %v3127, %v3131
    %v3133 = vadd.f32 %v3130, %v3132
    %v3134 = vmul.f32 %v1989, %v3028
    %s3135 = scalar_lea.vmem %s14, 48
    %3136 = vst [vmem:[%s3135] sm:$0xff] %v3134
    %v3137 = vmul.f32 %v1981, %v3133
    %s3138 = scalar_lea.vmem [#allocation3], 8
    %3139 = vst [vmem:[%s3138] sm:$0xff] %v3137
    %v3140 = vsub.f32 %v3028, %v2920
    %v3141 = vmul.f32 %v1989, %v3140
    %v3142 = vadd.f32 %v2920, %v3141
    %v3143 = vsub.f32 %v3133, %v2923
    %v3144 = vmul.f32 %v1981, %v3143
    %v3145 = vadd.f32 %v2923, %v3144
    %v3146 = vld [vmem:[%s1488] sm:$0xff]
    %v3147 = vld [vmem:[%s1488 + $0x8] sm:$0xff]
    %v3148 = vld [vmem:[%s1488 + $0x10] sm:$0xff]
    %v3149 = vpack.c.bf16 %v3142, %v3142
    %3150 = vmatprep.subr.bf16.mxu0 %v1340
    %3151 = vmatpush1.bf16.msra.mxu0 %v1339
    %3152 = vmatprep.subr.bf16.mxu0 %v1343
    %3153 = vmatpush1.bf16.msra.mxu0 %v1342
    %3154 = vmatprep.subr.bf16.mxu0 %v1346
    %3155 = vmatpush1.bf16.msra.mxu0 %v1345
    %3156 = vmatprep.subr.bf16.mxu0 %v1349
    %3157 = vmatpush1.bf16.msra.mxu0 %v1348
    %3158 = vmatprep.subr.bf16.mxu0 %v1352
    %3159 = vmatpush1.bf16.msra.mxu0 %v1351
    %3160 = vmatprep.subr.bf16.mxu0 %v1355
    %3161 = vmatpush1.bf16.msra.mxu0 %v1354
    %3162 = vmatprep.subr.bf16.mxu0 %v1358
    %3163 = vmatpush1.bf16.msra.mxu0 %v1357
    %3164 = vmatprep.subr.bf16.mxu0 %v1361
    %3165 = vmatpush1.bf16.msra.mxu0 %v1360
    %3166 = vmatprep.subr.bf16.mxu0 0
    %3167 = vmatpush1.bf16.msra.mxu0 0
    %3168 = vmatprep.subr.bf16.mxu0 0
    %3169 = vmatpush1.bf16.msra.mxu0 0
    %3170 = vmatprep.subr.bf16.mxu0 0
    %3171 = vmatpush1.bf16.msra.mxu0 0
    %3172 = vmatprep.subr.bf16.mxu0 0
    %3173 = vmatpush1.bf16.msra.mxu0 0
    %3174 = vmatprep.subr.bf16.mxu0 0
    %3175 = vmatpush1.bf16.msra.mxu0 0
    %3176 = vmatprep.subr.bf16.mxu0 0
    %3177 = vmatpush1.bf16.msra.mxu0 0
    %3178 = vmatprep.subr.bf16.mxu0 0
    %3179 = vmatpush1.bf16.msra.mxu0 0
    %3180 = vmatprep.subr.bf16.mxu0 0
    %3181 = vmatpush1.bf16.msra.mxu0 0
    %3182 = vmatprep.mubr.bf16.mxu0 0
    %3183 = vmatmul.mubr.bf16.gmra.mrb[0].mxu0 %v3149
    %v3184 = vpop.f32.mrb[0].mxu0
    %v3185 = vadd.f32 %v1247, %v3184
    %v3186 = vpop.f32.mrb[0].mxu0
    %v3187 = vadd.f32 %v1251, %v3186
    %v3188 = vpop.f32.mrb[0].mxu0
    %v3189 = vpop.f32.mrb[0].mxu0
    %3190 = vdwg.mxu0
    %3191 = vmatprep.subr.bf16.mxu0 0
    %3192 = vmatpush1.bf16.msra.mxu0 %v1341
    %3193 = vmatprep.subr.bf16.mxu0 0
    %3194 = vmatpush1.bf16.msra.mxu0 %v1344
    %3195 = vmatprep.subr.bf16.mxu0 0
    %3196 = vmatpush1.bf16.msra.mxu0 %v1347
    %3197 = vmatprep.subr.bf16.mxu0 0
    %3198 = vmatpush1.bf16.msra.mxu0 %v1350
    %3199 = vmatprep.subr.bf16.mxu0 0
    %3200 = vmatpush1.bf16.msra.mxu0 %v1353
    %3201 = vmatprep.subr.bf16.mxu0 0
    %3202 = vmatpush1.bf16.msra.mxu0 %v1356
    %3203 = vmatprep.subr.bf16.mxu0 0
    %3204 = vmatpush1.bf16.msra.mxu0 %v1359
    %3205 = vmatprep.subr.bf16.mxu0 0
    %3206 = vmatpush1.bf16.msra.mxu0 %v1362
    %3207 = vmatprep.subr.bf16.mxu0 0
    %3208 = vmatpush1.bf16.msra.mxu0 0
    %3209 = vmatprep.subr.bf16.mxu0 0
    %3210 = vmatpush1.bf16.msra.mxu0 0
    %3211 = vmatprep.subr.bf16.mxu0 0
    %3212 = vmatpush1.bf16.msra.mxu0 0
    %3213 = vmatprep.subr.bf16.mxu0 0
    %3214 = vmatpush1.bf16.msra.mxu0 0
    %3215 = vmatprep.subr.bf16.mxu0 0
    %3216 = vmatpush1.bf16.msra.mxu0 0
    %3217 = vmatprep.subr.bf16.mxu0 0
    %3218 = vmatpush1.bf16.msra.mxu0 0
    %3219 = vmatprep.subr.bf16.mxu0 0
    %3220 = vmatpush1.bf16.msra.mxu0 0
    %3221 = vmatprep.subr.bf16.mxu0 0
    %3222 = vmatpush1.bf16.msra.mxu0 0
    %3223 = vmatprep.mubr.bf16.mxu0 0
    %3224 = vmatmul.mubr.bf16.gmra.mrb[0].mxu0 %v3149
    %v3225 = vpop.f32.mrb[0].mxu0
    %v3226 = vadd.f32 %v1255, %v3225
    %v3227 = vpop.f32.mrb[0].mxu0
    %v3228 = vpop.f32.mrb[0].mxu0
    %v3229 = vpop.f32.mrb[0].mxu0
    %3230 = vdwg.mxu0
    %v3231 = vadd.f32 %v3146, %v3185
    %v3232 = vxor.u32 %v3231, 2147483648
    %v3233 = vmul.f32 %v3232, 1.442695
    %v3234 = vpow.pop %v3233
    %v3235 = vadd.f32 %v3234, 1.0
    %v3236 = vrcp.pop %v3235
    %v3237 = vmul.f32 1.0, %v3236
    %v3238 = vadd.f32 %v3147, %v3187
    %v3239 = vxor.u32 %v3238, 2147483648
    %v3240 = vmul.f32 %v3239, 1.442695
    %v3241 = vpow.pop %v3240
    %v3242 = vadd.f32 %v3241, 1.0
    %v3243 = vrcp.pop %v3242
    %v3244 = vmul.f32 1.0, %v3243
    %v3245 = vmul.f32 %v3237, %v3226
    %v3246 = vadd.f32 %v3148, %v3245
    %v3247 = vtanh.pop %v3246
    %v3248 = vsub.f32 %v3142, %v3247
    %v3249 = vmul.f32 %v3244, %v3248
    %v3250 = vadd.f32 %v3247, %v3249
    %v3251 = vld [vmem:[#allocation2 + $0x18] sm:$0xff]
    %v3252 = vld [vmem:[#allocation2 + $0x20] sm:$0xff]
    %v3253 = vld [vmem:[#allocation2 + $0x28] sm:$0xff]
    %v3254 = vpack.c.bf16 %v3145, %v3145
    %3255 = vmatprep.subr.bf16.mxu0 %v1589
    %3256 = vmatpush1.bf16.msra.mxu0 %v1588
    %3257 = vmatprep.subr.bf16.mxu0 %v1592
    %3258 = vmatpush1.bf16.msra.mxu0 %v1591
    %3259 = vmatprep.subr.bf16.mxu0 %v1595
    %3260 = vmatpush1.bf16.msra.mxu0 %v1594
    %3261 = vmatprep.subr.bf16.mxu0 %v1598
    %3262 = vmatpush1.bf16.msra.mxu0 %v1597
    %3263 = vmatprep.subr.bf16.mxu0 %v1601
    %3264 = vmatpush1.bf16.msra.mxu0 %v1600
    %3265 = vmatprep.subr.bf16.mxu0 %v1604
    %3266 = vmatpush1.bf16.msra.mxu0 %v1603
    %3267 = vmatprep.subr.bf16.mxu0 %v1607
    %3268 = vmatpush1.bf16.msra.mxu0 %v1606
    %3269 = vmatprep.subr.bf16.mxu0 %v1610
    %3270 = vmatpush1.bf16.msra.mxu0 %v1609
    %3271 = vmatprep.subr.bf16.mxu0 0
    %3272 = vmatpush1.bf16.msra.mxu0 0
    %3273 = vmatprep.subr.bf16.mxu0 0
    %3274 = vmatpush1.bf16.msra.mxu0 0
    %3275 = vmatprep.subr.bf16.mxu0 0
    %3276 = vmatpush1.bf16.msra.mxu0 0
    %3277 = vmatprep.subr.bf16.mxu0 0
    %3278 = vmatpush1.bf16.msra.mxu0 0
    %3279 = vmatprep.subr.bf16.mxu0 0
    %3280 = vmatpush1.bf16.msra.mxu0 0
    %3281 = vmatprep.subr.bf16.mxu0 0
    %3282 = vmatpush1.bf16.msra.mxu0 0
    %3283 = vmatprep.subr.bf16.mxu0 0
    %3284 = vmatpush1.bf16.msra.mxu0 0
    %3285 = vmatprep.subr.bf16.mxu0 0
    %3286 = vmatpush1.bf16.msra.mxu0 0
    %3287 = vmatprep.mubr.bf16.mxu0 0
    %3288 = vmatmul.mubr.bf16.gmra.mrb[0].mxu0 %v3254
    %v3289 = vpop.f32.mrb[0].mxu0
    %v3290 = vadd.f32 %v1496, %v3289
    %v3291 = vpop.f32.mrb[0].mxu0
    %v3292 = vadd.f32 %v1500, %v3291
    %v3293 = vpop.f32.mrb[0].mxu0
    %v3294 = vpop.f32.mrb[0].mxu0
    %3295 = vdwg.mxu0
    %3296 = vmatprep.subr.bf16.mxu0 0
    %3297 = vmatpush1.bf16.msra.mxu0 %v1590
    %3298 = vmatprep.subr.bf16.mxu0 0
    %3299 = vmatpush1.bf16.msra.mxu0 %v1593
    %3300 = vmatprep.subr.bf16.mxu0 0
    %3301 = vmatpush1.bf16.msra.mxu0 %v1596
    %3302 = vmatprep.subr.bf16.mxu0 0
    %3303 = vmatpush1.bf16.msra.mxu0 %v1599
    %3304 = vmatprep.subr.bf16.mxu0 0
    %3305 = vmatpush1.bf16.msra.mxu0 %v1602
    %3306 = vmatprep.subr.bf16.mxu0 0
    %3307 = vmatpush1.bf16.msra.mxu0 %v1605
    %3308 = vmatprep.subr.bf16.mxu0 0
    %3309 = vmatpush1.bf16.msra.mxu0 %v1608
    %3310 = vmatprep.subr.bf16.mxu0 0
    %3311 = vmatpush1.bf16.msra.mxu0 %v1611
    %3312 = vmatprep.subr.bf16.mxu0 0
    %3313 = vmatpush1.bf16.msra.mxu0 0
    %3314 = vmatprep.subr.bf16.mxu0 0
    %3315 = vmatpush1.bf16.msra.mxu0 0
    %3316 = vmatprep.subr.bf16.mxu0 0
    %3317 = vmatpush1.bf16.msra.mxu0 0
    %3318 = vmatprep.subr.bf16.mxu0 0
    %3319 = vmatpush1.bf16.msra.mxu0 0
    %3320 = vmatprep.subr.bf16.mxu0 0
    %3321 = vmatpush1.bf16.msra.mxu0 0
    %3322 = vmatprep.subr.bf16.mxu0 0
    %3323 = vmatpush1.bf16.msra.mxu0 0
    %3324 = vmatprep.subr.bf16.mxu0 0
    %3325 = vmatpush1.bf16.msra.mxu0 0
    %3326 = vmatprep.subr.bf16.mxu0 0
    %3327 = vmatpush1.bf16.msra.mxu0 0
    %3328 = vmatprep.mubr.bf16.mxu0 0
    %3329 = vmatmul.mubr.bf16.gmra.mrb[0].mxu0 %v3254
    %v3330 = vpop.f32.mrb[0].mxu0
    %v3331 = vadd.f32 %v1504, %v3330
    %v3332 = vpop.f32.mrb[0].mxu0
    %v3333 = vpop.f32.mrb[0].mxu0
    %v3334 = vpop.f32.mrb[0].mxu0
    %3335 = vdwg.mxu0
    %v3336 = vadd.f32 %v3251, %v3290
    %v3337 = vxor.u32 %v3336, 2147483648
    %v3338 = vmul.f32 %v3337, 1.442695
    %v3339 = vpow.pop %v3338
    %v3340 = vadd.f32 %v3339, 1.0
    %v3341 = vrcp.pop %v3340
    %v3342 = vmul.f32 1.0, %v3341
    %v3343 = vadd.f32 %v3252, %v3292
    %v3344 = vxor.u32 %v3343, 2147483648
    %v3345 = vmul.f32 %v3344, 1.442695
    %v3346 = vpow.pop %v3345
    %v3347 = vadd.f32 %v3346, 1.0
    %v3348 = vrcp.pop %v3347
    %v3349 = vmul.f32 1.0, %v3348
    %v3350 = vmul.f32 %v3342, %v3331
    %v3351 = vadd.f32 %v3253, %v3350
    %v3352 = vtanh.pop %v3351
    %v3353 = vsub.f32 %v3145, %v3352
    %v3354 = vmul.f32 %v3349, %v3353
    %v3355 = vadd.f32 %v3352, %v3354
    %v3356 = vmul.f32 %v1753, %v3250
    %s3357 = scalar_lea.vmem %s14, 56
    %3358 = vst [vmem:[%s3357] sm:$0xff] %v3356
    %v3359 = vmul.f32 %v1746, %v3355
    %3360 = vst [vmem:[#allocation3] sm:$0xff] %v3359
    %v3361 = vsub.f32 %v3250, %v3142
    %v3362 = vmul.f32 %v1753, %v3361
    %v3363 = vadd.f32 %v3142, %v3362
    %v3364 = vsub.f32 %v3355, %v3145
    %v3365 = vmul.f32 %v1746, %v3364
    %v3366 = vadd.f32 %v3145, %v3365
    %v3367 = vld [vmem:[%s14] sm:$0xff]
    %v3368 = vld [vmem:[%s14 + $0x8] sm:$0xff]
    %v3369 = vld [vmem:[%s14 + $0x10] sm:$0xff]
    %v3370 = vld [vmem:[%s14 + $0x18] sm:$0xff]
    %v3371 = vld [vmem:[%s14 + $0x20] sm:$0xff]
    %v3372 = vld [vmem:[%s14 + $0x28] sm:$0xff]
    %v3373 = vld [vmem:[%s14 + $0x30] sm:$0xff]
    %v3374 = vld [vmem:[%s14 + $0x38] sm:$0xff]
    %v3375 = vld [vmem:[#allocation3] sm:$0xff]
    %v3376 = vld [vmem:[#allocation3 + $0x8] sm:$0xff]
    %v3377 = vld [vmem:[#allocation3 + $0x10] sm:$0xff]
    %v3378 = vld [vmem:[#allocation3 + $0x18] sm:$0xff]
    %v3379 = vld [vmem:[#allocation3 + $0x20] sm:$0xff]
    %v3380 = vld [vmem:[#allocation3 + $0x28] sm:$0xff]
    %v3381 = vld [vmem:[#allocation3 + $0x30] sm:$0xff]
    %v3382 = vld [vmem:[#allocation3 + $0x38] sm:$0xff]
    %v3383 = vadd.f32 %v3367, %v3375
    %v3384 = vadd.f32 %v3368, %v3376
    %v3385 = vadd.f32 %v3369, %v3377
    %v3386 = vadd.f32 %v3370, %v3378
    %v3387 = vadd.f32 %v3371, %v3379
    %v3388 = vadd.f32 %v3372, %v3380
    %v3389 = vadd.f32 %v3373, %v3381
    %v3390 = vadd.f32 %v3374, %v3382
    %3391 = vst [vmem:[%s14] sm:$0xff] %v3383
    %3392 = vst [vmem:[%s14 + $0x8] sm:$0xff] %v3384
    %3393 = vst [vmem:[%s14 + $0x10] sm:$0xff] %v3385
    %3394 = vst [vmem:[%s14 + $0x18] sm:$0xff] %v3386
    %3395 = vst [vmem:[%s14 + $0x20] sm:$0xff] %v3387
    %3396 = vst [vmem:[%s14 + $0x28] sm:$0xff] %v3388
    %3397 = vst [vmem:[%s14 + $0x30] sm:$0xff] %v3389
    %3398 = vst [vmem:[%s14 + $0x38] sm:$0xff] %v3390
    %3399 = vst [vmem:[%s15] sm:$0xff] %v3363
    %s3400 = scalar_lea.vmem %s15, 8
    %3401 = vst [vmem:[%s3400] sm:$0xff] %v3366
    // Predicated region
    $region78: #{mlp_forward.1} parent=1 // pred_check
      _
    $region79: #{mlp_forward.1} parent=1 // pred_check_branch
      %3403 = sbr.rel (0) target = $region81
    $region80: #{mlp_forward.1} parent=1 // pred_region
      _
    $region81: #{mlp_forward.1} parent=1 // pred_fallthru
      _
    // Predicated region
    $region82: #{mlp_forward.1} parent=1 // pred_check
      _
    $region83: #{mlp_forward.1} parent=1 // pred_check_branch
      %3405 = sbr.rel (0) target = $region85
    $region84: #{mlp_forward.1} parent=1 // pred_region
      _
    $region85: #{mlp_forward.1} parent=1 // pred_fallthru
      _
    // Predicated region
    $region86: #{mlp_forward.1} parent=1 // pred_check
      _
    $region87: #{mlp_forward.1} parent=1 // pred_check_branch
      %3407 = sbr.rel (0) target = $region89
    $region88: #{mlp_forward.1} parent=1 // pred_region
      _
    $region89: #{mlp_forward.1} parent=1 // pred_fallthru
      _
    // Predicated region
    $region90: #{mlp_forward.1} parent=1 // pred_check
      _
    $region91: #{mlp_forward.1} parent=1 // pred_check_branch
      %3409 = sbr.rel (0) target = $region93
    $region92: #{mlp_forward.1} parent=1 // pred_region
      _
    $region93: #{mlp_forward.1} parent=1 // pred_fallthru
      _
    %3410 = vsyncpa [#allocation5], 1
    %3411 = vsyncpa [#allocation7], 1
    %3412 = vsyncpa [#allocation10], 1

</llo_original>
